<compile_context>
chip_gen: v6e
topology: v6e:2x2x1
jax: 0.10.0
libtpu: 0.0.40
codegen_flags: <defaults>
</compile_context>

<pallas_src>
import functools

import jax
import jax.numpy as jnp
from jax.experimental import pallas as pl
from jax.experimental.pallas import tpu as pltpu


# ----------------------------- in-kernel helpers -----------------------------

def _layernorm(x, a, b, eps=1e-6):
    # Exact torch semantics of the reference LayerNorm module:
    #   mean over last dim, *unbiased* std (divide by D-1), normalize by (std + eps).
    d = x.shape[-1]
    mean = jnp.mean(x, axis=-1, keepdims=True)
    xc = x - mean
    var = jnp.sum(xc * xc, axis=-1, keepdims=True) / (d - 1)
    std = jnp.sqrt(var)
    return a * xc / (std + eps) + b


# ----------------------------- fused encoder kernel -----------------------------

def fused_encoder_kernel(x_ref, mask_ref,
                         wq_ref, bq_ref, wk_ref, bk_ref, wv_ref, bv_ref,
                         wo_ref, bo_ref, w1_ref, b1_ref, w2_ref, b2_ref,
                         ln1a_ref, ln1b_ref, ln2a_ref, ln2b_ref,
                         na_ref, nb_ref, o_ref, *, n_heads):
    l = pl.program_id(0)
    n_layers = pl.num_programs(0)

    # Layer 0: seed the resident activation (output block) from the input.
    @pl.when(l == 0)
    def _init():
        o_ref[...] = x_ref[...]

    B, S, D = o_ref.shape
    H = n_heads
    dk = D // H
    scale = 1.0 / jnp.sqrt(jnp.float32(dk))

    # Whole batch as one lane-dense 2D slab (B*S, D).
    x = o_ref[...].reshape(B * S, D)

    # Hoisted once per layer (not per head): which keys are visible, per batch.
    key_keep = mask_ref[...] > 0.0                       # (B, 1, S) bool

    # ---- sublayer 0: x + SelfAttention(LayerNorm(x)) (pre-norm residual) ----
    h = _layernorm(x, ln1a_ref[0], ln1b_ref[0])          # f32
    hb = h.astype(jnp.bfloat16)
    q = jnp.dot(hb, wq_ref[0], preferred_element_type=jnp.float32) + bq_ref[0]
    k = jnp.dot(hb, wk_ref[0], preferred_element_type=jnp.float32) + bk_ref[0]
    v = jnp.dot(hb, wv_ref[0], preferred_element_type=jnp.float32) + bv_ref[0]
    q3 = q.reshape(B, S, D)
    k3 = k.reshape(B, S, D)
    v3 = v.reshape(B, S, D)

    wo = wo_ref[0]                                       # (D, D) bf16
    attn_acc = jnp.zeros((B * S, D), jnp.float32)
    for hd in range(H):                                  # static unroll; full batch per head
        sl = slice(hd * dk, (hd + 1) * dk)
        qh = q3[:, :, sl].astype(jnp.bfloat16)           # (B, S, dk)
        kh = k3[:, :, sl].astype(jnp.bfloat16)
        vh = v3[:, :, sl].astype(jnp.bfloat16)
        sc = jnp.einsum('bqd,bkd->bqk', qh, kh,
                        preferred_element_type=jnp.float32) * scale      # (B, S, S)
        sc = jnp.where(key_keep, sc, jnp.float32(-1e9))  # masked_fill semantics
        sc = sc - jnp.max(sc, axis=-1, keepdims=True)
        p = jnp.exp(sc)
        p = p * pl.reciprocal(jnp.sum(p, axis=-1, keepdims=True), approx=True)
        oh = jnp.einsum('bqk,bkd->bqd', p.astype(jnp.bfloat16), vh,
                        preferred_element_type=jnp.float32)              # (B, S, dk)
        # concat(heads) @ W_O == sum_h head_h @ W_O[h*dk:(h+1)*dk, :]  (no lane concat)
        attn_acc = attn_acc + jnp.dot(oh.reshape(B * S, dk).astype(jnp.bfloat16),
                                      wo[sl, :], preferred_element_type=jnp.float32)
    attn = attn_acc + bo_ref[0]
    x1 = x + attn

    # ---- sublayer 1: x1 + FeedForward(LayerNorm(x1)) ----
    h2 = _layernorm(x1, ln2a_ref[0], ln2b_ref[0])
    f = jnp.dot(h2.astype(jnp.bfloat16), w1_ref[0],
                preferred_element_type=jnp.float32) + b1_ref[0]
    f = jnp.maximum(f, 0.0)
    f = jnp.dot(f.astype(jnp.bfloat16), w2_ref[0],
                preferred_element_type=jnp.float32) + b2_ref[0]
    x_new = x1 + f

    @pl.when(l < n_layers - 1)
    def _store_mid():
        o_ref[...] = x_new.reshape(B, S, D)

    @pl.when(l == n_layers - 1)
    def _store_last():
        o_ref[...] = _layernorm(x_new, na_ref[...], nb_ref[...]).reshape(B, S, D)


# ----------------------------- wrapper -----------------------------

def _layer_spec(arr):
    nd = arr.ndim
    return pl.BlockSpec((1,) + arr.shape[1:],
                        lambda l, _nd=nd: (l,) + (0,) * (_nd - 1))


def _const_spec(arr):
    nd = arr.ndim
    return pl.BlockSpec(arr.shape, lambda l, _nd=nd: (0,) * _nd)


def encoder_forward(x, mask, params, n_heads):
    B, S, D = x.shape
    n_layers = params["wq"].shape[0]
    mask3 = mask.reshape(B, 1, S).astype(jnp.float32)

    names = ["wq", "bq", "wk", "bk", "wv", "bv", "wo", "bo",
             "w1", "b1", "w2", "b2", "ln1a", "ln1b", "ln2a", "ln2b"]
    stacked = [params[n] for n in names]

    in_specs = ([pl.BlockSpec((B, S, D), lambda l: (0, 0, 0)),   # x (used at step 0)
                 pl.BlockSpec((B, 1, S), lambda l: (0, 0, 0))]   # mask
                + [_layer_spec(w) for w in stacked]
                + [_const_spec(params["norm_a"]), _const_spec(params["norm_b"])])

    return pl.pallas_call(
        functools.partial(fused_encoder_kernel, n_heads=n_heads),
        out_shape=jax.ShapeDtypeStruct((B, S, D), jnp.float32),
        grid=(n_layers,),
        in_specs=in_specs,
        out_specs=pl.BlockSpec((B, S, D), lambda l: (0, 0, 0)),  # resident across layers
        compiler_params=pltpu.CompilerParams(dimension_semantics=("arbitrary",)),
    )(x, mask3, *stacked, params["norm_a"], params["norm_b"])


# ----------------------------- parameters (stacked per layer) -----------------------------

def init_params(key, n_layers, d_model, d_ff):
    p = {}
    mats = [("wq", (d_model, d_model)), ("wk", (d_model, d_model)),
            ("wv", (d_model, d_model)), ("wo", (d_model, d_model)),
            ("w1", (d_model, d_ff)), ("w2", (d_ff, d_model))]
    vecs = [("bq", (1, d_model)), ("bk", (1, d_model)), ("bv", (1, d_model)),
            ("bo", (1, d_model)), ("b1", (1, d_ff)), ("b2", (1, d_model))]
    for name, shape in mats:
        key, sub = jax.random.split(key)
        p[name] = (0.05 * jax.random.normal(sub, (n_layers,) + shape)).astype(jnp.bfloat16)
    for name, shape in vecs:
        key, sub = jax.random.split(key)
        p[name] = (0.01 * jax.random.normal(sub, (n_layers,) + shape)).astype(jnp.float32)
    p["ln1a"] = jnp.ones((n_layers, 1, d_model), jnp.float32)
    p["ln1b"] = jnp.zeros((n_layers, 1, d_model), jnp.float32)
    p["ln2a"] = jnp.ones((n_layers, 1, d_model), jnp.float32)
    p["ln2b"] = jnp.zeros((n_layers, 1, d_model), jnp.float32)
    p["norm_a"] = jnp.ones((1, d_model), jnp.float32)
    p["norm_b"] = jnp.zeros((1, d_model), jnp.float32)
    return p


# ----------------------------- pure-JAX reference (f32) -----------------------------

def ref_forward(x, mask, params, n_heads):
    B, S, D = x.shape
    H, dk = n_heads, D // n_heads

    def ln(t, a, b, eps=1e-6):
        mean = t.mean(-1, keepdims=True)
        var = jnp.sum((t - mean) ** 2, -1, keepdims=True) / (D - 1)
        return a * (t - mean) / (jnp.sqrt(var) + eps) + b

    mvec = mask.reshape(B, 1, 1, S).astype(jnp.float32)
    n_layers = params["wq"].shape[0]
    for l in range(n_layers):
        g = lambda n: params[n][l].astype(jnp.float32)
        h = ln(x, g("ln1a"), g("ln1b"))
        q = h @ g("wq") + g("bq")
        k = h @ g("wk") + g("bk")
        v = h @ g("wv") + g("bv")
        qh = q.reshape(B, S, H, dk).transpose(0, 2, 1, 3)
        kh = k.reshape(B, S, H, dk).transpose(0, 2, 1, 3)
        vh = v.reshape(B, S, H, dk).transpose(0, 2, 1, 3)
        sc = jnp.einsum('bhqd,bhkd->bhqk', qh, kh) / jnp.sqrt(jnp.float32(dk))
        sc = jnp.where(mvec > 0, sc, jnp.float32(-1e9))
        p = jax.nn.softmax(sc, axis=-1)
        o = jnp.einsum('bhqk,bhkd->bhqd', p, vh).transpose(0, 2, 1, 3).reshape(B, S, D)
        x1 = x + (o @ g("wo") + g("bo"))
        h2 = ln(x1, g("ln2a"), g("ln2b"))
        f = jnp.maximum(h2 @ g("w1") + g("b1"), 0.0) @ g("w2") + g("b2")
        x = x1 + f
    return ln(x, params["norm_a"], params["norm_b"])


# ----------------------------- main -----------------------------

if __name__ == "__main__":
    B, S, D, H, F, N = 2, 8, 32, 4, 64, 2

    key = jax.random.PRNGKey(0)
    kx, kp = jax.random.split(key)
    x = jax.random.normal(kx, (B, S, D), dtype=jnp.float32)
    mask = jnp.ones((B, S), dtype=jnp.int32)   # all positions visible
    params = init_params(kp, N, D, F)

    out = jax.block_until_ready(encoder_forward(x, mask, params, n_heads=H))
    assert out.shape == (B, S, D)
    assert bool(jnp.all(jnp.isfinite(out)))

    # Loose tolerance: kernel uses bf16 MXU matmuls + approx reciprocal in softmax.
    ref = jax.block_until_ready(ref_forward(x, mask, params, n_heads=H))
    assert float(jnp.max(jnp.abs(out - ref))) < 5e-2

    print("KERNEL_OK")
</pallas_src>

<mosaic_0001>
module attributes {stable_mosaic.version = 11 : i64} {
  func.func @fused_encoder_kernel(%arg0: i32, %arg1: memref<2x8x32xf32, #tpu.memory_space<vmem>>, %arg2: memref<2x1x8xf32, #tpu.memory_space<vmem>>, %arg3: memref<1x32x32xbf16, #tpu.memory_space<vmem>>, %arg4: memref<1x1x32xf32, #tpu.memory_space<vmem>>, %arg5: memref<1x32x32xbf16, #tpu.memory_space<vmem>>, %arg6: memref<1x1x32xf32, #tpu.memory_space<vmem>>, %arg7: memref<1x32x32xbf16, #tpu.memory_space<vmem>>, %arg8: memref<1x1x32xf32, #tpu.memory_space<vmem>>, %arg9: memref<1x32x32xbf16, #tpu.memory_space<vmem>>, %arg10: memref<1x1x32xf32, #tpu.memory_space<vmem>>, %arg11: memref<1x32x64xbf16, #tpu.memory_space<vmem>>, %arg12: memref<1x1x64xf32, #tpu.memory_space<vmem>>, %arg13: memref<1x64x32xbf16, #tpu.memory_space<vmem>>, %arg14: memref<1x1x32xf32, #tpu.memory_space<vmem>>, %arg15: memref<1x1x32xf32, #tpu.memory_space<vmem>>, %arg16: memref<1x1x32xf32, #tpu.memory_space<vmem>>, %arg17: memref<1x1x32xf32, #tpu.memory_space<vmem>>, %arg18: memref<1x1x32xf32, #tpu.memory_space<vmem>>, %arg19: memref<1x32xf32, #tpu.memory_space<vmem>>, %arg20: memref<1x32xf32, #tpu.memory_space<vmem>>, %arg21: memref<2x8x32xf32, #tpu.memory_space<vmem>>) attributes {dimension_semantics = [#tpu.dimension_semantics<arbitrary>], iteration_bounds = array<i64: 2>, scalar_prefetch = 0 : i64, scratch_operands = 0 : i64, tpu.core_type = #tpu.core_type<tc>, window_params = [{pipeline_mode = #tpu.pipeline_mode<synchronous>, transform_indices = @transform_0, window_bounds = array<i64: 2, 8, 32>}, {pipeline_mode = #tpu.pipeline_mode<synchronous>, transform_indices = @transform_1, window_bounds = array<i64: 2, 1, 8>}, {transform_indices = @transform_2, window_bounds = array<i64: 1, 32, 32>}, {transform_indices = @transform_3, window_bounds = array<i64: 1, 1, 32>}, {transform_indices = @transform_4, window_bounds = array<i64: 1, 32, 32>}, {transform_indices = @transform_5, window_bounds = array<i64: 1, 1, 32>}, {transform_indices = @transform_6, window_bounds = array<i64: 1, 32, 32>}, {transform_indices = @transform_7, window_bounds = array<i64: 1, 1, 32>}, {transform_indices = @transform_8, window_bounds = array<i64: 1, 32, 32>}, {transform_indices = @transform_9, window_bounds = array<i64: 1, 1, 32>}, {transform_indices = @transform_10, window_bounds = array<i64: 1, 32, 64>}, {transform_indices = @transform_11, window_bounds = array<i64: 1, 1, 64>}, {transform_indices = @transform_12, window_bounds = array<i64: 1, 64, 32>}, {transform_indices = @transform_13, window_bounds = array<i64: 1, 1, 32>}, {transform_indices = @transform_14, window_bounds = array<i64: 1, 1, 32>}, {transform_indices = @transform_15, window_bounds = array<i64: 1, 1, 32>}, {transform_indices = @transform_16, window_bounds = array<i64: 1, 1, 32>}, {transform_indices = @transform_17, window_bounds = array<i64: 1, 1, 32>}, {pipeline_mode = #tpu.pipeline_mode<synchronous>, transform_indices = @transform_18, window_bounds = array<i64: 1, 32>}, {pipeline_mode = #tpu.pipeline_mode<synchronous>, transform_indices = @transform_19, window_bounds = array<i64: 1, 32>}, {pipeline_mode = #tpu.pipeline_mode<synchronous>, transform_indices = @transform_20, window_bounds = array<i64: 2, 8, 32>}]} {
    %c0_i32 = arith.constant 0 : i32
    %0 = arith.cmpi eq, %arg0, %c0_i32 : i32
    %1 = arith.extui %0 : i1 to i32
    %c0_i32_0 = arith.constant 0 : i32
    %2 = arith.cmpi ne, %1, %c0_i32_0 : i32
    scf.if %2 {
      %c0_100 = arith.constant 0 : index
      %c0_101 = arith.constant 0 : index
      %c0_102 = arith.constant 0 : index
      %236 = vector.load %arg1[%c0_100, %c0_101, %c0_102] : memref<2x8x32xf32, #tpu.memory_space<vmem>>, vector<2x8x32xf32>
      %c0_103 = arith.constant 0 : index
      %c0_104 = arith.constant 0 : index
      %c0_105 = arith.constant 0 : index
      %237 = vector.load %arg21[%c0_103, %c0_104, %c0_105] : memref<2x8x32xf32, #tpu.memory_space<vmem>>, vector<2x8x32xf32>
      tpu.vector_store %arg21[%c0_103, %c0_104, %c0_105], %236 {strides = array<i32>} : memref<2x8x32xf32, #tpu.memory_space<vmem>>, vector<2x8x32xf32>,
    } else {
    }
    %cst = arith.constant 8.000000e+00 : f32
    %3 = math.sqrt %cst : f32
    %cst_1 = arith.constant 1.000000e+00 : f32
    %4 = arith.divf %cst_1, %3 : f32
    %c0 = arith.constant 0 : index
    %c0_2 = arith.constant 0 : index
    %c0_3 = arith.constant 0 : index
    %5 = vector.load %arg21[%c0, %c0_2, %c0_3] : memref<2x8x32xf32, #tpu.memory_space<vmem>>, vector<2x8x32xf32>
    %6 = vector.shape_cast %5 : vector<2x8x32xf32> to vector<16x32xf32>
    %c0_4 = arith.constant 0 : index
    %c0_5 = arith.constant 0 : index
    %c0_6 = arith.constant 0 : index
    %7 = vector.load %arg2[%c0_4, %c0_5, %c0_6] : memref<2x1x8xf32, #tpu.memory_space<vmem>>, vector<2x1x8xf32>
    %cst_7 = arith.constant 0.000000e+00 : f32
    %8 = vector.broadcast %cst_7 : f32 to vector<2x1x8xf32>
    %9 = arith.cmpf ogt, %7, %8 : vector<2x1x8xf32>
    %c0_8 = arith.constant 0 : index
    %c0_9 = arith.constant 0 : index
    %c0_10 = arith.constant 0 : index
    %10 = vector.load %arg15[%c0_8, %c0_9, %c0_10] : memref<1x1x32xf32, #tpu.memory_space<vmem>>, vector<1x1x32xf32>
    %11 = vector.shape_cast %10 : vector<1x1x32xf32> to vector<1x32xf32>
    %c0_11 = arith.constant 0 : index
    %c0_12 = arith.constant 0 : index
    %c0_13 = arith.constant 0 : index
    %12 = vector.load %arg16[%c0_11, %c0_12, %c0_13] : memref<1x1x32xf32, #tpu.memory_space<vmem>>, vector<1x1x32xf32>
    %13 = vector.shape_cast %12 : vector<1x1x32xf32> to vector<1x32xf32>
    %cst_14 = arith.constant dense<0.000000e+00> : vector<16xf32>
    %14 = vector.multi_reduction <add>, %6, %cst_14 [1] : vector<16x32xf32> to vector<16xf32>
    %15 = vector.shape_cast %14 : vector<16xf32> to vector<16x1xf32>
    %cst_15 = arith.constant 3.200000e+01 : f32
    %16 = vector.broadcast %cst_15 : f32 to vector<16x1xf32>
    %17 = arith.divf %15, %16 : vector<16x1xf32>
    %18 = vector.broadcast %17 : vector<16x1xf32> to vector<16x32xf32>
    %19 = arith.subf %6, %18 : vector<16x32xf32>
    %20 = arith.mulf %19, %19 : vector<16x32xf32>
    %cst_16 = arith.constant dense<0.000000e+00> : vector<16xf32>
    %21 = vector.multi_reduction <add>, %20, %cst_16 [1] : vector<16x32xf32> to vector<16xf32>
    %22 = vector.shape_cast %21 : vector<16xf32> to vector<16x1xf32>
    %cst_17 = arith.constant 3.100000e+01 : f32
    %23 = vector.broadcast %cst_17 : f32 to vector<16x1xf32>
    %24 = arith.divf %22, %23 : vector<16x1xf32>
    %25 = math.sqrt %24 : vector<16x1xf32>
    %26 = vector.broadcast %11 : vector<1x32xf32> to vector<16x32xf32>
    %27 = arith.mulf %26, %19 : vector<16x32xf32>
    %cst_18 = arith.constant 9.99999997E-7 : f32
    %28 = vector.broadcast %cst_18 : f32 to vector<16x1xf32>
    %29 = arith.addf %25, %28 : vector<16x1xf32>
    %30 = vector.broadcast %29 : vector<16x1xf32> to vector<16x32xf32>
    %31 = arith.divf %27, %30 : vector<16x32xf32>
    %32 = vector.broadcast %13 : vector<1x32xf32> to vector<16x32xf32>
    %33 = arith.addf %31, %32 : vector<16x32xf32>
    %34 = arith.truncf %33 : vector<16x32xf32> to vector<16x32xbf16>
    %c0_19 = arith.constant 0 : index
    %c0_20 = arith.constant 0 : index
    %c0_21 = arith.constant 0 : index
    %35 = vector.load %arg3[%c0_19, %c0_20, %c0_21] : memref<1x32x32xbf16, #tpu.memory_space<vmem>>, vector<1x32x32xbf16>
    %36 = vector.shape_cast %35 : vector<1x32x32xbf16> to vector<32x32xbf16>
    %cst_22 = arith.constant dense<0.000000e+00> : vector<16x32xf32>
    %37 = tpu.matmul %34, %36, %cst_22 {dimension_numbers = #tpu.dot_dimension_numbers<[1], [0], [0], [1], [0, 0, 1, 1], [], []>} : vector<16x32xbf16>, vector<32x32xbf16>, vector<16x32xf32> -> vector<16x32xf32>
    %c0_23 = arith.constant 0 : index
    %c0_24 = arith.constant 0 : index
    %c0_25 = arith.constant 0 : index
    %38 = vector.load %arg4[%c0_23, %c0_24, %c0_25] : memref<1x1x32xf32, #tpu.memory_space<vmem>>, vector<1x1x32xf32>
    %39 = vector.shape_cast %38 : vector<1x1x32xf32> to vector<1x32xf32>
    %40 = vector.broadcast %39 : vector<1x32xf32> to vector<16x32xf32>
    %41 = arith.addf %37, %40 : vector<16x32xf32>
    %c0_26 = arith.constant 0 : index
    %c0_27 = arith.constant 0 : index
    %c0_28 = arith.constant 0 : index
    %42 = vector.load %arg5[%c0_26, %c0_27, %c0_28] : memref<1x32x32xbf16, #tpu.memory_space<vmem>>, vector<1x32x32xbf16>
    %43 = vector.shape_cast %42 : vector<1x32x32xbf16> to vector<32x32xbf16>
    %cst_29 = arith.constant dense<0.000000e+00> : vector<16x32xf32>
    %44 = tpu.matmul %34, %43, %cst_29 {dimension_numbers = #tpu.dot_dimension_numbers<[1], [0], [0], [1], [0, 0, 1, 1], [], []>} : vector<16x32xbf16>, vector<32x32xbf16>, vector<16x32xf32> -> vector<16x32xf32>
    %c0_30 = arith.constant 0 : index
    %c0_31 = arith.constant 0 : index
    %c0_32 = arith.constant 0 : index
    %45 = vector.load %arg6[%c0_30, %c0_31, %c0_32] : memref<1x1x32xf32, #tpu.memory_space<vmem>>, vector<1x1x32xf32>
    %46 = vector.shape_cast %45 : vector<1x1x32xf32> to vector<1x32xf32>
    %47 = vector.broadcast %46 : vector<1x32xf32> to vector<16x32xf32>
    %48 = arith.addf %44, %47 : vector<16x32xf32>
    %c0_33 = arith.constant 0 : index
    %c0_34 = arith.constant 0 : index
    %c0_35 = arith.constant 0 : index
    %49 = vector.load %arg7[%c0_33, %c0_34, %c0_35] : memref<1x32x32xbf16, #tpu.memory_space<vmem>>, vector<1x32x32xbf16>
    %50 = vector.shape_cast %49 : vector<1x32x32xbf16> to vector<32x32xbf16>
    %cst_36 = arith.constant dense<0.000000e+00> : vector<16x32xf32>
    %51 = tpu.matmul %34, %50, %cst_36 {dimension_numbers = #tpu.dot_dimension_numbers<[1], [0], [0], [1], [0, 0, 1, 1], [], []>} : vector<16x32xbf16>, vector<32x32xbf16>, vector<16x32xf32> -> vector<16x32xf32>
    %c0_37 = arith.constant 0 : index
    %c0_38 = arith.constant 0 : index
    %c0_39 = arith.constant 0 : index
    %52 = vector.load %arg8[%c0_37, %c0_38, %c0_39] : memref<1x1x32xf32, #tpu.memory_space<vmem>>, vector<1x1x32xf32>
    %53 = vector.shape_cast %52 : vector<1x1x32xf32> to vector<1x32xf32>
    %54 = vector.broadcast %53 : vector<1x32xf32> to vector<16x32xf32>
    %55 = arith.addf %51, %54 : vector<16x32xf32>
    %56 = vector.shape_cast %41 : vector<16x32xf32> to vector<2x8x32xf32>
    %57 = vector.shape_cast %48 : vector<16x32xf32> to vector<2x8x32xf32>
    %58 = vector.shape_cast %55 : vector<16x32xf32> to vector<2x8x32xf32>
    %c0_40 = arith.constant 0 : index
    %c0_41 = arith.constant 0 : index
    %c0_42 = arith.constant 0 : index
    %59 = vector.load %arg9[%c0_40, %c0_41, %c0_42] : memref<1x32x32xbf16, #tpu.memory_space<vmem>>, vector<1x32x32xbf16>
    %60 = vector.shape_cast %59 : vector<1x32x32xbf16> to vector<32x32xbf16>
    %cst_43 = arith.constant 0.000000e+00 : f32
    %61 = vector.broadcast %cst_43 : f32 to vector<16x32xf32>
    %62 = vector.extract_strided_slice %56 {offsets = [0, 0, 0], sizes = [2, 8, 8], strides = [1, 1, 1]} : vector<2x8x32xf32> to vector<2x8x8xf32>
    %63 = arith.truncf %62 : vector<2x8x8xf32> to vector<2x8x8xbf16>
    %64 = vector.extract_strided_slice %57 {offsets = [0, 0, 0], sizes = [2, 8, 8], strides = [1, 1, 1]} : vector<2x8x32xf32> to vector<2x8x8xf32>
    %65 = arith.truncf %64 : vector<2x8x8xf32> to vector<2x8x8xbf16>
    %66 = vector.extract_strided_slice %58 {offsets = [0, 0, 0], sizes = [2, 8, 8], strides = [1, 1, 1]} : vector<2x8x32xf32> to vector<2x8x8xf32>
    %67 = arith.truncf %66 : vector<2x8x8xf32> to vector<2x8x8xbf16>
    "tpu.trace_start"() <{level = 10 : i32, message = "bqd,bkd->bqk"}> : () -> ()
    %cst_44 = arith.constant dense<0.000000e+00> : vector<2x8x8xf32>
    %68 = tpu.matmul %63, %65, %cst_44 {dimension_numbers = #tpu.dot_dimension_numbers<[2], [2], [1], [1], [0, 0, 0, 1, 1, 1], [0], [0]>} : vector<2x8x8xbf16>, vector<2x8x8xbf16>, vector<2x8x8xf32> -> vector<2x8x8xf32>
    "tpu.trace_stop"() : () -> ()
    %69 = vector.broadcast %4 : f32 to vector<2x8x8xf32>
    %70 = arith.mulf %68, %69 : vector<2x8x8xf32>
    %cst_45 = arith.constant -1.000000e+09 : f32
    %71 = vector.shape_cast %9 : vector<2x1x8xi1> to vector<2x1x8xi1>
    %72 = vector.broadcast %71 : vector<2x1x8xi1> to vector<2x8x8xi1>
    %73 = vector.broadcast %cst_45 : f32 to vector<2x8x8xf32>
    %74 = arith.select %72, %70, %73 : vector<2x8x8xi1>, vector<2x8x8xf32>
    %cst_46 = arith.constant dense<0xFF800000> : vector<2x8xf32>
    %75 = vector.multi_reduction <maximumf>, %74, %cst_46 [2] : vector<2x8x8xf32> to vector<2x8xf32>
    %76 = vector.shape_cast %75 : vector<2x8xf32> to vector<2x8x1xf32>
    %77 = vector.broadcast %76 : vector<2x8x1xf32> to vector<2x8x8xf32>
    %78 = arith.subf %74, %77 : vector<2x8x8xf32>
    %79 = math.exp %78 : vector<2x8x8xf32>
    %cst_47 = arith.constant dense<0.000000e+00> : vector<2x8xf32>
    %80 = vector.multi_reduction <add>, %79, %cst_47 [2] : vector<2x8x8xf32> to vector<2x8xf32>
    %81 = vector.shape_cast %80 : vector<2x8xf32> to vector<2x8x1xf32>
    %82 = tpu.reciprocal %81 {approx = true} : vector<2x8x1xf32> -> vector<2x8x1xf32>
    %83 = vector.broadcast %82 : vector<2x8x1xf32> to vector<2x8x8xf32>
    %84 = arith.mulf %79, %83 : vector<2x8x8xf32>
    %85 = arith.truncf %84 : vector<2x8x8xf32> to vector<2x8x8xbf16>
    "tpu.trace_start"() <{level = 10 : i32, message = "bqk,bkd->bqd"}> : () -> ()
    %cst_48 = arith.constant dense<0.000000e+00> : vector<2x8x8xf32>
    %86 = tpu.matmul %85, %67, %cst_48 {dimension_numbers = #tpu.dot_dimension_numbers<[2], [1], [1], [2], [0, 0, 0, 1, 1, 2], [0], [0]>} : vector<2x8x8xbf16>, vector<2x8x8xbf16>, vector<2x8x8xf32> -> vector<2x8x8xf32>
    "tpu.trace_stop"() : () -> ()
    %87 = vector.shape_cast %86 : vector<2x8x8xf32> to vector<16x8xf32>
    %88 = arith.truncf %87 : vector<16x8xf32> to vector<16x8xbf16>
    %89 = vector.extract_strided_slice %60 {offsets = [0, 0], sizes = [8, 32], strides = [1, 1]} : vector<32x32xbf16> to vector<8x32xbf16>
    %cst_49 = arith.constant dense<0.000000e+00> : vector<16x32xf32>
    %90 = tpu.matmul %88, %89, %cst_49 {dimension_numbers = #tpu.dot_dimension_numbers<[1], [0], [0], [1], [0, 0, 1, 1], [], []>} : vector<16x8xbf16>, vector<8x32xbf16>, vector<16x32xf32> -> vector<16x32xf32>
    %91 = arith.addf %61, %90 : vector<16x32xf32>
    %92 = vector.extract_strided_slice %56 {offsets = [0, 0, 8], sizes = [2, 8, 8], strides = [1, 1, 1]} : vector<2x8x32xf32> to vector<2x8x8xf32>
    %93 = arith.truncf %92 : vector<2x8x8xf32> to vector<2x8x8xbf16>
    %94 = vector.extract_strided_slice %57 {offsets = [0, 0, 8], sizes = [2, 8, 8], strides = [1, 1, 1]} : vector<2x8x32xf32> to vector<2x8x8xf32>
    %95 = arith.truncf %94 : vector<2x8x8xf32> to vector<2x8x8xbf16>
    %96 = vector.extract_strided_slice %58 {offsets = [0, 0, 8], sizes = [2, 8, 8], strides = [1, 1, 1]} : vector<2x8x32xf32> to vector<2x8x8xf32>
    %97 = arith.truncf %96 : vector<2x8x8xf32> to vector<2x8x8xbf16>
    "tpu.trace_start"() <{level = 10 : i32, message = "bqd,bkd->bqk"}> : () -> ()
    %cst_50 = arith.constant dense<0.000000e+00> : vector<2x8x8xf32>
    %98 = tpu.matmul %93, %95, %cst_50 {dimension_numbers = #tpu.dot_dimension_numbers<[2], [2], [1], [1], [0, 0, 0, 1, 1, 1], [0], [0]>} : vector<2x8x8xbf16>, vector<2x8x8xbf16>, vector<2x8x8xf32> -> vector<2x8x8xf32>
    "tpu.trace_stop"() : () -> ()
    %99 = vector.broadcast %4 : f32 to vector<2x8x8xf32>
    %100 = arith.mulf %98, %99 : vector<2x8x8xf32>
    %cst_51 = arith.constant -1.000000e+09 : f32
    %101 = vector.shape_cast %9 : vector<2x1x8xi1> to vector<2x1x8xi1>
    %102 = vector.broadcast %101 : vector<2x1x8xi1> to vector<2x8x8xi1>
    %103 = vector.broadcast %cst_51 : f32 to vector<2x8x8xf32>
    %104 = arith.select %102, %100, %103 : vector<2x8x8xi1>, vector<2x8x8xf32>
    %cst_52 = arith.constant dense<0xFF800000> : vector<2x8xf32>
    %105 = vector.multi_reduction <maximumf>, %104, %cst_52 [2] : vector<2x8x8xf32> to vector<2x8xf32>
    %106 = vector.shape_cast %105 : vector<2x8xf32> to vector<2x8x1xf32>
    %107 = vector.broadcast %106 : vector<2x8x1xf32> to vector<2x8x8xf32>
    %108 = arith.subf %104, %107 : vector<2x8x8xf32>
    %109 = math.exp %108 : vector<2x8x8xf32>
    %cst_53 = arith.constant dense<0.000000e+00> : vector<2x8xf32>
    %110 = vector.multi_reduction <add>, %109, %cst_53 [2] : vector<2x8x8xf32> to vector<2x8xf32>
    %111 = vector.shape_cast %110 : vector<2x8xf32> to vector<2x8x1xf32>
    %112 = tpu.reciprocal %111 {approx = true} : vector<2x8x1xf32> -> vector<2x8x1xf32>
    %113 = vector.broadcast %112 : vector<2x8x1xf32> to vector<2x8x8xf32>
    %114 = arith.mulf %109, %113 : vector<2x8x8xf32>
    %115 = arith.truncf %114 : vector<2x8x8xf32> to vector<2x8x8xbf16>
    "tpu.trace_start"() <{level = 10 : i32, message = "bqk,bkd->bqd"}> : () -> ()
    %cst_54 = arith.constant dense<0.000000e+00> : vector<2x8x8xf32>
    %116 = tpu.matmul %115, %97, %cst_54 {dimension_numbers = #tpu.dot_dimension_numbers<[2], [1], [1], [2], [0, 0, 0, 1, 1, 2], [0], [0]>} : vector<2x8x8xbf16>, vector<2x8x8xbf16>, vector<2x8x8xf32> -> vector<2x8x8xf32>
    "tpu.trace_stop"() : () -> ()
    %117 = vector.shape_cast %116 : vector<2x8x8xf32> to vector<16x8xf32>
    %118 = arith.truncf %117 : vector<16x8xf32> to vector<16x8xbf16>
    %119 = vector.extract_strided_slice %60 {offsets = [8, 0], sizes = [8, 32], strides = [1, 1]} : vector<32x32xbf16> to vector<8x32xbf16>
    %cst_55 = arith.constant dense<0.000000e+00> : vector<16x32xf32>
    %120 = tpu.matmul %118, %119, %cst_55 {dimension_numbers = #tpu.dot_dimension_numbers<[1], [0], [0], [1], [0, 0, 1, 1], [], []>} : vector<16x8xbf16>, vector<8x32xbf16>, vector<16x32xf32> -> vector<16x32xf32>
    %121 = arith.addf %91, %120 : vector<16x32xf32>
    %122 = vector.extract_strided_slice %56 {offsets = [0, 0, 16], sizes = [2, 8, 8], strides = [1, 1, 1]} : vector<2x8x32xf32> to vector<2x8x8xf32>
    %123 = arith.truncf %122 : vector<2x8x8xf32> to vector<2x8x8xbf16>
    %124 = vector.extract_strided_slice %57 {offsets = [0, 0, 16], sizes = [2, 8, 8], strides = [1, 1, 1]} : vector<2x8x32xf32> to vector<2x8x8xf32>
    %125 = arith.truncf %124 : vector<2x8x8xf32> to vector<2x8x8xbf16>
    %126 = vector.extract_strided_slice %58 {offsets = [0, 0, 16], sizes = [2, 8, 8], strides = [1, 1, 1]} : vector<2x8x32xf32> to vector<2x8x8xf32>
    %127 = arith.truncf %126 : vector<2x8x8xf32> to vector<2x8x8xbf16>
    "tpu.trace_start"() <{level = 10 : i32, message = "bqd,bkd->bqk"}> : () -> ()
    %cst_56 = arith.constant dense<0.000000e+00> : vector<2x8x8xf32>
    %128 = tpu.matmul %123, %125, %cst_56 {dimension_numbers = #tpu.dot_dimension_numbers<[2], [2], [1], [1], [0, 0, 0, 1, 1, 1], [0], [0]>} : vector<2x8x8xbf16>, vector<2x8x8xbf16>, vector<2x8x8xf32> -> vector<2x8x8xf32>
    "tpu.trace_stop"() : () -> ()
    %129 = vector.broadcast %4 : f32 to vector<2x8x8xf32>
    %130 = arith.mulf %128, %129 : vector<2x8x8xf32>
    %cst_57 = arith.constant -1.000000e+09 : f32
    %131 = vector.shape_cast %9 : vector<2x1x8xi1> to vector<2x1x8xi1>
    %132 = vector.broadcast %131 : vector<2x1x8xi1> to vector<2x8x8xi1>
    %133 = vector.broadcast %cst_57 : f32 to vector<2x8x8xf32>
    %134 = arith.select %132, %130, %133 : vector<2x8x8xi1>, vector<2x8x8xf32>
    %cst_58 = arith.constant dense<0xFF800000> : vector<2x8xf32>
    %135 = vector.multi_reduction <maximumf>, %134, %cst_58 [2] : vector<2x8x8xf32> to vector<2x8xf32>
    %136 = vector.shape_cast %135 : vector<2x8xf32> to vector<2x8x1xf32>
    %137 = vector.broadcast %136 : vector<2x8x1xf32> to vector<2x8x8xf32>
    %138 = arith.subf %134, %137 : vector<2x8x8xf32>
    %139 = math.exp %138 : vector<2x8x8xf32>
    %cst_59 = arith.constant dense<0.000000e+00> : vector<2x8xf32>
    %140 = vector.multi_reduction <add>, %139, %cst_59 [2] : vector<2x8x8xf32> to vector<2x8xf32>
    %141 = vector.shape_cast %140 : vector<2x8xf32> to vector<2x8x1xf32>
    %142 = tpu.reciprocal %141 {approx = true} : vector<2x8x1xf32> -> vector<2x8x1xf32>
    %143 = vector.broadcast %142 : vector<2x8x1xf32> to vector<2x8x8xf32>
    %144 = arith.mulf %139, %143 : vector<2x8x8xf32>
    %145 = arith.truncf %144 : vector<2x8x8xf32> to vector<2x8x8xbf16>
    "tpu.trace_start"() <{level = 10 : i32, message = "bqk,bkd->bqd"}> : () -> ()
    %cst_60 = arith.constant dense<0.000000e+00> : vector<2x8x8xf32>
    %146 = tpu.matmul %145, %127, %cst_60 {dimension_numbers = #tpu.dot_dimension_numbers<[2], [1], [1], [2], [0, 0, 0, 1, 1, 2], [0], [0]>} : vector<2x8x8xbf16>, vector<2x8x8xbf16>, vector<2x8x8xf32> -> vector<2x8x8xf32>
    "tpu.trace_stop"() : () -> ()
    %147 = vector.shape_cast %146 : vector<2x8x8xf32> to vector<16x8xf32>
    %148 = arith.truncf %147 : vector<16x8xf32> to vector<16x8xbf16>
    %149 = vector.extract_strided_slice %60 {offsets = [16, 0], sizes = [8, 32], strides = [1, 1]} : vector<32x32xbf16> to vector<8x32xbf16>
    %cst_61 = arith.constant dense<0.000000e+00> : vector<16x32xf32>
    %150 = tpu.matmul %148, %149, %cst_61 {dimension_numbers = #tpu.dot_dimension_numbers<[1], [0], [0], [1], [0, 0, 1, 1], [], []>} : vector<16x8xbf16>, vector<8x32xbf16>, vector<16x32xf32> -> vector<16x32xf32>
    %151 = arith.addf %121, %150 : vector<16x32xf32>
    %152 = vector.extract_strided_slice %56 {offsets = [0, 0, 24], sizes = [2, 8, 8], strides = [1, 1, 1]} : vector<2x8x32xf32> to vector<2x8x8xf32>
    %153 = arith.truncf %152 : vector<2x8x8xf32> to vector<2x8x8xbf16>
    %154 = vector.extract_strided_slice %57 {offsets = [0, 0, 24], sizes = [2, 8, 8], strides = [1, 1, 1]} : vector<2x8x32xf32> to vector<2x8x8xf32>
    %155 = arith.truncf %154 : vector<2x8x8xf32> to vector<2x8x8xbf16>
    %156 = vector.extract_strided_slice %58 {offsets = [0, 0, 24], sizes = [2, 8, 8], strides = [1, 1, 1]} : vector<2x8x32xf32> to vector<2x8x8xf32>
    %157 = arith.truncf %156 : vector<2x8x8xf32> to vector<2x8x8xbf16>
    "tpu.trace_start"() <{level = 10 : i32, message = "bqd,bkd->bqk"}> : () -> ()
    %cst_62 = arith.constant dense<0.000000e+00> : vector<2x8x8xf32>
    %158 = tpu.matmul %153, %155, %cst_62 {dimension_numbers = #tpu.dot_dimension_numbers<[2], [2], [1], [1], [0, 0, 0, 1, 1, 1], [0], [0]>} : vector<2x8x8xbf16>, vector<2x8x8xbf16>, vector<2x8x8xf32> -> vector<2x8x8xf32>
    "tpu.trace_stop"() : () -> ()
    %159 = vector.broadcast %4 : f32 to vector<2x8x8xf32>
    %160 = arith.mulf %158, %159 : vector<2x8x8xf32>
    %cst_63 = arith.constant -1.000000e+09 : f32
    %161 = vector.shape_cast %9 : vector<2x1x8xi1> to vector<2x1x8xi1>
    %162 = vector.broadcast %161 : vector<2x1x8xi1> to vector<2x8x8xi1>
    %163 = vector.broadcast %cst_63 : f32 to vector<2x8x8xf32>
    %164 = arith.select %162, %160, %163 : vector<2x8x8xi1>, vector<2x8x8xf32>
    %cst_64 = arith.constant dense<0xFF800000> : vector<2x8xf32>
    %165 = vector.multi_reduction <maximumf>, %164, %cst_64 [2] : vector<2x8x8xf32> to vector<2x8xf32>
    %166 = vector.shape_cast %165 : vector<2x8xf32> to vector<2x8x1xf32>
    %167 = vector.broadcast %166 : vector<2x8x1xf32> to vector<2x8x8xf32>
    %168 = arith.subf %164, %167 : vector<2x8x8xf32>
    %169 = math.exp %168 : vector<2x8x8xf32>
    %cst_65 = arith.constant dense<0.000000e+00> : vector<2x8xf32>
    %170 = vector.multi_reduction <add>, %169, %cst_65 [2] : vector<2x8x8xf32> to vector<2x8xf32>
    %171 = vector.shape_cast %170 : vector<2x8xf32> to vector<2x8x1xf32>
    %172 = tpu.reciprocal %171 {approx = true} : vector<2x8x1xf32> -> vector<2x8x1xf32>
    %173 = vector.broadcast %172 : vector<2x8x1xf32> to vector<2x8x8xf32>
    %174 = arith.mulf %169, %173 : vector<2x8x8xf32>
    %175 = arith.truncf %174 : vector<2x8x8xf32> to vector<2x8x8xbf16>
    "tpu.trace_start"() <{level = 10 : i32, message = "bqk,bkd->bqd"}> : () -> ()
    %cst_66 = arith.constant dense<0.000000e+00> : vector<2x8x8xf32>
    %176 = tpu.matmul %175, %157, %cst_66 {dimension_numbers = #tpu.dot_dimension_numbers<[2], [1], [1], [2], [0, 0, 0, 1, 1, 2], [0], [0]>} : vector<2x8x8xbf16>, vector<2x8x8xbf16>, vector<2x8x8xf32> -> vector<2x8x8xf32>
    "tpu.trace_stop"() : () -> ()
    %177 = vector.shape_cast %176 : vector<2x8x8xf32> to vector<16x8xf32>
    %178 = arith.truncf %177 : vector<16x8xf32> to vector<16x8xbf16>
    %179 = vector.extract_strided_slice %60 {offsets = [24, 0], sizes = [8, 32], strides = [1, 1]} : vector<32x32xbf16> to vector<8x32xbf16>
    %cst_67 = arith.constant dense<0.000000e+00> : vector<16x32xf32>
    %180 = tpu.matmul %178, %179, %cst_67 {dimension_numbers = #tpu.dot_dimension_numbers<[1], [0], [0], [1], [0, 0, 1, 1], [], []>} : vector<16x8xbf16>, vector<8x32xbf16>, vector<16x32xf32> -> vector<16x32xf32>
    %181 = arith.addf %151, %180 : vector<16x32xf32>
    %c0_68 = arith.constant 0 : index
    %c0_69 = arith.constant 0 : index
    %c0_70 = arith.constant 0 : index
    %182 = vector.load %arg10[%c0_68, %c0_69, %c0_70] : memref<1x1x32xf32, #tpu.memory_space<vmem>>, vector<1x1x32xf32>
    %183 = vector.shape_cast %182 : vector<1x1x32xf32> to vector<1x32xf32>
    %184 = vector.broadcast %183 : vector<1x32xf32> to vector<16x32xf32>
    %185 = arith.addf %181, %184 : vector<16x32xf32>
    %186 = arith.addf %6, %185 : vector<16x32xf32>
    %c0_71 = arith.constant 0 : index
    %c0_72 = arith.constant 0 : index
    %c0_73 = arith.constant 0 : index
    %187 = vector.load %arg17[%c0_71, %c0_72, %c0_73] : memref<1x1x32xf32, #tpu.memory_space<vmem>>, vector<1x1x32xf32>
    %188 = vector.shape_cast %187 : vector<1x1x32xf32> to vector<1x32xf32>
    %c0_74 = arith.constant 0 : index
    %c0_75 = arith.constant 0 : index
    %c0_76 = arith.constant 0 : index
    %189 = vector.load %arg18[%c0_74, %c0_75, %c0_76] : memref<1x1x32xf32, #tpu.memory_space<vmem>>, vector<1x1x32xf32>
    %190 = vector.shape_cast %189 : vector<1x1x32xf32> to vector<1x32xf32>
    %cst_77 = arith.constant dense<0.000000e+00> : vector<16xf32>
    %191 = vector.multi_reduction <add>, %186, %cst_77 [1] : vector<16x32xf32> to vector<16xf32>
    %192 = vector.shape_cast %191 : vector<16xf32> to vector<16x1xf32>
    %cst_78 = arith.constant 3.200000e+01 : f32
    %193 = vector.broadcast %cst_78 : f32 to vector<16x1xf32>
    %194 = arith.divf %192, %193 : vector<16x1xf32>
    %195 = vector.broadcast %194 : vector<16x1xf32> to vector<16x32xf32>
    %196 = arith.subf %186, %195 : vector<16x32xf32>
    %197 = arith.mulf %196, %196 : vector<16x32xf32>
    %cst_79 = arith.constant dense<0.000000e+00> : vector<16xf32>
    %198 = vector.multi_reduction <add>, %197, %cst_79 [1] : vector<16x32xf32> to vector<16xf32>
    %199 = vector.shape_cast %198 : vector<16xf32> to vector<16x1xf32>
    %cst_80 = arith.constant 3.100000e+01 : f32
    %200 = vector.broadcast %cst_80 : f32 to vector<16x1xf32>
    %201 = arith.divf %199, %200 : vector<16x1xf32>
    %202 = math.sqrt %201 : vector<16x1xf32>
    %203 = vector.broadcast %188 : vector<1x32xf32> to vector<16x32xf32>
    %204 = arith.mulf %203, %196 : vector<16x32xf32>
    %cst_81 = arith.constant 9.99999997E-7 : f32
    %205 = vector.broadcast %cst_81 : f32 to vector<16x1xf32>
    %206 = arith.addf %202, %205 : vector<16x1xf32>
    %207 = vector.broadcast %206 : vector<16x1xf32> to vector<16x32xf32>
    %208 = arith.divf %204, %207 : vector<16x32xf32>
    %209 = vector.broadcast %190 : vector<1x32xf32> to vector<16x32xf32>
    %210 = arith.addf %208, %209 : vector<16x32xf32>
    %211 = arith.truncf %210 : vector<16x32xf32> to vector<16x32xbf16>
    %c0_82 = arith.constant 0 : index
    %c0_83 = arith.constant 0 : index
    %c0_84 = arith.constant 0 : index
    %212 = vector.load %arg11[%c0_82, %c0_83, %c0_84] : memref<1x32x64xbf16, #tpu.memory_space<vmem>>, vector<1x32x64xbf16>
    %213 = vector.shape_cast %212 : vector<1x32x64xbf16> to vector<32x64xbf16>
    %cst_85 = arith.constant dense<0.000000e+00> : vector<16x64xf32>
    %214 = tpu.matmul %211, %213, %cst_85 {dimension_numbers = #tpu.dot_dimension_numbers<[1], [0], [0], [1], [0, 0, 1, 1], [], []>} : vector<16x32xbf16>, vector<32x64xbf16>, vector<16x64xf32> -> vector<16x64xf32>
    %c0_86 = arith.constant 0 : index
    %c0_87 = arith.constant 0 : index
    %c0_88 = arith.constant 0 : index
    %215 = vector.load %arg12[%c0_86, %c0_87, %c0_88] : memref<1x1x64xf32, #tpu.memory_space<vmem>>, vector<1x1x64xf32>
    %216 = vector.shape_cast %215 : vector<1x1x64xf32> to vector<1x64xf32>
    %217 = vector.broadcast %216 : vector<1x64xf32> to vector<16x64xf32>
    %218 = arith.addf %214, %217 : vector<16x64xf32>
    %cst_89 = arith.constant 0.000000e+00 : f32
    %219 = vector.broadcast %cst_89 : f32 to vector<16x64xf32>
    %220 = arith.maximumf %218, %219 : vector<16x64xf32>
    %221 = arith.truncf %220 : vector<16x64xf32> to vector<16x64xbf16>
    %c0_90 = arith.constant 0 : index
    %c0_91 = arith.constant 0 : index
    %c0_92 = arith.constant 0 : index
    %222 = vector.load %arg13[%c0_90, %c0_91, %c0_92] : memref<1x64x32xbf16, #tpu.memory_space<vmem>>, vector<1x64x32xbf16>
    %223 = vector.shape_cast %222 : vector<1x64x32xbf16> to vector<64x32xbf16>
    %cst_93 = arith.constant dense<0.000000e+00> : vector<16x32xf32>
    %224 = tpu.matmul %221, %223, %cst_93 {dimension_numbers = #tpu.dot_dimension_numbers<[1], [0], [0], [1], [0, 0, 1, 1], [], []>} : vector<16x64xbf16>, vector<64x32xbf16>, vector<16x32xf32> -> vector<16x32xf32>
    %c0_94 = arith.constant 0 : index
    %c0_95 = arith.constant 0 : index
    %c0_96 = arith.constant 0 : index
    %225 = vector.load %arg14[%c0_94, %c0_95, %c0_96] : memref<1x1x32xf32, #tpu.memory_space<vmem>>, vector<1x1x32xf32>
    %226 = vector.shape_cast %225 : vector<1x1x32xf32> to vector<1x32xf32>
    %227 = vector.broadcast %226 : vector<1x32xf32> to vector<16x32xf32>
    %228 = arith.addf %224, %227 : vector<16x32xf32>
    %229 = arith.addf %186, %228 : vector<16x32xf32>
    %c1_i32 = arith.constant 1 : i32
    %230 = arith.cmpi slt, %arg0, %c1_i32 : i32
    %231 = arith.extui %230 : i1 to i32
    %c0_i32_97 = arith.constant 0 : i32
    %232 = arith.cmpi ne, %231, %c0_i32_97 : i32
    scf.if %232 {
      %236 = vector.shape_cast %229 : vector<16x32xf32> to vector<2x8x32xf32>
      %c0_100 = arith.constant 0 : index
      %c0_101 = arith.constant 0 : index
      %c0_102 = arith.constant 0 : index
      %237 = vector.load %arg21[%c0_100, %c0_101, %c0_102] : memref<2x8x32xf32, #tpu.memory_space<vmem>>, vector<2x8x32xf32>
      tpu.vector_store %arg21[%c0_100, %c0_101, %c0_102], %236 {strides = array<i32>} : memref<2x8x32xf32, #tpu.memory_space<vmem>>, vector<2x8x32xf32>,
    } else {
    }
    %c1_i32_98 = arith.constant 1 : i32
    %233 = arith.cmpi eq, %arg0, %c1_i32_98 : i32
    %234 = arith.extui %233 : i1 to i32
    %c0_i32_99 = arith.constant 0 : i32
    %235 = arith.cmpi ne, %234, %c0_i32_99 : i32
    scf.if %235 {
      %c0_100 = arith.constant 0 : index
      %c0_101 = arith.constant 0 : index
      %236 = vector.load %arg19[%c0_100, %c0_101] : memref<1x32xf32, #tpu.memory_space<vmem>>, vector<1x32xf32>
      %c0_102 = arith.constant 0 : index
      %c0_103 = arith.constant 0 : index
      %237 = vector.load %arg20[%c0_102, %c0_103] : memref<1x32xf32, #tpu.memory_space<vmem>>, vector<1x32xf32>
      %cst_104 = arith.constant dense<0.000000e+00> : vector<16xf32>
      %238 = vector.multi_reduction <add>, %229, %cst_104 [1] : vector<16x32xf32> to vector<16xf32>
      %239 = vector.shape_cast %238 : vector<16xf32> to vector<16x1xf32>
      %cst_105 = arith.constant 3.200000e+01 : f32
      %240 = vector.broadcast %cst_105 : f32 to vector<16x1xf32>
      %241 = arith.divf %239, %240 : vector<16x1xf32>
      %242 = vector.broadcast %241 : vector<16x1xf32> to vector<16x32xf32>
      %243 = arith.subf %229, %242 : vector<16x32xf32>
      %244 = arith.mulf %243, %243 : vector<16x32xf32>
      %cst_106 = arith.constant dense<0.000000e+00> : vector<16xf32>
      %245 = vector.multi_reduction <add>, %244, %cst_106 [1] : vector<16x32xf32> to vector<16xf32>
      %246 = vector.shape_cast %245 : vector<16xf32> to vector<16x1xf32>
      %cst_107 = arith.constant 3.100000e+01 : f32
      %247 = vector.broadcast %cst_107 : f32 to vector<16x1xf32>
      %248 = arith.divf %246, %247 : vector<16x1xf32>
      %249 = math.sqrt %248 : vector<16x1xf32>
      %250 = vector.broadcast %236 : vector<1x32xf32> to vector<16x32xf32>
      %251 = arith.mulf %250, %243 : vector<16x32xf32>
      %cst_108 = arith.constant 9.99999997E-7 : f32
      %252 = vector.broadcast %cst_108 : f32 to vector<16x1xf32>
      %253 = arith.addf %249, %252 : vector<16x1xf32>
      %254 = vector.broadcast %253 : vector<16x1xf32> to vector<16x32xf32>
      %255 = arith.divf %251, %254 : vector<16x32xf32>
      %256 = vector.broadcast %237 : vector<1x32xf32> to vector<16x32xf32>
      %257 = arith.addf %255, %256 : vector<16x32xf32>
      %258 = vector.shape_cast %257 : vector<16x32xf32> to vector<2x8x32xf32>
      %c0_109 = arith.constant 0 : index
      %c0_110 = arith.constant 0 : index
      %c0_111 = arith.constant 0 : index
      %259 = vector.load %arg21[%c0_109, %c0_110, %c0_111] : memref<2x8x32xf32, #tpu.memory_space<vmem>>, vector<2x8x32xf32>
      tpu.vector_store %arg21[%c0_109, %c0_110, %c0_111], %258 {strides = array<i32>} : memref<2x8x32xf32, #tpu.memory_space<vmem>>, vector<2x8x32xf32>,
    } else {
    }
    return
  }
  func.func @transform_0(%arg0: i32) -> (i32, i32, i32) {
    %c0_i32 = arith.constant 0 : i32
    %c0_i32_0 = arith.constant 0 : i32
    %c0_i32_1 = arith.constant 0 : i32
    %c0_i32_2 = arith.constant 0 : i32
    return %c0_i32, %c0_i32_0, %c0_i32_1 : i32, i32, i32
  }
  func.func @transform_1(%arg0: i32) -> (i32, i32, i32) {
    %c0_i32 = arith.constant 0 : i32
    %c0_i32_0 = arith.constant 0 : i32
    %c0_i32_1 = arith.constant 0 : i32
    %c0_i32_2 = arith.constant 0 : i32
    return %c0_i32, %c0_i32_0, %c0_i32_1 : i32, i32, i32
  }
  func.func @transform_2(%arg0: i32) -> (i32, i32, i32) {
    %c0_i32 = arith.constant 0 : i32
    %c0_i32_0 = arith.constant 0 : i32
    %c0_i32_1 = arith.constant 0 : i32
    return %arg0, %c0_i32, %c0_i32_0 : i32, i32, i32
  }
  func.func @transform_3(%arg0: i32) -> (i32, i32, i32) {
    %c0_i32 = arith.constant 0 : i32
    %c0_i32_0 = arith.constant 0 : i32
    %c0_i32_1 = arith.constant 0 : i32
    return %arg0, %c0_i32, %c0_i32_0 : i32, i32, i32
  }
  func.func @transform_4(%arg0: i32) -> (i32, i32, i32) {
    %c0_i32 = arith.constant 0 : i32
    %c0_i32_0 = arith.constant 0 : i32
    %c0_i32_1 = arith.constant 0 : i32
    return %arg0, %c0_i32, %c0_i32_0 : i32, i32, i32
  }
  func.func @transform_5(%arg0: i32) -> (i32, i32, i32) {
    %c0_i32 = arith.constant 0 : i32
    %c0_i32_0 = arith.constant 0 : i32
    %c0_i32_1 = arith.constant 0 : i32
    return %arg0, %c0_i32, %c0_i32_0 : i32, i32, i32
  }
  func.func @transform_6(%arg0: i32) -> (i32, i32, i32) {
    %c0_i32 = arith.constant 0 : i32
    %c0_i32_0 = arith.constant 0 : i32
    %c0_i32_1 = arith.constant 0 : i32
    return %arg0, %c0_i32, %c0_i32_0 : i32, i32, i32
  }
  func.func @transform_7(%arg0: i32) -> (i32, i32, i32) {
    %c0_i32 = arith.constant 0 : i32
    %c0_i32_0 = arith.constant 0 : i32
    %c0_i32_1 = arith.constant 0 : i32
    return %arg0, %c0_i32, %c0_i32_0 : i32, i32, i32
  }
  func.func @transform_8(%arg0: i32) -> (i32, i32, i32) {
    %c0_i32 = arith.constant 0 : i32
    %c0_i32_0 = arith.constant 0 : i32
    %c0_i32_1 = arith.constant 0 : i32
    return %arg0, %c0_i32, %c0_i32_0 : i32, i32, i32
  }
  func.func @transform_9(%arg0: i32) -> (i32, i32, i32) {
    %c0_i32 = arith.constant 0 : i32
    %c0_i32_0 = arith.constant 0 : i32
    %c0_i32_1 = arith.constant 0 : i32
    return %arg0, %c0_i32, %c0_i32_0 : i32, i32, i32
  }
  func.func @transform_10(%arg0: i32) -> (i32, i32, i32) {
    %c0_i32 = arith.constant 0 : i32
    %c0_i32_0 = arith.constant 0 : i32
    %c0_i32_1 = arith.constant 0 : i32
    return %arg0, %c0_i32, %c0_i32_0 : i32, i32, i32
  }
  func.func @transform_11(%arg0: i32) -> (i32, i32, i32) {
    %c0_i32 = arith.constant 0 : i32
    %c0_i32_0 = arith.constant 0 : i32
    %c0_i32_1 = arith.constant 0 : i32
    return %arg0, %c0_i32, %c0_i32_0 : i32, i32, i32
  }
  func.func @transform_12(%arg0: i32) -> (i32, i32, i32) {
    %c0_i32 = arith.constant 0 : i32
    %c0_i32_0 = arith.constant 0 : i32
    %c0_i32_1 = arith.constant 0 : i32
    return %arg0, %c0_i32, %c0_i32_0 : i32, i32, i32
  }
  func.func @transform_13(%arg0: i32) -> (i32, i32, i32) {
    %c0_i32 = arith.constant 0 : i32
    %c0_i32_0 = arith.constant 0 : i32
    %c0_i32_1 = arith.constant 0 : i32
    return %arg0, %c0_i32, %c0_i32_0 : i32, i32, i32
  }
  func.func @transform_14(%arg0: i32) -> (i32, i32, i32) {
    %c0_i32 = arith.constant 0 : i32
    %c0_i32_0 = arith.constant 0 : i32
    %c0_i32_1 = arith.constant 0 : i32
    return %arg0, %c0_i32, %c0_i32_0 : i32, i32, i32
  }
  func.func @transform_15(%arg0: i32) -> (i32, i32, i32) {
    %c0_i32 = arith.constant 0 : i32
    %c0_i32_0 = arith.constant 0 : i32
    %c0_i32_1 = arith.constant 0 : i32
    return %arg0, %c0_i32, %c0_i32_0 : i32, i32, i32
  }
  func.func @transform_16(%arg0: i32) -> (i32, i32, i32) {
    %c0_i32 = arith.constant 0 : i32
    %c0_i32_0 = arith.constant 0 : i32
    %c0_i32_1 = arith.constant 0 : i32
    return %arg0, %c0_i32, %c0_i32_0 : i32, i32, i32
  }
  func.func @transform_17(%arg0: i32) -> (i32, i32, i32) {
    %c0_i32 = arith.constant 0 : i32
    %c0_i32_0 = arith.constant 0 : i32
    %c0_i32_1 = arith.constant 0 : i32
    return %arg0, %c0_i32, %c0_i32_0 : i32, i32, i32
  }
  func.func @transform_18(%arg0: i32) -> (i32, i32) {
    %c0_i32 = arith.constant 0 : i32
    %c0_i32_0 = arith.constant 0 : i32
    %c0_i32_1 = arith.constant 0 : i32
    return %c0_i32, %c0_i32_0 : i32, i32
  }
  func.func @transform_19(%arg0: i32) -> (i32, i32) {
    %c0_i32 = arith.constant 0 : i32
    %c0_i32_0 = arith.constant 0 : i32
    %c0_i32_1 = arith.constant 0 : i32
    return %c0_i32, %c0_i32_0 : i32, i32
  }
  func.func @transform_20(%arg0: i32) -> (i32, i32, i32) {
    %c0_i32 = arith.constant 0 : i32
    %c0_i32_0 = arith.constant 0 : i32
    %c0_i32_1 = arith.constant 0 : i32
    %c0_i32_2 = arith.constant 0 : i32
    return %c0_i32, %c0_i32_0, %c0_i32_1 : i32, i32, i32
  }
}

</mosaic_0001>

<llo_original>
// kernel: tpu_custom_call.1
$region0: #{tpu_custom_call.1}
  #allocation0 [shape = 'u32[]', space=smem, size = 0x4, offset = 0x4, fixed_abs, tag = 'smem constant byte address 0x4 - core index']
  #allocation1 [shape = 'u32[144,128]{1,0:T(1,128)}', space=vmem, size = 0x12000, scoped, tag = 'internal scratch']
  %s0 = inlined_call_operand.hbm [shape: f32[2,8,32], index: 0, kind: input, shape index: {}]
  %s1 = inlined_call_operand.hbm [shape: f32[2,1,8], index: 1, kind: input, shape index: {}]
  %s2 = inlined_call_operand.vmem [shape: bf16[2,32,32], index: 2, kind: input, shape index: {}]
  %s3 = inlined_call_operand.vmem [shape: f32[2,1,32], index: 3, kind: input, shape index: {}]
  %s4 = inlined_call_operand.vmem [shape: bf16[2,32,32], index: 4, kind: input, shape index: {}]
  %s5 = inlined_call_operand.vmem [shape: f32[2,1,32], index: 5, kind: input, shape index: {}]
  %s6 = inlined_call_operand.vmem [shape: bf16[2,32,32], index: 6, kind: input, shape index: {}]
  %s7 = inlined_call_operand.vmem [shape: f32[2,1,32], index: 7, kind: input, shape index: {}]
  %s8 = inlined_call_operand.hbm [shape: bf16[2,32,32], index: 8, kind: input, shape index: {}]
  %s9 = inlined_call_operand.vmem [shape: f32[2,1,32], index: 9, kind: input, shape index: {}]
  %s10 = inlined_call_operand.hbm [shape: bf16[2,32,64], index: 10, kind: input, shape index: {}]
  %s11 = inlined_call_operand.vmem [shape: f32[2,1,64], index: 11, kind: input, shape index: {}]
  %s12 = inlined_call_operand.vmem [shape: bf16[2,64,32], index: 12, kind: input, shape index: {}]
  %s13 = inlined_call_operand.vmem [shape: f32[2,1,32], index: 13, kind: input, shape index: {}]
  %s14 = inlined_call_operand.vmem [shape: f32[2,1,32], index: 14, kind: input, shape index: {}]
  %s15 = inlined_call_operand.vmem [shape: f32[2,1,32], index: 15, kind: input, shape index: {}]
  %s16 = inlined_call_operand.vmem [shape: f32[2,1,32], index: 16, kind: input, shape index: {}]
  %s17 = inlined_call_operand.vmem [shape: f32[2,1,32], index: 17, kind: input, shape index: {}]
  %s18 = inlined_call_operand.vmem [shape: f32[1,32], index: 18, kind: input, shape index: {}]
  %s19 = inlined_call_operand.vmem [shape: f32[1,32], index: 19, kind: input, shape index: {}]
  %s20 = inlined_call_operand.hbm [shape: f32[2,8,32], index: 20, kind: output, shape index: {}]
  %s21 = sld [smem:[#allocation0]]
  $region141: #{tpu_custom_call.1} parent=0
    _
  %s23 = ssub.s32 1, %s21
  %s24 = scalar_select 0, %s23, %s21
  $region1: #{tpu_custom_call.1} parent=0
    #allocation2 [shape = 'u8[8192]{0}', space=vmem, size = 0x2000, scoped, tag = 'input window, operand 0, single buffered']
    #allocation3 [shape = 's32[2]{0}', space=sflag, size = 0x8, scoped, tag = 'scoped memory for tpu_custom_call.1']
    #allocation4 [shape = 's32[2]{0}', space=sflag, size = 0x8, scoped, tag = 'scoped memory for tpu_custom_call.1']
    #allocation5 [shape = 'u8[1024]{0}', space=vmem, size = 0x400, scoped, tag = 'input window, operand 1, single buffered']
    #allocation6 [shape = 's32[1]{0}', space=sflag, size = 0x4, scoped, tag = 'scoped memory for tpu_custom_call.1']
    #allocation7 [shape = 'u8[16384]{0}', space=vmem, size = 0x4000, scoped, tag = 'input window, operand 8']
    #allocation8 [shape = 'u8[16384]{0}', space=vmem, size = 0x4000, scoped, tag = 'input window, operand 10']
    #allocation9 [shape = 'u8[8192]{0}', space=vmem, size = 0x2000, scoped, tag = 'output window, operand 0, single buffered']
    %25 = vsyncpa [#allocation3], 0
    %26 = vsyncpa [#allocation6], 0
    %27 = vsyncpa [#allocation4], 0
    loop: start=0, step=1, limit=4
    $region2: #{tpu_custom_call.1} parent=1 // loop_pre_header
      _
    $region3: #{tpu_custom_call.1} parent=1 // loop_header
      %s29 = sphi 0, %s33
      %p30 = scmp.ge.s32.totalorder %s29, 4
      %s37 = sphi 0, %s37
      %s39 = sphi 0, %s37
      %s40 = sphi 0, %s39
      %s54 = sphi 0, %s40
      %s58 = sphi 0, %s58
      %s60 = sphi 0, %s58
      %s61 = sphi 0, %s60
      %s75 = sphi 0, %s61
      %s81 = sphi 0, %s83
      %s84 = sphi 0, %s81
      %s85 = sphi 0, %s84
      %s101 = sphi 0, %s85
      %s107 = sphi 0, %s109
      %s110 = sphi 0, %s107
      %s111 = sphi 0, %s110
      %s127 = sphi 0, %s111
      %s133 = sphi 0, %s135
      %s136 = sphi 0, %s133
      %s137 = sphi 0, %s136
      %s153 = sphi 0, %s137
      %s159 = sphi 0, %s161
      %s162 = sphi 0, %s159
      %s163 = sphi 0, %s162
      %s179 = sphi 0, %s163
      %s185 = sphi 0, %s187
      %s188 = sphi 0, %s185
      %s189 = sphi 0, %s188
      %s205 = sphi 0, %s189
      %s211 = sphi 0, %s213
      %s214 = sphi 0, %s211
      %s215 = sphi 0, %s214
      %s231 = sphi 0, %s215
      %s237 = sphi 0, %s239
      %s240 = sphi 0, %s237
      %s241 = sphi 0, %s240
      %s257 = sphi 0, %s241
      %s263 = sphi 0, %s265
      %s266 = sphi 0, %s263
      %s267 = sphi 0, %s266
      %s283 = sphi 0, %s267
      %s289 = sphi 0, %s291
      %s292 = sphi 0, %s289
      %s293 = sphi 0, %s292
      %s309 = sphi 0, %s293
      %s315 = sphi 0, %s317
      %s318 = sphi 0, %s315
      %s319 = sphi 0, %s318
      %s335 = sphi 0, %s319
      %s341 = sphi 0, %s343
      %s344 = sphi 0, %s341
      %s345 = sphi 0, %s344
      %s361 = sphi 0, %s345
      %s367 = sphi 0, %s369
      %s370 = sphi 0, %s367
      %s371 = sphi 0, %s370
      %s387 = sphi 0, %s371
      %s393 = sphi 0, %s395
      %s396 = sphi 0, %s393
      %s397 = sphi 0, %s396
      %s413 = sphi 0, %s397
      %s419 = sphi 0, %s421
      %s422 = sphi 0, %s419
      %s423 = sphi 0, %s422
      %s439 = sphi 0, %s423
      %s445 = sphi 0, %s447
      %s448 = sphi 0, %s445
      %s449 = sphi 0, %s448
      %s465 = sphi 0, %s449
      %s471 = sphi 0, %s473
      %s474 = sphi 0, %s471
      %s475 = sphi 0, %s474
      %s491 = sphi 0, %s475
      %s495 = sphi 0, %s495
      %s497 = sphi 0, %s495
      %s498 = sphi 0, %s497
      %s512 = sphi 0, %s498
      %s516 = sphi 0, %s516
      %s518 = sphi 0, %s516
      %s519 = sphi 0, %s518
      %s533 = sphi 0, %s519
      %s537 = sphi 0, %s537
      %s539 = sphi 0, %s537
      %s540 = sphi 0, %s539
      %s554 = sphi 0, %s540
    $region4: #{tpu_custom_call.1} parent=1 // loop_header_branch
      %32 = sbr.rel (%p30) target = $region8
    $region5: #{tpu_custom_call.1} parent=1 // loop_body
      %s34 = ssub.s32 %s29, 1
      %s35 = ssub.s32 %s29, 2
      %s36 = sadd.s32 %s29, 1
      %s38 = sadd.s32 %s37, 1
      %p41 = scmp.eq.s32.totalorder %s29, 1
      %p42 = scmp.ne.s32.totalorder %s37, %s39
      %p43 = scmp.eq.s32.totalorder %s29, 0
      %p44 = por %p42, %p43
      %p45 = scmp.ne.s32.totalorder %s37, %s39
      %p46 = scmp.eq.s32.totalorder %s34, 1
      %p47 = por %p45, %p46
      %p48 = scmp.ne.s32.totalorder %s39, %s40
      %p49 = scmp.eq.s32.totalorder %s34, 0
      %p50 = por %p48, %p49
      %p51 = scmp.ne.s32.totalorder %s39, %s40
      %p52 = scmp.eq.s32.totalorder %s35, 1
      %p53 = por %p51, %p52
      %p55 = scmp.ne.s32.totalorder %s40, %s54
      %p56 = scmp.eq.s32.totalorder %s35, 0
      %p57 = por %p55, %p56
      %s59 = sadd.s32 %s58, 1
      %p62 = scmp.eq.s32.totalorder %s29, 1
      %p63 = scmp.ne.s32.totalorder %s58, %s60
      %p64 = scmp.eq.s32.totalorder %s29, 0
      %p65 = por %p63, %p64
      %p66 = scmp.ne.s32.totalorder %s58, %s60
      %p67 = scmp.eq.s32.totalorder %s34, 1
      %p68 = por %p66, %p67
      %p69 = scmp.ne.s32.totalorder %s60, %s61
      %p70 = scmp.eq.s32.totalorder %s34, 0
      %p71 = por %p69, %p70
      %p72 = scmp.ne.s32.totalorder %s60, %s61
      %p73 = scmp.eq.s32.totalorder %s35, 1
      %p74 = por %p72, %p73
      %p76 = scmp.ne.s32.totalorder %s61, %s75
      %p77 = scmp.eq.s32.totalorder %s35, 0
      %p78 = por %p76, %p77
      %s79 = ssub.s32 %s29, %s36
      %p80 = scmp.eq.s32.totalorder %s79, 0
      %s82 = sadd.s32 %s81, 1
      %s83 = scalar_select %p80, %s81, %s82
      %p86 = pneg %p80
      %p87 = scmp.eq.s32.totalorder %s29, 1
      %p88 = por %p86, %p87
      %p89 = scmp.ne.s32.totalorder %s81, %s84
      %p90 = scmp.eq.s32.totalorder %s29, 0
      %p91 = por %p89, %p90
      %p92 = scmp.ne.s32.totalorder %s81, %s84
      %p93 = scmp.eq.s32.totalorder %s34, 1
      %p94 = por %p92, %p93
      %p95 = scmp.ne.s32.totalorder %s84, %s85
      %p96 = scmp.eq.s32.totalorder %s34, 0
      %p97 = por %p95, %p96
      %p98 = scmp.ne.s32.totalorder %s84, %s85
      %p99 = scmp.eq.s32.totalorder %s35, 1
      %p100 = por %p98, %p99
      %p102 = scmp.ne.s32.totalorder %s85, %s101
      %p103 = scmp.eq.s32.totalorder %s35, 0
      %p104 = por %p102, %p103
      %s105 = ssub.s32 %s29, %s36
      %p106 = scmp.eq.s32.totalorder %s105, 0
      %s108 = sadd.s32 %s107, 1
      %s109 = scalar_select %p106, %s107, %s108
      %p112 = pneg %p106
      %p113 = scmp.eq.s32.totalorder %s29, 1
      %p114 = por %p112, %p113
      %p115 = scmp.ne.s32.totalorder %s107, %s110
      %p116 = scmp.eq.s32.totalorder %s29, 0
      %p117 = por %p115, %p116
      %p118 = scmp.ne.s32.totalorder %s107, %s110
      %p119 = scmp.eq.s32.totalorder %s34, 1
      %p120 = por %p118, %p119
      %p121 = scmp.ne.s32.totalorder %s110, %s111
      %p122 = scmp.eq.s32.totalorder %s34, 0
      %p123 = por %p121, %p122
      %p124 = scmp.ne.s32.totalorder %s110, %s111
      %p125 = scmp.eq.s32.totalorder %s35, 1
      %p126 = por %p124, %p125
      %p128 = scmp.ne.s32.totalorder %s111, %s127
      %p129 = scmp.eq.s32.totalorder %s35, 0
      %p130 = por %p128, %p129
      %s131 = ssub.s32 %s29, %s36
      %p132 = scmp.eq.s32.totalorder %s131, 0
      %s134 = sadd.s32 %s133, 1
      %s135 = scalar_select %p132, %s133, %s134
      %p138 = pneg %p132
      %p139 = scmp.eq.s32.totalorder %s29, 1
      %p140 = por %p138, %p139
      %p141 = scmp.ne.s32.totalorder %s133, %s136
      %p142 = scmp.eq.s32.totalorder %s29, 0
      %p143 = por %p141, %p142
      %p144 = scmp.ne.s32.totalorder %s133, %s136
      %p145 = scmp.eq.s32.totalorder %s34, 1
      %p146 = por %p144, %p145
      %p147 = scmp.ne.s32.totalorder %s136, %s137
      %p148 = scmp.eq.s32.totalorder %s34, 0
      %p149 = por %p147, %p148
      %p150 = scmp.ne.s32.totalorder %s136, %s137
      %p151 = scmp.eq.s32.totalorder %s35, 1
      %p152 = por %p150, %p151
      %p154 = scmp.ne.s32.totalorder %s137, %s153
      %p155 = scmp.eq.s32.totalorder %s35, 0
      %p156 = por %p154, %p155
      %s157 = ssub.s32 %s29, %s36
      %p158 = scmp.eq.s32.totalorder %s157, 0
      %s160 = sadd.s32 %s159, 1
      %s161 = scalar_select %p158, %s159, %s160
      %p164 = pneg %p158
      %p165 = scmp.eq.s32.totalorder %s29, 1
      %p166 = por %p164, %p165
      %p167 = scmp.ne.s32.totalorder %s159, %s162
      %p168 = scmp.eq.s32.totalorder %s29, 0
      %p169 = por %p167, %p168
      %p170 = scmp.ne.s32.totalorder %s159, %s162
      %p171 = scmp.eq.s32.totalorder %s34, 1
      %p172 = por %p170, %p171
      %p173 = scmp.ne.s32.totalorder %s162, %s163
      %p174 = scmp.eq.s32.totalorder %s34, 0
      %p175 = por %p173, %p174
      %p176 = scmp.ne.s32.totalorder %s162, %s163
      %p177 = scmp.eq.s32.totalorder %s35, 1
      %p178 = por %p176, %p177
      %p180 = scmp.ne.s32.totalorder %s163, %s179
      %p181 = scmp.eq.s32.totalorder %s35, 0
      %p182 = por %p180, %p181
      %s183 = ssub.s32 %s29, %s36
      %p184 = scmp.eq.s32.totalorder %s183, 0
      %s186 = sadd.s32 %s185, 1
      %s187 = scalar_select %p184, %s185, %s186
      %p190 = pneg %p184
      %p191 = scmp.eq.s32.totalorder %s29, 1
      %p192 = por %p190, %p191
      %p193 = scmp.ne.s32.totalorder %s185, %s188
      %p194 = scmp.eq.s32.totalorder %s29, 0
      %p195 = por %p193, %p194
      %p196 = scmp.ne.s32.totalorder %s185, %s188
      %p197 = scmp.eq.s32.totalorder %s34, 1
      %p198 = por %p196, %p197
      %p199 = scmp.ne.s32.totalorder %s188, %s189
      %p200 = scmp.eq.s32.totalorder %s34, 0
      %p201 = por %p199, %p200
      %p202 = scmp.ne.s32.totalorder %s188, %s189
      %p203 = scmp.eq.s32.totalorder %s35, 1
      %p204 = por %p202, %p203
      %p206 = scmp.ne.s32.totalorder %s189, %s205
      %p207 = scmp.eq.s32.totalorder %s35, 0
      %p208 = por %p206, %p207
      %s209 = ssub.s32 %s29, %s36
      %p210 = scmp.eq.s32.totalorder %s209, 0
      %s212 = sadd.s32 %s211, 1
      %s213 = scalar_select %p210, %s211, %s212
      %p216 = pneg %p210
      %p217 = scmp.eq.s32.totalorder %s29, 1
      %p218 = por %p216, %p217
      %p219 = scmp.ne.s32.totalorder %s211, %s214
      %p220 = scmp.eq.s32.totalorder %s29, 0
      %p221 = por %p219, %p220
      %p222 = scmp.ne.s32.totalorder %s211, %s214
      %p223 = scmp.eq.s32.totalorder %s34, 1
      %p224 = por %p222, %p223
      %p225 = scmp.ne.s32.totalorder %s214, %s215
      %p226 = scmp.eq.s32.totalorder %s34, 0
      %p227 = por %p225, %p226
      %p228 = scmp.ne.s32.totalorder %s214, %s215
      %p229 = scmp.eq.s32.totalorder %s35, 1
      %p230 = por %p228, %p229
      %p232 = scmp.ne.s32.totalorder %s215, %s231
      %p233 = scmp.eq.s32.totalorder %s35, 0
      %p234 = por %p232, %p233
      %s235 = ssub.s32 %s29, %s36
      %p236 = scmp.eq.s32.totalorder %s235, 0
      %s238 = sadd.s32 %s237, 1
      %s239 = scalar_select %p236, %s237, %s238
      %p242 = pneg %p236
      %p243 = scmp.eq.s32.totalorder %s29, 1
      %p244 = por %p242, %p243
      %p245 = scmp.ne.s32.totalorder %s237, %s240
      %p246 = scmp.eq.s32.totalorder %s29, 0
      %p247 = por %p245, %p246
      %p248 = scmp.ne.s32.totalorder %s237, %s240
      %p249 = scmp.eq.s32.totalorder %s34, 1
      %p250 = por %p248, %p249
      %p251 = scmp.ne.s32.totalorder %s240, %s241
      %p252 = scmp.eq.s32.totalorder %s34, 0
      %p253 = por %p251, %p252
      %p254 = scmp.ne.s32.totalorder %s240, %s241
      %p255 = scmp.eq.s32.totalorder %s35, 1
      %p256 = por %p254, %p255
      %p258 = scmp.ne.s32.totalorder %s241, %s257
      %p259 = scmp.eq.s32.totalorder %s35, 0
      %p260 = por %p258, %p259
      %s261 = ssub.s32 %s29, %s36
      %p262 = scmp.eq.s32.totalorder %s261, 0
      %s264 = sadd.s32 %s263, 1
      %s265 = scalar_select %p262, %s263, %s264
      %p268 = pneg %p262
      %p269 = scmp.eq.s32.totalorder %s29, 1
      %p270 = por %p268, %p269
      %p271 = scmp.ne.s32.totalorder %s263, %s266
      %p272 = scmp.eq.s32.totalorder %s29, 0
      %p273 = por %p271, %p272
      %p274 = scmp.ne.s32.totalorder %s263, %s266
      %p275 = scmp.eq.s32.totalorder %s34, 1
      %p276 = por %p274, %p275
      %p277 = scmp.ne.s32.totalorder %s266, %s267
      %p278 = scmp.eq.s32.totalorder %s34, 0
      %p279 = por %p277, %p278
      %p280 = scmp.ne.s32.totalorder %s266, %s267
      %p281 = scmp.eq.s32.totalorder %s35, 1
      %p282 = por %p280, %p281
      %p284 = scmp.ne.s32.totalorder %s267, %s283
      %p285 = scmp.eq.s32.totalorder %s35, 0
      %p286 = por %p284, %p285
      %s287 = ssub.s32 %s29, %s36
      %p288 = scmp.eq.s32.totalorder %s287, 0
      %s290 = sadd.s32 %s289, 1
      %s291 = scalar_select %p288, %s289, %s290
      %p294 = pneg %p288
      %p295 = scmp.eq.s32.totalorder %s29, 1
      %p296 = por %p294, %p295
      %p297 = scmp.ne.s32.totalorder %s289, %s292
      %p298 = scmp.eq.s32.totalorder %s29, 0
      %p299 = por %p297, %p298
      %p300 = scmp.ne.s32.totalorder %s289, %s292
      %p301 = scmp.eq.s32.totalorder %s34, 1
      %p302 = por %p300, %p301
      %p303 = scmp.ne.s32.totalorder %s292, %s293
      %p304 = scmp.eq.s32.totalorder %s34, 0
      %p305 = por %p303, %p304
      %p306 = scmp.ne.s32.totalorder %s292, %s293
      %p307 = scmp.eq.s32.totalorder %s35, 1
      %p308 = por %p306, %p307
      %p310 = scmp.ne.s32.totalorder %s293, %s309
      %p311 = scmp.eq.s32.totalorder %s35, 0
      %p312 = por %p310, %p311
      %s313 = ssub.s32 %s29, %s36
      %p314 = scmp.eq.s32.totalorder %s313, 0
      %s316 = sadd.s32 %s315, 1
      %s317 = scalar_select %p314, %s315, %s316
      %p320 = pneg %p314
      %p321 = scmp.eq.s32.totalorder %s29, 1
      %p322 = por %p320, %p321
      %p323 = scmp.ne.s32.totalorder %s315, %s318
      %p324 = scmp.eq.s32.totalorder %s29, 0
      %p325 = por %p323, %p324
      %p326 = scmp.ne.s32.totalorder %s315, %s318
      %p327 = scmp.eq.s32.totalorder %s34, 1
      %p328 = por %p326, %p327
      %p329 = scmp.ne.s32.totalorder %s318, %s319
      %p330 = scmp.eq.s32.totalorder %s34, 0
      %p331 = por %p329, %p330
      %p332 = scmp.ne.s32.totalorder %s318, %s319
      %p333 = scmp.eq.s32.totalorder %s35, 1
      %p334 = por %p332, %p333
      %p336 = scmp.ne.s32.totalorder %s319, %s335
      %p337 = scmp.eq.s32.totalorder %s35, 0
      %p338 = por %p336, %p337
      %s339 = ssub.s32 %s29, %s36
      %p340 = scmp.eq.s32.totalorder %s339, 0
      %s342 = sadd.s32 %s341, 1
      %s343 = scalar_select %p340, %s341, %s342
      %p346 = pneg %p340
      %p347 = scmp.eq.s32.totalorder %s29, 1
      %p348 = por %p346, %p347
      %p349 = scmp.ne.s32.totalorder %s341, %s344
      %p350 = scmp.eq.s32.totalorder %s29, 0
      %p351 = por %p349, %p350
      %p352 = scmp.ne.s32.totalorder %s341, %s344
      %p353 = scmp.eq.s32.totalorder %s34, 1
      %p354 = por %p352, %p353
      %p355 = scmp.ne.s32.totalorder %s344, %s345
      %p356 = scmp.eq.s32.totalorder %s34, 0
      %p357 = por %p355, %p356
      %p358 = scmp.ne.s32.totalorder %s344, %s345
      %p359 = scmp.eq.s32.totalorder %s35, 1
      %p360 = por %p358, %p359
      %p362 = scmp.ne.s32.totalorder %s345, %s361
      %p363 = scmp.eq.s32.totalorder %s35, 0
      %p364 = por %p362, %p363
      %s365 = ssub.s32 %s29, %s36
      %p366 = scmp.eq.s32.totalorder %s365, 0
      %s368 = sadd.s32 %s367, 1
      %s369 = scalar_select %p366, %s367, %s368
      %p372 = pneg %p366
      %p373 = scmp.eq.s32.totalorder %s29, 1
      %p374 = por %p372, %p373
      %p375 = scmp.ne.s32.totalorder %s367, %s370
      %p376 = scmp.eq.s32.totalorder %s29, 0
      %p377 = por %p375, %p376
      %p378 = scmp.ne.s32.totalorder %s367, %s370
      %p379 = scmp.eq.s32.totalorder %s34, 1
      %p380 = por %p378, %p379
      %p381 = scmp.ne.s32.totalorder %s370, %s371
      %p382 = scmp.eq.s32.totalorder %s34, 0
      %p383 = por %p381, %p382
      %p384 = scmp.ne.s32.totalorder %s370, %s371
      %p385 = scmp.eq.s32.totalorder %s35, 1
      %p386 = por %p384, %p385
      %p388 = scmp.ne.s32.totalorder %s371, %s387
      %p389 = scmp.eq.s32.totalorder %s35, 0
      %p390 = por %p388, %p389
      %s391 = ssub.s32 %s29, %s36
      %p392 = scmp.eq.s32.totalorder %s391, 0
      %s394 = sadd.s32 %s393, 1
      %s395 = scalar_select %p392, %s393, %s394
      %p398 = pneg %p392
      %p399 = scmp.eq.s32.totalorder %s29, 1
      %p400 = por %p398, %p399
      %p401 = scmp.ne.s32.totalorder %s393, %s396
      %p402 = scmp.eq.s32.totalorder %s29, 0
      %p403 = por %p401, %p402
      %p404 = scmp.ne.s32.totalorder %s393, %s396
      %p405 = scmp.eq.s32.totalorder %s34, 1
      %p406 = por %p404, %p405
      %p407 = scmp.ne.s32.totalorder %s396, %s397
      %p408 = scmp.eq.s32.totalorder %s34, 0
      %p409 = por %p407, %p408
      %p410 = scmp.ne.s32.totalorder %s396, %s397
      %p411 = scmp.eq.s32.totalorder %s35, 1
      %p412 = por %p410, %p411
      %p414 = scmp.ne.s32.totalorder %s397, %s413
      %p415 = scmp.eq.s32.totalorder %s35, 0
      %p416 = por %p414, %p415
      %s417 = ssub.s32 %s29, %s36
      %p418 = scmp.eq.s32.totalorder %s417, 0
      %s420 = sadd.s32 %s419, 1
      %s421 = scalar_select %p418, %s419, %s420
      %p424 = pneg %p418
      %p425 = scmp.eq.s32.totalorder %s29, 1
      %p426 = por %p424, %p425
      %p427 = scmp.ne.s32.totalorder %s419, %s422
      %p428 = scmp.eq.s32.totalorder %s29, 0
      %p429 = por %p427, %p428
      %p430 = scmp.ne.s32.totalorder %s419, %s422
      %p431 = scmp.eq.s32.totalorder %s34, 1
      %p432 = por %p430, %p431
      %p433 = scmp.ne.s32.totalorder %s422, %s423
      %p434 = scmp.eq.s32.totalorder %s34, 0
      %p435 = por %p433, %p434
      %p436 = scmp.ne.s32.totalorder %s422, %s423
      %p437 = scmp.eq.s32.totalorder %s35, 1
      %p438 = por %p436, %p437
      %p440 = scmp.ne.s32.totalorder %s423, %s439
      %p441 = scmp.eq.s32.totalorder %s35, 0
      %p442 = por %p440, %p441
      %s443 = ssub.s32 %s29, %s36
      %p444 = scmp.eq.s32.totalorder %s443, 0
      %s446 = sadd.s32 %s445, 1
      %s447 = scalar_select %p444, %s445, %s446
      %p450 = pneg %p444
      %p451 = scmp.eq.s32.totalorder %s29, 1
      %p452 = por %p450, %p451
      %p453 = scmp.ne.s32.totalorder %s445, %s448
      %p454 = scmp.eq.s32.totalorder %s29, 0
      %p455 = por %p453, %p454
      %p456 = scmp.ne.s32.totalorder %s445, %s448
      %p457 = scmp.eq.s32.totalorder %s34, 1
      %p458 = por %p456, %p457
      %p459 = scmp.ne.s32.totalorder %s448, %s449
      %p460 = scmp.eq.s32.totalorder %s34, 0
      %p461 = por %p459, %p460
      %p462 = scmp.ne.s32.totalorder %s448, %s449
      %p463 = scmp.eq.s32.totalorder %s35, 1
      %p464 = por %p462, %p463
      %p466 = scmp.ne.s32.totalorder %s449, %s465
      %p467 = scmp.eq.s32.totalorder %s35, 0
      %p468 = por %p466, %p467
      %s469 = ssub.s32 %s29, %s36
      %p470 = scmp.eq.s32.totalorder %s469, 0
      %s472 = sadd.s32 %s471, 1
      %s473 = scalar_select %p470, %s471, %s472
      %p476 = pneg %p470
      %p477 = scmp.eq.s32.totalorder %s29, 1
      %p478 = por %p476, %p477
      %p479 = scmp.ne.s32.totalorder %s471, %s474
      %p480 = scmp.eq.s32.totalorder %s29, 0
      %p481 = por %p479, %p480
      %p482 = scmp.ne.s32.totalorder %s471, %s474
      %p483 = scmp.eq.s32.totalorder %s34, 1
      %p484 = por %p482, %p483
      %p485 = scmp.ne.s32.totalorder %s474, %s475
      %p486 = scmp.eq.s32.totalorder %s34, 0
      %p487 = por %p485, %p486
      %p488 = scmp.ne.s32.totalorder %s474, %s475
      %p489 = scmp.eq.s32.totalorder %s35, 1
      %p490 = por %p488, %p489
      %p492 = scmp.ne.s32.totalorder %s475, %s491
      %p493 = scmp.eq.s32.totalorder %s35, 0
      %p494 = por %p492, %p493
      %s496 = sadd.s32 %s495, 1
      %p499 = scmp.eq.s32.totalorder %s29, 1
      %p500 = scmp.ne.s32.totalorder %s495, %s497
      %p501 = scmp.eq.s32.totalorder %s29, 0
      %p502 = por %p500, %p501
      %p503 = scmp.ne.s32.totalorder %s495, %s497
      %p504 = scmp.eq.s32.totalorder %s34, 1
      %p505 = por %p503, %p504
      %p506 = scmp.ne.s32.totalorder %s497, %s498
      %p507 = scmp.eq.s32.totalorder %s34, 0
      %p508 = por %p506, %p507
      %p509 = scmp.ne.s32.totalorder %s497, %s498
      %p510 = scmp.eq.s32.totalorder %s35, 1
      %p511 = por %p509, %p510
      %p513 = scmp.ne.s32.totalorder %s498, %s512
      %p514 = scmp.eq.s32.totalorder %s35, 0
      %p515 = por %p513, %p514
      %s517 = sadd.s32 %s516, 1
      %p520 = scmp.eq.s32.totalorder %s29, 1
      %p521 = scmp.ne.s32.totalorder %s516, %s518
      %p522 = scmp.eq.s32.totalorder %s29, 0
      %p523 = por %p521, %p522
      %p524 = scmp.ne.s32.totalorder %s516, %s518
      %p525 = scmp.eq.s32.totalorder %s34, 1
      %p526 = por %p524, %p525
      %p527 = scmp.ne.s32.totalorder %s518, %s519
      %p528 = scmp.eq.s32.totalorder %s34, 0
      %p529 = por %p527, %p528
      %p530 = scmp.ne.s32.totalorder %s518, %s519
      %p531 = scmp.eq.s32.totalorder %s35, 1
      %p532 = por %p530, %p531
      %p534 = scmp.ne.s32.totalorder %s519, %s533
      %p535 = scmp.eq.s32.totalorder %s35, 0
      %p536 = por %p534, %p535
      %s538 = sadd.s32 %s537, 1
      %p541 = scmp.eq.s32.totalorder %s29, 1
      %p542 = scmp.ne.s32.totalorder %s537, %s539
      %p543 = scmp.eq.s32.totalorder %s29, 0
      %p544 = por %p542, %p543
      %p545 = scmp.ne.s32.totalorder %s537, %s539
      %p546 = scmp.eq.s32.totalorder %s34, 1
      %p547 = por %p545, %p546
      %p548 = scmp.ne.s32.totalorder %s539, %s540
      %p549 = scmp.eq.s32.totalorder %s34, 0
      %p550 = por %p548, %p549
      %p551 = scmp.ne.s32.totalorder %s539, %s540
      %p552 = scmp.eq.s32.totalorder %s35, 1
      %p553 = por %p551, %p552
      %p555 = scmp.ne.s32.totalorder %s540, %s554
      %p556 = scmp.eq.s32.totalorder %s35, 0
      %p557 = por %p555, %p556
      %p558 = scmp.le.s32.totalorder 1, %s29
      %p559 = scmp.lt.s32.totalorder %s29, 3
      %p560 = pnand %p558, %p559
      %p561 = pneg %p560
      // Predicated region
      $region9: #{tpu_custom_call.1} parent=5 // pred_check
        _
      $region10: #{tpu_custom_call.1} parent=5 // pred_check_branch
        %563 = sbr.rel (%p560) target = $region12
      $region11: #{tpu_custom_call.1} parent=5 // pred_region
        %s564 = ssub.s32 %s29, 1
        // Predicated region
        $region13: #{tpu_custom_call.1} parent=11 // pred_check
          %p565 = pneg %p50
        $region14: #{tpu_custom_call.1} parent=11 // pred_check_branch
          %567 = sbr.rel (%p565) target = $region16
        $region15: #{tpu_custom_call.1} parent=11 // pred_region
          %s569 = ssub.s32 256, 256
          %570 = vsyncadd [#allocation3], %s569
          %s571 = sshll.u32 [#allocation2], 4
          %s572 = int_to_ptr.vmem [resolvable:$true] %s571
          %577 = dma.hbm_to_vmem [thread:$0]  %s0, 256, %s572, [#allocation3], 128, 128, 8
        $region16: #{tpu_custom_call.1} parent=11 // pred_fallthru
          _
        // Predicated region
        $region17: #{tpu_custom_call.1} parent=11 // pred_check
          %p578 = pneg %p71
        $region18: #{tpu_custom_call.1} parent=11 // pred_check_branch
          %580 = sbr.rel (%p578) target = $region20
        $region19: #{tpu_custom_call.1} parent=11 // pred_region
          %s582 = ssub.s32 32, 32
          %583 = vsyncadd [#allocation6], %s582
          %s584 = sshll.u32 [#allocation5], 4
          %s585 = int_to_ptr.vmem [resolvable:$true] %s584
          %590 = dma.hbm_to_vmem [thread:$0]  %s1, 32, %s585, [#allocation6], 16, 16, 1
        $region20: #{tpu_custom_call.1} parent=11 // pred_fallthru
          _
        // Predicated region
        $region21: #{tpu_custom_call.1} parent=11 // pred_check
          %p591 = pneg %p508
        $region22: #{tpu_custom_call.1} parent=11 // pred_check_branch
          %593 = sbr.rel (%p591) target = $region24
        $region23: #{tpu_custom_call.1} parent=11 // pred_region
          _
        $region24: #{tpu_custom_call.1} parent=11 // pred_fallthru
          _
        // Predicated region
        $region25: #{tpu_custom_call.1} parent=11 // pred_check
          %p594 = pneg %p529
        $region26: #{tpu_custom_call.1} parent=11 // pred_check_branch
          %596 = sbr.rel (%p594) target = $region28
        $region27: #{tpu_custom_call.1} parent=11 // pred_region
          _
        $region28: #{tpu_custom_call.1} parent=11 // pred_fallthru
          _
      $region12: #{tpu_custom_call.1} parent=5 // pred_fallthru
        _
      %p597 = scmp.lt.s32.totalorder %s29, 2
      // Predicated region
      $region29: #{tpu_custom_call.1} parent=5 // pred_check
        %p598 = pneg %p597
      $region30: #{tpu_custom_call.1} parent=5 // pred_check_branch
        %600 = sbr.rel (%p598) target = $region32
      $region31: #{tpu_custom_call.1} parent=5 // pred_region
        // Predicated region
        $region33: #{tpu_custom_call.1} parent=31 // pred_check
          %p601 = pneg %p91
        $region34: #{tpu_custom_call.1} parent=31 // pred_check_branch
          %603 = sbr.rel (%p601) target = $region36
        $region35: #{tpu_custom_call.1} parent=31 // pred_region
          %p604 = scmp.lt.s32.totalorder %s29, 1
          %s605 = scalar_select %p604, %s29, 1
          %s606 = smul.addr %s605, 4
          %s607 = smul.addr %s606, 4
          %s608 = scalar_lea.vmem %s2, %s607
        $region36: #{tpu_custom_call.1} parent=31 // pred_fallthru
          _
        // Predicated region
        $region37: #{tpu_custom_call.1} parent=31 // pred_check
          %p609 = pneg %p117
        $region38: #{tpu_custom_call.1} parent=31 // pred_check_branch
          %611 = sbr.rel (%p609) target = $region40
        $region39: #{tpu_custom_call.1} parent=31 // pred_region
          %p612 = scmp.lt.s32.totalorder %s29, 1
          %s613 = scalar_select %p612, %s29, 1
          %s614 = scalar_lea.vmem %s3, %s613
        $region40: #{tpu_custom_call.1} parent=31 // pred_fallthru
          _
        // Predicated region
        $region41: #{tpu_custom_call.1} parent=31 // pred_check
          %p615 = pneg %p143
        $region42: #{tpu_custom_call.1} parent=31 // pred_check_branch
          %617 = sbr.rel (%p615) target = $region44
        $region43: #{tpu_custom_call.1} parent=31 // pred_region
          %p618 = scmp.lt.s32.totalorder %s29, 1
          %s619 = scalar_select %p618, %s29, 1
          %s620 = smul.addr %s619, 4
          %s621 = smul.addr %s620, 4
          %s622 = scalar_lea.vmem %s4, %s621
        $region44: #{tpu_custom_call.1} parent=31 // pred_fallthru
          _
        // Predicated region
        $region45: #{tpu_custom_call.1} parent=31 // pred_check
          %p623 = pneg %p169
        $region46: #{tpu_custom_call.1} parent=31 // pred_check_branch
          %625 = sbr.rel (%p623) target = $region48
        $region47: #{tpu_custom_call.1} parent=31 // pred_region
          %p626 = scmp.lt.s32.totalorder %s29, 1
          %s627 = scalar_select %p626, %s29, 1
          %s628 = scalar_lea.vmem %s5, %s627
        $region48: #{tpu_custom_call.1} parent=31 // pred_fallthru
          _
        // Predicated region
        $region49: #{tpu_custom_call.1} parent=31 // pred_check
          %p629 = pneg %p195
        $region50: #{tpu_custom_call.1} parent=31 // pred_check_branch
          %631 = sbr.rel (%p629) target = $region52
        $region51: #{tpu_custom_call.1} parent=31 // pred_region
          %p632 = scmp.lt.s32.totalorder %s29, 1
          %s633 = scalar_select %p632, %s29, 1
          %s634 = smul.addr %s633, 4
          %s635 = smul.addr %s634, 4
          %s636 = scalar_lea.vmem %s6, %s635
        $region52: #{tpu_custom_call.1} parent=31 // pred_fallthru
          _
        // Predicated region
        $region53: #{tpu_custom_call.1} parent=31 // pred_check
          %p637 = pneg %p221
        $region54: #{tpu_custom_call.1} parent=31 // pred_check_branch
          %639 = sbr.rel (%p637) target = $region56
        $region55: #{tpu_custom_call.1} parent=31 // pred_region
          %p640 = scmp.lt.s32.totalorder %s29, 1
          %s641 = scalar_select %p640, %s29, 1
          %s642 = scalar_lea.vmem %s7, %s641
        $region56: #{tpu_custom_call.1} parent=31 // pred_fallthru
          _
        // Predicated region
        $region57: #{tpu_custom_call.1} parent=31 // pred_check
          %p643 = pneg %p247
        $region58: #{tpu_custom_call.1} parent=31 // pred_check_branch
          %645 = sbr.rel (%p643) target = $region60
        $region59: #{tpu_custom_call.1} parent=31 // pred_region
          %s646 = sand.u32 %s29, 1
          %s647 = scalar_lea.sflag [#allocation3], %s646
          %s648 = sand.u32 %s237, 1
          %s649 = smul.addr %s648, 16
          %s650 = scalar_lea.vmem [#allocation7], %s649
          %s652 = ssub.s32 256, 256
          %653 = vsyncadd %s647, %s652
          %s654 = smul.addr %s29, 4
          %s655 = smul.addr %s654, 64
          %s656 = scalar_lea.hbm %s8, %s655
          %s657 = sshll.u32 %s650, 4
          %s658 = int_to_ptr.vmem [resolvable:$true] %s657
          %663 = dma.hbm_to_vmem [thread:$0]  %s656, 256, %s658, %s647, 64, 64, 4
        $region60: #{tpu_custom_call.1} parent=31 // pred_fallthru
          _
        // Predicated region
        $region61: #{tpu_custom_call.1} parent=31 // pred_check
          %p664 = pneg %p273
        $region62: #{tpu_custom_call.1} parent=31 // pred_check_branch
          %666 = sbr.rel (%p664) target = $region64
        $region63: #{tpu_custom_call.1} parent=31 // pred_region
          %p667 = scmp.lt.s32.totalorder %s29, 1
          %s668 = scalar_select %p667, %s29, 1
          %s669 = scalar_lea.vmem %s9, %s668
        $region64: #{tpu_custom_call.1} parent=31 // pred_fallthru
          _
        // Predicated region
        $region65: #{tpu_custom_call.1} parent=31 // pred_check
          %p670 = pneg %p299
        $region66: #{tpu_custom_call.1} parent=31 // pred_check_branch
          %672 = sbr.rel (%p670) target = $region68
        $region67: #{tpu_custom_call.1} parent=31 // pred_region
          %s673 = sand.u32 %s29, 1
          %s674 = scalar_lea.sflag [#allocation3], %s673
          %s675 = sand.u32 %s289, 1
          %s676 = smul.addr %s675, 16
          %s677 = scalar_lea.vmem [#allocation8], %s676
          %s679 = ssub.s32 256, 256
          %680 = vsyncadd %s674, %s679
          %s681 = smul.addr %s29, 4
          %s682 = smul.addr %s681, 64
          %s683 = scalar_lea.hbm %s10, %s682
          %s684 = sshll.u32 %s677, 4
          %s685 = int_to_ptr.vmem [resolvable:$true] %s684
          %690 = dma.hbm_to_vmem [thread:$0]  %s683, 256, %s685, %s674, 64, 64, 4
        $region68: #{tpu_custom_call.1} parent=31 // pred_fallthru
          _
        // Predicated region
        $region69: #{tpu_custom_call.1} parent=31 // pred_check
          %p691 = pneg %p325
        $region70: #{tpu_custom_call.1} parent=31 // pred_check_branch
          %693 = sbr.rel (%p691) target = $region72
        $region71: #{tpu_custom_call.1} parent=31 // pred_region
          %p694 = scmp.lt.s32.totalorder %s29, 1
          %s695 = scalar_select %p694, %s29, 1
          %s696 = scalar_lea.vmem %s11, %s695
        $region72: #{tpu_custom_call.1} parent=31 // pred_fallthru
          _
        // Predicated region
        $region73: #{tpu_custom_call.1} parent=31 // pred_check
          %p697 = pneg %p351
        $region74: #{tpu_custom_call.1} parent=31 // pred_check_branch
          %699 = sbr.rel (%p697) target = $region76
        $region75: #{tpu_custom_call.1} parent=31 // pred_region
          %p700 = scmp.lt.s32.totalorder %s29, 1
          %s701 = scalar_select %p700, %s29, 1
          %s702 = smul.addr %s701, 8
          %s703 = smul.addr %s702, 4
          %s704 = scalar_lea.vmem %s12, %s703
        $region76: #{tpu_custom_call.1} parent=31 // pred_fallthru
          _
        // Predicated region
        $region77: #{tpu_custom_call.1} parent=31 // pred_check
          %p705 = pneg %p377
        $region78: #{tpu_custom_call.1} parent=31 // pred_check_branch
          %707 = sbr.rel (%p705) target = $region80
        $region79: #{tpu_custom_call.1} parent=31 // pred_region
          %p708 = scmp.lt.s32.totalorder %s29, 1
          %s709 = scalar_select %p708, %s29, 1
          %s710 = scalar_lea.vmem %s13, %s709
        $region80: #{tpu_custom_call.1} parent=31 // pred_fallthru
          _
        // Predicated region
        $region81: #{tpu_custom_call.1} parent=31 // pred_check
          %p711 = pneg %p403
        $region82: #{tpu_custom_call.1} parent=31 // pred_check_branch
          %713 = sbr.rel (%p711) target = $region84
        $region83: #{tpu_custom_call.1} parent=31 // pred_region
          %p714 = scmp.lt.s32.totalorder %s29, 1
          %s715 = scalar_select %p714, %s29, 1
          %s716 = scalar_lea.vmem %s14, %s715
        $region84: #{tpu_custom_call.1} parent=31 // pred_fallthru
          _
        // Predicated region
        $region85: #{tpu_custom_call.1} parent=31 // pred_check
          %p717 = pneg %p429
        $region86: #{tpu_custom_call.1} parent=31 // pred_check_branch
          %719 = sbr.rel (%p717) target = $region88
        $region87: #{tpu_custom_call.1} parent=31 // pred_region
          %p720 = scmp.lt.s32.totalorder %s29, 1
          %s721 = scalar_select %p720, %s29, 1
          %s722 = scalar_lea.vmem %s15, %s721
        $region88: #{tpu_custom_call.1} parent=31 // pred_fallthru
          _
        // Predicated region
        $region89: #{tpu_custom_call.1} parent=31 // pred_check
          %p723 = pneg %p455
        $region90: #{tpu_custom_call.1} parent=31 // pred_check_branch
          %725 = sbr.rel (%p723) target = $region92
        $region91: #{tpu_custom_call.1} parent=31 // pred_region
          %p726 = scmp.lt.s32.totalorder %s29, 1
          %s727 = scalar_select %p726, %s29, 1
          %s728 = scalar_lea.vmem %s16, %s727
        $region92: #{tpu_custom_call.1} parent=31 // pred_fallthru
          _
        // Predicated region
        $region93: #{tpu_custom_call.1} parent=31 // pred_check
          %p729 = pneg %p481
        $region94: #{tpu_custom_call.1} parent=31 // pred_check_branch
          %731 = sbr.rel (%p729) target = $region96
        $region95: #{tpu_custom_call.1} parent=31 // pred_region
          %p732 = scmp.lt.s32.totalorder %s29, 1
          %s733 = scalar_select %p732, %s29, 1
          %s734 = scalar_lea.vmem %s17, %s733
        $region96: #{tpu_custom_call.1} parent=31 // pred_fallthru
          _
      $region32: #{tpu_custom_call.1} parent=5 // pred_fallthru
        _
      %p735 = scmp.le.s32.totalorder 1, %s29
      %p736 = scmp.lt.s32.totalorder %s29, 3
      %p737 = pnand %p735, %p736
      %p738 = pneg %p737
      // Predicated region
      $region97: #{tpu_custom_call.1} parent=5 // pred_check
        _
      $region98: #{tpu_custom_call.1} parent=5 // pred_check_branch
        %740 = sbr.rel (%p737) target = $region100
      $region99: #{tpu_custom_call.1} parent=5 // pred_region
        %s741 = ssub.s32 %s29, 1
        // Predicated region
        $region101: #{tpu_custom_call.1} parent=99 // pred_check
          %p742 = pneg %p50
        $region102: #{tpu_custom_call.1} parent=99 // pred_check_branch
          %744 = sbr.rel (%p742) target = $region104
        $region103: #{tpu_custom_call.1} parent=99 // pred_region
          %745 = dma.done [#allocation3], 256
        $region104: #{tpu_custom_call.1} parent=99 // pred_fallthru
          _
        // Predicated region
        $region105: #{tpu_custom_call.1} parent=99 // pred_check
          %p746 = pneg %p71
        $region106: #{tpu_custom_call.1} parent=99 // pred_check_branch
          %748 = sbr.rel (%p746) target = $region108
        $region107: #{tpu_custom_call.1} parent=99 // pred_region
          %749 = dma.done [#allocation6], 32
        $region108: #{tpu_custom_call.1} parent=99 // pred_fallthru
          _
        %s750 = sand.u32 %s34, 1
        %s751 = scalar_lea.sflag [#allocation3], %s750
        %s752 = sand.u32 %s240, 1
        %s753 = smul.addr %s752, 16
        %s754 = scalar_lea.vmem [#allocation7], %s753
        // Predicated region
        $region109: #{tpu_custom_call.1} parent=99 // pred_check
          %p755 = pneg %p253
        $region110: #{tpu_custom_call.1} parent=99 // pred_check_branch
          %757 = sbr.rel (%p755) target = $region112
        $region111: #{tpu_custom_call.1} parent=99 // pred_region
          %758 = dma.done %s751, 256
        $region112: #{tpu_custom_call.1} parent=99 // pred_fallthru
          _
        %s759 = sand.u32 %s34, 1
        %s760 = scalar_lea.sflag [#allocation3], %s759
        %s761 = sand.u32 %s292, 1
        %s762 = smul.addr %s761, 16
        %s763 = scalar_lea.vmem [#allocation8], %s762
        // Predicated region
        $region113: #{tpu_custom_call.1} parent=99 // pred_check
          %p764 = pneg %p305
        $region114: #{tpu_custom_call.1} parent=99 // pred_check_branch
          %766 = sbr.rel (%p764) target = $region116
        $region115: #{tpu_custom_call.1} parent=99 // pred_region
          %767 = dma.done %s760, 256
        $region116: #{tpu_custom_call.1} parent=99 // pred_fallthru
          _
        %p768 = pneg %p50
        %p769 = pneg %p47
        %p770 = pneg %p71
        %p771 = pneg %p68
        %p772 = scmp.lt.s32.totalorder %s34, 1
        %s773 = scalar_select %p772, %s34, 1
        %s774 = smul.addr %s773, 4
        %s775 = smul.addr %s774, 4
        %s776 = scalar_lea.vmem %s2, %s775
        %p777 = pneg %p97
        %p778 = pneg %p94
        %p779 = scmp.lt.s32.totalorder %s34, 1
        %s780 = scalar_select %p779, %s34, 1
        %s781 = scalar_lea.vmem %s3, %s780
        %p782 = pneg %p123
        %p783 = pneg %p120
        %p784 = scmp.lt.s32.totalorder %s34, 1
        %s785 = scalar_select %p784, %s34, 1
        %s786 = smul.addr %s785, 4
        %s787 = smul.addr %s786, 4
        %s788 = scalar_lea.vmem %s4, %s787
        %p789 = pneg %p149
        %p790 = pneg %p146
        %p791 = scmp.lt.s32.totalorder %s34, 1
        %s792 = scalar_select %p791, %s34, 1
        %s793 = scalar_lea.vmem %s5, %s792
        %p794 = pneg %p175
        %p795 = pneg %p172
        %p796 = scmp.lt.s32.totalorder %s34, 1
        %s797 = scalar_select %p796, %s34, 1
        %s798 = smul.addr %s797, 4
        %s799 = smul.addr %s798, 4
        %s800 = scalar_lea.vmem %s6, %s799
        %p801 = pneg %p201
        %p802 = pneg %p198
        %p803 = scmp.lt.s32.totalorder %s34, 1
        %s804 = scalar_select %p803, %s34, 1
        %s805 = scalar_lea.vmem %s7, %s804
        %p806 = pneg %p227
        %p807 = pneg %p224
        %s808 = sand.u32 %s34, 1
        %s809 = scalar_lea.sflag [#allocation3], %s808
        %s810 = sand.u32 %s240, 1
        %s811 = smul.addr %s810, 16
        %s812 = scalar_lea.vmem [#allocation7], %s811
        %p813 = pneg %p253
        %p814 = pneg %p250
        %p815 = scmp.lt.s32.totalorder %s34, 1
        %s816 = scalar_select %p815, %s34, 1
        %s817 = scalar_lea.vmem %s9, %s816
        %p818 = pneg %p279
        %p819 = pneg %p276
        %s820 = sand.u32 %s34, 1
        %s821 = scalar_lea.sflag [#allocation3], %s820
        %s822 = sand.u32 %s292, 1
        %s823 = smul.addr %s822, 16
        %s824 = scalar_lea.vmem [#allocation8], %s823
        %p825 = pneg %p305
        %p826 = pneg %p302
        %p827 = scmp.lt.s32.totalorder %s34, 1
        %s828 = scalar_select %p827, %s34, 1
        %s829 = scalar_lea.vmem %s11, %s828
        %p830 = pneg %p331
        %p831 = pneg %p328
        %p832 = scmp.lt.s32.totalorder %s34, 1
        %s833 = scalar_select %p832, %s34, 1
        %s834 = smul.addr %s833, 8
        %s835 = smul.addr %s834, 4
        %s836 = scalar_lea.vmem %s12, %s835
        %p837 = pneg %p357
        %p838 = pneg %p354
        %p839 = scmp.lt.s32.totalorder %s34, 1
        %s840 = scalar_select %p839, %s34, 1
        %s841 = scalar_lea.vmem %s13, %s840
        %p842 = pneg %p383
        %p843 = pneg %p380
        %p844 = scmp.lt.s32.totalorder %s34, 1
        %s845 = scalar_select %p844, %s34, 1
        %s846 = scalar_lea.vmem %s14, %s845
        %p847 = pneg %p409
        %p848 = pneg %p406
        %p849 = scmp.lt.s32.totalorder %s34, 1
        %s850 = scalar_select %p849, %s34, 1
        %s851 = scalar_lea.vmem %s15, %s850
        %p852 = pneg %p435
        %p853 = pneg %p432
        %p854 = scmp.lt.s32.totalorder %s34, 1
        %s855 = scalar_select %p854, %s34, 1
        %s856 = scalar_lea.vmem %s16, %s855
        %p857 = pneg %p461
        %p858 = pneg %p458
        %p859 = scmp.lt.s32.totalorder %s34, 1
        %s860 = scalar_select %p859, %s34, 1
        %s861 = scalar_lea.vmem %s17, %s860
        %p862 = pneg %p487
        %p863 = pneg %p484
        %p864 = pneg %p508
        %p865 = pneg %p505
        %p866 = pneg %p529
        %p867 = pneg %p526
        %p868 = pneg %p550
        %p869 = pneg %p547
        %p870 = scmp.lt.s32.totalorder %s34, 1
        %s871 = scalar_select %p870, %s34, 1
        %s872 = smul.addr %s871, 4
        %s873 = smul.addr %s872, 4
        %s874 = scalar_lea.vmem %s2, %s873
        %p875 = scmp.lt.s32.totalorder %s34, 1
        %s876 = scalar_select %p875, %s34, 1
        %s877 = scalar_lea.vmem %s3, %s876
        %p878 = scmp.lt.s32.totalorder %s34, 1
        %s879 = scalar_select %p878, %s34, 1
        %s880 = smul.addr %s879, 4
        %s881 = smul.addr %s880, 4
        %s882 = scalar_lea.vmem %s4, %s881
        %p883 = scmp.lt.s32.totalorder %s34, 1
        %s884 = scalar_select %p883, %s34, 1
        %s885 = scalar_lea.vmem %s5, %s884
        %p886 = scmp.lt.s32.totalorder %s34, 1
        %s887 = scalar_select %p886, %s34, 1
        %s888 = smul.addr %s887, 4
        %s889 = smul.addr %s888, 4
        %s890 = scalar_lea.vmem %s6, %s889
        %p891 = scmp.lt.s32.totalorder %s34, 1
        %s892 = scalar_select %p891, %s34, 1
        %s893 = scalar_lea.vmem %s7, %s892
        %p894 = scmp.lt.s32.totalorder %s34, 1
        %s895 = scalar_select %p894, %s34, 1
        %s896 = scalar_lea.vmem %s9, %s895
        %p897 = scmp.lt.s32.totalorder %s34, 1
        %s898 = scalar_select %p897, %s34, 1
        %s899 = scalar_lea.vmem %s11, %s898
        %p900 = scmp.lt.s32.totalorder %s34, 1
        %s901 = scalar_select %p900, %s34, 1
        %s902 = smul.addr %s901, 8
        %s903 = smul.addr %s902, 4
        %s904 = scalar_lea.vmem %s12, %s903
        %p905 = scmp.lt.s32.totalorder %s34, 1
        %s906 = scalar_select %p905, %s34, 1
        %s907 = scalar_lea.vmem %s13, %s906
        %p908 = scmp.lt.s32.totalorder %s34, 1
        %s909 = scalar_select %p908, %s34, 1
        %s910 = scalar_lea.vmem %s14, %s909
        %p911 = scmp.lt.s32.totalorder %s34, 1
        %s912 = scalar_select %p911, %s34, 1
        %s913 = scalar_lea.vmem %s15, %s912
        %p914 = scmp.lt.s32.totalorder %s34, 1
        %s915 = scalar_select %p914, %s34, 1
        %s916 = scalar_lea.vmem %s16, %s915
        %p917 = scmp.lt.s32.totalorder %s34, 1
        %s918 = scalar_select %p917, %s34, 1
        %s919 = scalar_lea.vmem %s17, %s918
        %p921 = scmp.eq.s32.totalorder %s34, 0
        // Predicated region
        $region117: #{tpu_custom_call.1} parent=99 // pred_check
          %p922 = pneg %p921
        $region118: #{tpu_custom_call.1} parent=99 // pred_check_branch
          %924 = sbr.rel (%p922) target = $region120
        $region119: #{tpu_custom_call.1} parent=99 // pred_region
          %v925 = vld [vmem:[#allocation2] sm:$0xff]
          %v926 = vld [vmem:[#allocation2 + $0x8] sm:$0xff]
          %vm927 = vcmask 261120
          %928 = vst.msk [vmem:[#allocation9] sm:$0xff] %vm927, %v925
          %929 = vst.msk [vmem:[#allocation9 + $0x8] sm:$0xff] %vm927, %v926
        $region120: #{tpu_custom_call.1} parent=99 // pred_fallthru
          _
        %v930 = vld [vmem:[#allocation9] sm:$0xff]
        %v931 = vld [vmem:[#allocation9 + $0x8] sm:$0xff]
        %v932 = vld [vmem:[#allocation5] sm:$0x1]
        %v933 = vld [vmem:[#allocation5 + $0x1] sm:$0x1]
        %vm934 = vcmp.gt.f32.partialorder %v932, 0.0
        %vm935 = vcmp.gt.f32.partialorder %v933, 0.0
        %v936 = vld [vmem:[%s910] sm:$0x1]
        %v937 = vld [vmem:[%s913] sm:$0x1]
        %vm938 = vcmask 261120
        %v939 = vsel %vm938, %v930, 0.0
        %940 = vadd.xlane.f32.xlu0 %v939
        %v941 = vpop.xlane.xlu0 %940
        %v942 = vsel %vm938, %v931, 0.0
        %943 = vadd.xlane.f32.xlu0 %v942
        %v944 = vpop.xlane.xlu0 %943
        %v945 = vrcp.pop 32.0
        %v946 = vmul.f32 %v941, %v945
        %v947 = vmul.f32 %v944, %v945
        %v948 = vsub.f32 %v930, %v946
        %v949 = vsub.f32 %v931, %v947
        %v950 = vmul.f32 %v948, %v948
        %v951 = vmul.f32 %v949, %v949
        %v952 = vsel %vm938, %v950, 0.0
        %953 = vadd.xlane.f32.xlu0 %v952
        %v954 = vpop.xlane.xlu0 %953
        %v955 = vsel %vm938, %v951, 0.0
        %956 = vadd.xlane.f32.xlu0 %v955
        %v957 = vpop.xlane.xlu0 %956
        %v958 = vrcp.pop 31.0
        %v959 = vmul.f32 %v954, %v958
        %v960 = vmul.f32 %v957, %v958
        %v961 = vrsqrt.pop %v959
        %v962 = vmul.f32 %v959, %v961
        %vm963 = vcmp.eq.f32.partialorder %v959, inf
        %v964 = vsel %vm963, %v959, %v962
        %vm965 = vcmp.eq.f32.partialorder %v959, 0.0
        %v966 = vand.u32 %v959, 2147483648
        %v967 = vsel %vm965, %v966, %v964
        %v968 = vrsqrt.pop %v960
        %v969 = vmul.f32 %v960, %v968
        %vm970 = vcmp.eq.f32.partialorder %v960, inf
        %v971 = vsel %vm970, %v960, %v969
        %vm972 = vcmp.eq.f32.partialorder %v960, 0.0
        %v973 = vand.u32 %v960, 2147483648
        %v974 = vsel %vm972, %v973, %v971
        %v976 = vlaneseq
        %v977 = vshrl.u32 %v976, 7
        %v978 = vsub.s32 0, %v977
        %v979 = vrot.slane %v936, %v978
        %v981 = vmul.f32 %v979, %v948
        %v982 = vmul.f32 %v979, %v949
        %v983 = vadd.f32 %v967, 1e-06
        %v984 = vadd.f32 %v974, 1e-06
        %v985 = vrcp.pop %v983
        %v986 = vmul.f32 %v981, %v985
        %v987 = vrcp.pop %v984
        %v988 = vmul.f32 %v982, %v987
        %v990 = vlaneseq
        %v991 = vshrl.u32 %v990, 7
        %v992 = vsub.s32 0, %v991
        %v993 = vrot.slane %v937, %v992
        %v995 = vadd.f32 %v986, %v993
        %v996 = vadd.f32 %v988, %v993
        %v997 = vpack.c.bf16 %v996, %v995
        %v998 = vld [vmem:[%s874] sm:$0xf]
        %v999 = vld [vmem:[%s874 + $0x4] sm:$0xf]
        %v1000 = vld [vmem:[%s874 + $0x8] sm:$0xf]
        %v1001 = vld [vmem:[%s874 + $0xc] sm:$0xf]
        %v1002 = vld [vmem:[%s877] sm:$0x1]
        %v1004 = vlaneseq
        %v1005 = vshrl.u32 %v1004, 7
        %v1006 = vsub.s32 0, %v1005
        %v1007 = vrot.slane %v1002, %v1006
        %v1013 = vunpack.c.l.b16 %v998
        %v1014 = vunpack.c.l.b16 %v999
        %v1015 = vunpack.c.l.b16 %v1000
        %v1016 = vunpack.c.l.b16 %v1001
        %v1017 = vpack.c.b16 %v1014, %v1013
        %v1018 = vpack.c.b16 %v1016, %v1015
        %v1022 = vsel %vm938, %v997, 0
        %1024 = vmatprep.subr.bf16.mxu0 0
        %1025 = vmatpush1.bf16.msra.mxu0 0
        %1026 = vmatprep.subr.bf16.mxu0 0
        %1027 = vmatpush1.bf16.msra.mxu0 0
        %1028 = vmatprep.subr.bf16.mxu0 0
        %1029 = vmatpush1.bf16.msra.mxu0 0
        %1030 = vmatprep.subr.bf16.mxu0 0
        %1031 = vmatpush1.bf16.msra.mxu0 0
        %1032 = vmatprep.subr.bf16.mxu0 0
        %1033 = vmatpush1.bf16.msra.mxu0 0
        %1034 = vmatprep.subr.bf16.mxu0 0
        %1035 = vmatpush1.bf16.msra.mxu0 0
        %1036 = vmatprep.subr.bf16.mxu0 0
        %1037 = vmatpush1.bf16.msra.mxu0 %v1018
        %1038 = vmatprep.subr.bf16.mxu0 0
        %1039 = vmatpush1.bf16.msra.mxu0 %v1017
        %1040 = vmatprep.subr.bf16.mxu0 0
        %1041 = vmatpush2.bf16.msra.mxu0 0
        %1042 = vmatprep.subr.bf16.mxu0 0
        %1043 = vmatpush2.bf16.msra.mxu0 0
        %1044 = vmatprep.subr.bf16.mxu0 0
        %1045 = vmatpush2.bf16.msra.mxu0 0
        %1046 = vmatprep.subr.bf16.mxu0 0
        %1047 = vmatpush2.bf16.msra.mxu0 0
        %1048 = vmatprep.subr.bf16.mxu0 0
        %1049 = vmatpush2.bf16.msra.mxu0 0
        %1050 = vmatprep.subr.bf16.mxu0 0
        %1051 = vmatpush2.bf16.msra.mxu0 0
        %1052 = vmatprep.subr.bf16.mxu0 0
        %1053 = vmatpush2.bf16.msra.mxu0 0
        %1054 = vmatprep.subr.bf16.mxu0 0
        %1055 = vmatpush2.bf16.msra.mxu0 0
        %1056 = vmatprep.mubr.bf16.mxu0 0
        %1057 = vmatmul.mubr.bf16.gmra.mxu0 %v1022
        %v1058 = vpop.f32.mrf.mxu0
        %v1059 = vadd.f32 %v1007, %v1058
        %v1060 = vpop.f32.mrf.mxu0
        %v1061 = vpop.f32.mrf.mxu0
        %v1062 = vadd.f32 %v1007, %v1061
        %v1063 = vpop.f32.mrf.mxu0
        %1064 = vdwg.mxu0
        %v1065 = vld [vmem:[%s882] sm:$0xf]
        %v1066 = vld [vmem:[%s882 + $0x4] sm:$0xf]
        %v1067 = vld [vmem:[%s882 + $0x8] sm:$0xf]
        %v1068 = vld [vmem:[%s882 + $0xc] sm:$0xf]
        %v1069 = vld [vmem:[%s885] sm:$0x1]
        %v1071 = vlaneseq
        %v1072 = vshrl.u32 %v1071, 7
        %v1073 = vsub.s32 0, %v1072
        %v1074 = vrot.slane %v1069, %v1073
        %v1080 = vunpack.c.l.b16 %v1065
        %v1081 = vunpack.c.l.b16 %v1066
        %v1082 = vunpack.c.l.b16 %v1067
        %v1083 = vunpack.c.l.b16 %v1068
        %v1084 = vpack.c.b16 %v1081, %v1080
        %v1085 = vpack.c.b16 %v1083, %v1082
        %1088 = vmatprep.subr.bf16.mxu0 0
        %1089 = vmatpush1.bf16.msra.mxu0 0
        %1090 = vmatprep.subr.bf16.mxu0 0
        %1091 = vmatpush1.bf16.msra.mxu0 0
        %1092 = vmatprep.subr.bf16.mxu0 0
        %1093 = vmatpush1.bf16.msra.mxu0 0
        %1094 = vmatprep.subr.bf16.mxu0 0
        %1095 = vmatpush1.bf16.msra.mxu0 0
        %1096 = vmatprep.subr.bf16.mxu0 0
        %1097 = vmatpush1.bf16.msra.mxu0 0
        %1098 = vmatprep.subr.bf16.mxu0 0
        %1099 = vmatpush1.bf16.msra.mxu0 0
        %1100 = vmatprep.subr.bf16.mxu0 0
        %1101 = vmatpush1.bf16.msra.mxu0 %v1085
        %1102 = vmatprep.subr.bf16.mxu0 0
        %1103 = vmatpush1.bf16.msra.mxu0 %v1084
        %1104 = vmatprep.subr.bf16.mxu0 0
        %1105 = vmatpush2.bf16.msra.mxu0 0
        %1106 = vmatprep.subr.bf16.mxu0 0
        %1107 = vmatpush2.bf16.msra.mxu0 0
        %1108 = vmatprep.subr.bf16.mxu0 0
        %1109 = vmatpush2.bf16.msra.mxu0 0
        %1110 = vmatprep.subr.bf16.mxu0 0
        %1111 = vmatpush2.bf16.msra.mxu0 0
        %1112 = vmatprep.subr.bf16.mxu0 0
        %1113 = vmatpush2.bf16.msra.mxu0 0
        %1114 = vmatprep.subr.bf16.mxu0 0
        %1115 = vmatpush2.bf16.msra.mxu0 0
        %1116 = vmatprep.subr.bf16.mxu0 0
        %1117 = vmatpush2.bf16.msra.mxu0 0
        %1118 = vmatprep.subr.bf16.mxu0 0
        %1119 = vmatpush2.bf16.msra.mxu0 0
        %1120 = vmatprep.mubr.bf16.mxu0 0
        %1121 = vmatmul.mubr.bf16.gmra.mxu0 %v1022
        %v1122 = vpop.f32.mrf.mxu0
        %v1123 = vadd.f32 %v1074, %v1122
        %v1124 = vpop.f32.mrf.mxu0
        %v1125 = vpop.f32.mrf.mxu0
        %v1126 = vadd.f32 %v1074, %v1125
        %v1127 = vpop.f32.mrf.mxu0
        %1128 = vdwg.mxu0
        %v1129 = vld [vmem:[%s890] sm:$0xf]
        %v1130 = vld [vmem:[%s890 + $0x4] sm:$0xf]
        %v1131 = vld [vmem:[%s890 + $0x8] sm:$0xf]
        %v1132 = vld [vmem:[%s890 + $0xc] sm:$0xf]
        %v1133 = vld [vmem:[%s893] sm:$0x1]
        %v1135 = vlaneseq
        %v1136 = vshrl.u32 %v1135, 7
        %v1137 = vsub.s32 0, %v1136
        %v1138 = vrot.slane %v1133, %v1137
        %v1144 = vunpack.c.l.b16 %v1129
        %v1145 = vunpack.c.l.b16 %v1130
        %v1146 = vunpack.c.l.b16 %v1131
        %v1147 = vunpack.c.l.b16 %v1132
        %v1148 = vpack.c.b16 %v1145, %v1144
        %v1149 = vpack.c.b16 %v1147, %v1146
        %1152 = vmatprep.subr.bf16.mxu0 0
        %1153 = vmatpush1.bf16.msra.mxu0 0
        %1154 = vmatprep.subr.bf16.mxu0 0
        %1155 = vmatpush1.bf16.msra.mxu0 0
        %1156 = vmatprep.subr.bf16.mxu0 0
        %1157 = vmatpush1.bf16.msra.mxu0 0
        %1158 = vmatprep.subr.bf16.mxu0 0
        %1159 = vmatpush1.bf16.msra.mxu0 0
        %1160 = vmatprep.subr.bf16.mxu0 0
        %1161 = vmatpush1.bf16.msra.mxu0 0
        %1162 = vmatprep.subr.bf16.mxu0 0
        %1163 = vmatpush1.bf16.msra.mxu0 0
        %1164 = vmatprep.subr.bf16.mxu0 0
        %1165 = vmatpush1.bf16.msra.mxu0 %v1149
        %1166 = vmatprep.subr.bf16.mxu0 0
        %1167 = vmatpush1.bf16.msra.mxu0 %v1148
        %1168 = vmatprep.subr.bf16.mxu0 0
        %1169 = vmatpush2.bf16.msra.mxu0 0
        %1170 = vmatprep.subr.bf16.mxu0 0
        %1171 = vmatpush2.bf16.msra.mxu0 0
        %1172 = vmatprep.subr.bf16.mxu0 0
        %1173 = vmatpush2.bf16.msra.mxu0 0
        %1174 = vmatprep.subr.bf16.mxu0 0
        %1175 = vmatpush2.bf16.msra.mxu0 0
        %1176 = vmatprep.subr.bf16.mxu0 0
        %1177 = vmatpush2.bf16.msra.mxu0 0
        %1178 = vmatprep.subr.bf16.mxu0 0
        %1179 = vmatpush2.bf16.msra.mxu0 0
        %1180 = vmatprep.subr.bf16.mxu0 0
        %1181 = vmatpush2.bf16.msra.mxu0 0
        %1182 = vmatprep.subr.bf16.mxu0 0
        %1183 = vmatpush2.bf16.msra.mxu0 0
        %1184 = vmatprep.mubr.bf16.mxu0 0
        %1185 = vmatmul.mubr.bf16.gmra.mxu0 %v1022
        %v1186 = vpop.f32.mrf.mxu0
        %v1187 = vadd.f32 %v1138, %v1186
        %v1188 = vpop.f32.mrf.mxu0
        %v1189 = vpop.f32.mrf.mxu0
        %v1190 = vadd.f32 %v1138, %v1189
        %v1191 = vpop.f32.mrf.mxu0
        %1192 = vdwg.mxu0
        %v1193 = vld [vmem:[%s754] sm:$0xf]
        %v1194 = vld [vmem:[%s754 + $0x4] sm:$0xf]
        %v1195 = vld [vmem:[%s754 + $0x8] sm:$0xf]
        %v1196 = vld [vmem:[%s754 + $0xc] sm:$0xf]
        %v1197 = vpack.c.bf16 %v1059, %v1059
        %v1198 = vpack.c.bf16 %v1062, %v1062
        %v1199 = vpack.c.bf16 %v1123, %v1123
        %v1200 = vpack.c.bf16 %v1126, %v1126
        %v1201 = vpack.c.bf16 %v1187, %v1187
        %v1202 = vpack.c.bf16 %v1190, %v1190
        %vm1203 = vcmask 64512
        %v1205 = vsel %vm1203, %v1197, 0
        %v1208 = vsel %vm1203, %v1199, 0
        %1210 = vmatprep.subr.bf16.mxu0 0
        %1211 = vmatpush1.bf16.xpose.msra.mxu0 0
        %1212 = vmatprep.subr.bf16.mxu0 0
        %1213 = vmatpush1.bf16.xpose.msra.mxu0 0
        %1214 = vmatprep.subr.bf16.mxu0 0
        %1215 = vmatpush1.bf16.xpose.msra.mxu0 0
        %1216 = vmatprep.subr.bf16.mxu0 0
        %1217 = vmatpush1.bf16.xpose.msra.mxu0 0
        %1218 = vmatprep.subr.bf16.mxu0 0
        %1219 = vmatpush1.bf16.xpose.msra.mxu0 0
        %1220 = vmatprep.subr.bf16.mxu0 0
        %1221 = vmatpush1.bf16.xpose.msra.mxu0 0
        %1222 = vmatprep.subr.bf16.mxu0 0
        %1223 = vmatpush1.bf16.xpose.msra.mxu0 0
        %1224 = vmatprep.subr.bf16.mxu0 0
        %1225 = vmatpush1.bf16.xpose.msra.mxu0 %v1208
        %1226 = vmatprep.subr.bf16.mxu0 0
        %1227 = vmatpush2.bf16.xpose.msra.mxu0 0
        %1228 = vmatprep.subr.bf16.mxu0 0
        %1229 = vmatpush2.bf16.xpose.msra.mxu0 0
        %1230 = vmatprep.subr.bf16.mxu0 0
        %1231 = vmatpush2.bf16.xpose.msra.mxu0 0
        %1232 = vmatprep.subr.bf16.mxu0 0
        %1233 = vmatpush2.bf16.xpose.msra.mxu0 0
        %1234 = vmatprep.subr.bf16.mxu0 0
        %1235 = vmatpush2.bf16.xpose.msra.mxu0 0
        %1236 = vmatprep.subr.bf16.mxu0 0
        %1237 = vmatpush2.bf16.xpose.msra.mxu0 0
        %1238 = vmatprep.subr.bf16.mxu0 0
        %1239 = vmatpush2.bf16.xpose.msra.mxu0 0
        %1240 = vmatprep.subr.bf16.mxu0 0
        %1241 = vmatpush2.bf16.xpose.msra.mxu0 0
        %1242 = vmatprep.mubr.bf16.mxu0 0
        %1243 = vmatmul.mubr.bf16.gmra.mxu0 %v1205
        %v1244 = vpop.f32.mrf.mxu0
        %v1245 = vadd.f32 0.0, %v1244
        %v1246 = vpop.f32.mrf.mxu0
        %v1247 = vpop.f32.mrf.mxu0
        %v1248 = vpop.f32.mrf.mxu0
        %1249 = vdwg.mxu0
        %v1251 = vsel %vm1203, %v1198, 0
        %v1254 = vsel %vm1203, %v1200, 0
        %1256 = vmatprep.subr.bf16.mxu0 0
        %1257 = vmatpush1.bf16.xpose.msra.mxu0 0
        %1258 = vmatprep.subr.bf16.mxu0 0
        %1259 = vmatpush1.bf16.xpose.msra.mxu0 0
        %1260 = vmatprep.subr.bf16.mxu0 0
        %1261 = vmatpush1.bf16.xpose.msra.mxu0 0
        %1262 = vmatprep.subr.bf16.mxu0 0
        %1263 = vmatpush1.bf16.xpose.msra.mxu0 0
        %1264 = vmatprep.subr.bf16.mxu0 0
        %1265 = vmatpush1.bf16.xpose.msra.mxu0 0
        %1266 = vmatprep.subr.bf16.mxu0 0
        %1267 = vmatpush1.bf16.xpose.msra.mxu0 0
        %1268 = vmatprep.subr.bf16.mxu0 0
        %1269 = vmatpush1.bf16.xpose.msra.mxu0 0
        %1270 = vmatprep.subr.bf16.mxu0 0
        %1271 = vmatpush1.bf16.xpose.msra.mxu0 %v1254
        %1272 = vmatprep.subr.bf16.mxu0 0
        %1273 = vmatpush2.bf16.xpose.msra.mxu0 0
        %1274 = vmatprep.subr.bf16.mxu0 0
        %1275 = vmatpush2.bf16.xpose.msra.mxu0 0
        %1276 = vmatprep.subr.bf16.mxu0 0
        %1277 = vmatpush2.bf16.xpose.msra.mxu0 0
        %1278 = vmatprep.subr.bf16.mxu0 0
        %1279 = vmatpush2.bf16.xpose.msra.mxu0 0
        %1280 = vmatprep.subr.bf16.mxu0 0
        %1281 = vmatpush2.bf16.xpose.msra.mxu0 0
        %1282 = vmatprep.subr.bf16.mxu0 0
        %1283 = vmatpush2.bf16.xpose.msra.mxu0 0
        %1284 = vmatprep.subr.bf16.mxu0 0
        %1285 = vmatpush2.bf16.xpose.msra.mxu0 0
        %1286 = vmatprep.subr.bf16.mxu0 0
        %1287 = vmatpush2.bf16.xpose.msra.mxu0 0
        %1288 = vmatprep.mubr.bf16.mxu0 0
        %1289 = vmatmul.mubr.bf16.gmra.mxu0 %v1251
        %v1290 = vpop.f32.mrf.mxu0
        %v1291 = vadd.f32 0.0, %v1290
        %v1292 = vpop.f32.mrf.mxu0
        %v1293 = vpop.f32.mrf.mxu0
        %v1294 = vpop.f32.mrf.mxu0
        %1295 = vdwg.mxu0
        %v1296 = vmul.f32 %v1245, 0.35355338
        %v1297 = vmul.f32 %v1291, 0.35355338
        %v1298 = vsel %vm934, 1, 0
        %v1299 = vsel %vm935, 1, 0
        %v1300 = vlaneseq
        %v1301 = vshrl.u32 %v1300, 7
        %v1302 = vsub.s32 0, %v1301
        %v1303 = vrot.slane %v1298, %v1302
        %v1304 = vlaneseq
        %v1305 = vshrl.u32 %v1304, 7
        %v1306 = vsub.s32 0, %v1305
        %v1307 = vrot.slane %v1299, %v1306
        %vm1308 = vcmp.eq.s32.totalorder %v1303, 1
        %vm1309 = vcmp.eq.s32.totalorder %v1307, 1
        %v1310 = vsel %vm1308, %v1296, -1e+09
        %v1311 = vsel %vm1309, %v1297, -1e+09
        %v1312 = vsel %vm1203, %v1310, -inf
        %1313 = vmax.xlane.f32.xlu0 %v1312
        %v1314 = vpop.xlane.xlu0 %1313
        %v1315 = vsel %vm1203, %v1311, -inf
        %1316 = vmax.xlane.f32.xlu0 %v1315
        %v1317 = vpop.xlane.xlu0 %1316
        %v1318 = vsub.f32 %v1310, %v1314
        %v1319 = vsub.f32 %v1311, %v1317
        %v1320 = vmul.f32 %v1318, 1.442695
        %v1321 = vpow.pop %v1320
        %v1322 = vmul.f32 %v1319, 1.442695
        %v1323 = vpow.pop %v1322
        %v1324 = vsel %vm1203, %v1321, 0.0
        %1325 = vadd.xlane.f32.xlu0 %v1324
        %v1326 = vpop.xlane.xlu0 %1325
        %v1327 = vsel %vm1203, %v1323, 0.0
        %1328 = vadd.xlane.f32.xlu0 %v1327
        %v1329 = vpop.xlane.xlu0 %1328
        %v1330 = vrcp.pop %v1326
        %v1331 = vrcp.pop %v1329
        %v1332 = vmul.f32 %v1321, %v1330
        %v1333 = vmul.f32 %v1323, %v1331
        %v1334 = vpack.c.bf16 %v1332, %v1332
        %v1335 = vpack.c.bf16 %v1333, %v1333
        %v1337 = vsel %vm1203, %v1334, 0
        %vm1339 = vcmask 1043456
        %v1341 = vsel %vm1339, %v1201, 0
        %1343 = vmatprep.subr.bf16.mxu0 0
        %1344 = vmatpush1.bf16.msra.mxu0 0
        %1345 = vmatprep.subr.bf16.mxu0 0
        %1346 = vmatpush1.bf16.msra.mxu0 0
        %1347 = vmatprep.subr.bf16.mxu0 0
        %1348 = vmatpush1.bf16.msra.mxu0 0
        %1349 = vmatprep.subr.bf16.mxu0 0
        %1350 = vmatpush1.bf16.msra.mxu0 0
        %1351 = vmatprep.subr.bf16.mxu0 0
        %1352 = vmatpush1.bf16.msra.mxu0 0
        %1353 = vmatprep.subr.bf16.mxu0 0
        %1354 = vmatpush1.bf16.msra.mxu0 0
        %1355 = vmatprep.subr.bf16.mxu0 0
        %1356 = vmatpush1.bf16.msra.mxu0 0
        %1357 = vmatprep.subr.bf16.mxu0 0
        %1358 = vmatpush1.bf16.msra.mxu0 %v1341
        %1359 = vmatprep.subr.bf16.mxu0 0
        %1360 = vmatpush2.bf16.msra.mxu0 0
        %1361 = vmatprep.subr.bf16.mxu0 0
        %1362 = vmatpush2.bf16.msra.mxu0 0
        %1363 = vmatprep.subr.bf16.mxu0 0
        %1364 = vmatpush2.bf16.msra.mxu0 0
        %1365 = vmatprep.subr.bf16.mxu0 0
        %1366 = vmatpush2.bf16.msra.mxu0 0
        %1367 = vmatprep.subr.bf16.mxu0 0
        %1368 = vmatpush2.bf16.msra.mxu0 0
        %1369 = vmatprep.subr.bf16.mxu0 0
        %1370 = vmatpush2.bf16.msra.mxu0 0
        %1371 = vmatprep.subr.bf16.mxu0 0
        %1372 = vmatpush2.bf16.msra.mxu0 0
        %1373 = vmatprep.subr.bf16.mxu0 0
        %1374 = vmatpush2.bf16.msra.mxu0 0
        %1375 = vmatprep.mubr.bf16.mxu0 0
        %1376 = vmatmul.mubr.bf16.gmra.mxu0 %v1337
        %v1377 = vpop.f32.mrf.mxu0
        %v1378 = vadd.f32 0.0, %v1377
        %v1379 = vpop.f32.mrf.mxu0
        %v1380 = vpop.f32.mrf.mxu0
        %v1381 = vpop.f32.mrf.mxu0
        %1382 = vdwg.mxu0
        %v1384 = vsel %vm1203, %v1335, 0
        %v1387 = vsel %vm1339, %v1202, 0
        %1389 = vmatprep.subr.bf16.mxu0 0
        %1390 = vmatpush1.bf16.msra.mxu0 0
        %1391 = vmatprep.subr.bf16.mxu0 0
        %1392 = vmatpush1.bf16.msra.mxu0 0
        %1393 = vmatprep.subr.bf16.mxu0 0
        %1394 = vmatpush1.bf16.msra.mxu0 0
        %1395 = vmatprep.subr.bf16.mxu0 0
        %1396 = vmatpush1.bf16.msra.mxu0 0
        %1397 = vmatprep.subr.bf16.mxu0 0
        %1398 = vmatpush1.bf16.msra.mxu0 0
        %1399 = vmatprep.subr.bf16.mxu0 0
        %1400 = vmatpush1.bf16.msra.mxu0 0
        %1401 = vmatprep.subr.bf16.mxu0 0
        %1402 = vmatpush1.bf16.msra.mxu0 0
        %1403 = vmatprep.subr.bf16.mxu0 0
        %1404 = vmatpush1.bf16.msra.mxu0 %v1387
        %1405 = vmatprep.subr.bf16.mxu0 0
        %1406 = vmatpush2.bf16.msra.mxu0 0
        %1407 = vmatprep.subr.bf16.mxu0 0
        %1408 = vmatpush2.bf16.msra.mxu0 0
        %1409 = vmatprep.subr.bf16.mxu0 0
        %1410 = vmatpush2.bf16.msra.mxu0 0
        %1411 = vmatprep.subr.bf16.mxu0 0
        %1412 = vmatpush2.bf16.msra.mxu0 0
        %1413 = vmatprep.subr.bf16.mxu0 0
        %1414 = vmatpush2.bf16.msra.mxu0 0
        %1415 = vmatprep.subr.bf16.mxu0 0
        %1416 = vmatpush2.bf16.msra.mxu0 0
        %1417 = vmatprep.subr.bf16.mxu0 0
        %1418 = vmatpush2.bf16.msra.mxu0 0
        %1419 = vmatprep.subr.bf16.mxu0 0
        %1420 = vmatpush2.bf16.msra.mxu0 0
        %1421 = vmatprep.mubr.bf16.mxu0 0
        %1422 = vmatmul.mubr.bf16.gmra.mxu0 %v1384
        %v1423 = vpop.f32.mrf.mxu0
        %v1424 = vadd.f32 0.0, %v1423
        %v1425 = vpop.f32.mrf.mxu0
        %v1426 = vpop.f32.mrf.mxu0
        %v1427 = vpop.f32.mrf.mxu0
        %1428 = vdwg.mxu0
        %v1429 = vpack.c.bf16 %v1424, %v1378
        %1431 = vrot.lane.b32.xlu0 %v1197, 120
        %v1432 = vpop.permute.xlu0 %1431
        %1434 = vrot.lane.b32.xlu0 %v1199, 120
        %v1435 = vpop.permute.xlu0 %1434
        %v1437 = vsel %vm1203, %v1432, 0
        %v1440 = vsel %vm1203, %v1435, 0
        %1442 = vmatprep.subr.bf16.mxu0 0
        %1443 = vmatpush1.bf16.xpose.msra.mxu0 0
        %1444 = vmatprep.subr.bf16.mxu0 0
        %1445 = vmatpush1.bf16.xpose.msra.mxu0 0
        %1446 = vmatprep.subr.bf16.mxu0 0
        %1447 = vmatpush1.bf16.xpose.msra.mxu0 0
        %1448 = vmatprep.subr.bf16.mxu0 0
        %1449 = vmatpush1.bf16.xpose.msra.mxu0 0
        %1450 = vmatprep.subr.bf16.mxu0 0
        %1451 = vmatpush1.bf16.xpose.msra.mxu0 0
        %1452 = vmatprep.subr.bf16.mxu0 0
        %1453 = vmatpush1.bf16.xpose.msra.mxu0 0
        %1454 = vmatprep.subr.bf16.mxu0 0
        %1455 = vmatpush1.bf16.xpose.msra.mxu0 0
        %1456 = vmatprep.subr.bf16.mxu0 0
        %1457 = vmatpush1.bf16.xpose.msra.mxu0 %v1440
        %1458 = vmatprep.subr.bf16.mxu0 0
        %1459 = vmatpush2.bf16.xpose.msra.mxu0 0
        %1460 = vmatprep.subr.bf16.mxu0 0
        %1461 = vmatpush2.bf16.xpose.msra.mxu0 0
        %1462 = vmatprep.subr.bf16.mxu0 0
        %1463 = vmatpush2.bf16.xpose.msra.mxu0 0
        %1464 = vmatprep.subr.bf16.mxu0 0
        %1465 = vmatpush2.bf16.xpose.msra.mxu0 0
        %1466 = vmatprep.subr.bf16.mxu0 0
        %1467 = vmatpush2.bf16.xpose.msra.mxu0 0
        %1468 = vmatprep.subr.bf16.mxu0 0
        %1469 = vmatpush2.bf16.xpose.msra.mxu0 0
        %1470 = vmatprep.subr.bf16.mxu0 0
        %1471 = vmatpush2.bf16.xpose.msra.mxu0 0
        %1472 = vmatprep.subr.bf16.mxu0 0
        %1473 = vmatpush2.bf16.xpose.msra.mxu0 0
        %1474 = vmatprep.mubr.bf16.mxu0 0
        %1475 = vmatmul.mubr.bf16.gmra.mxu0 %v1437
        %v1476 = vpop.f32.mrf.mxu0
        %v1477 = vadd.f32 0.0, %v1476
        %v1478 = vpop.f32.mrf.mxu0
        %v1479 = vpop.f32.mrf.mxu0
        %v1480 = vpop.f32.mrf.mxu0
        %1481 = vdwg.mxu0
        %1483 = vrot.lane.b32.xlu0 %v1198, 120
        %v1484 = vpop.permute.xlu0 %1483
        %1486 = vrot.lane.b32.xlu0 %v1200, 120
        %v1487 = vpop.permute.xlu0 %1486
        %v1489 = vsel %vm1203, %v1484, 0
        %v1492 = vsel %vm1203, %v1487, 0
        %1494 = vmatprep.subr.bf16.mxu0 0
        %1495 = vmatpush1.bf16.xpose.msra.mxu0 0
        %1496 = vmatprep.subr.bf16.mxu0 0
        %1497 = vmatpush1.bf16.xpose.msra.mxu0 0
        %1498 = vmatprep.subr.bf16.mxu0 0
        %1499 = vmatpush1.bf16.xpose.msra.mxu0 0
        %1500 = vmatprep.subr.bf16.mxu0 0
        %1501 = vmatpush1.bf16.xpose.msra.mxu0 0
        %1502 = vmatprep.subr.bf16.mxu0 0
        %1503 = vmatpush1.bf16.xpose.msra.mxu0 0
        %1504 = vmatprep.subr.bf16.mxu0 0
        %1505 = vmatpush1.bf16.xpose.msra.mxu0 0
        %1506 = vmatprep.subr.bf16.mxu0 0
        %1507 = vmatpush1.bf16.xpose.msra.mxu0 0
        %1508 = vmatprep.subr.bf16.mxu0 0
        %1509 = vmatpush1.bf16.xpose.msra.mxu0 %v1492
        %1510 = vmatprep.subr.bf16.mxu0 0
        %1511 = vmatpush2.bf16.xpose.msra.mxu0 0
        %1512 = vmatprep.subr.bf16.mxu0 0
        %1513 = vmatpush2.bf16.xpose.msra.mxu0 0
        %1514 = vmatprep.subr.bf16.mxu0 0
        %1515 = vmatpush2.bf16.xpose.msra.mxu0 0
        %1516 = vmatprep.subr.bf16.mxu0 0
        %1517 = vmatpush2.bf16.xpose.msra.mxu0 0
        %1518 = vmatprep.subr.bf16.mxu0 0
        %1519 = vmatpush2.bf16.xpose.msra.mxu0 0
        %1520 = vmatprep.subr.bf16.mxu0 0
        %1521 = vmatpush2.bf16.xpose.msra.mxu0 0
        %1522 = vmatprep.subr.bf16.mxu0 0
        %1523 = vmatpush2.bf16.xpose.msra.mxu0 0
        %1524 = vmatprep.subr.bf16.mxu0 0
        %1525 = vmatpush2.bf16.xpose.msra.mxu0 0
        %1526 = vmatprep.mubr.bf16.mxu0 0
        %1527 = vmatmul.mubr.bf16.gmra.mxu0 %v1489
        %v1528 = vpop.f32.mrf.mxu0
        %v1529 = vadd.f32 0.0, %v1528
        %v1530 = vpop.f32.mrf.mxu0
        %v1531 = vpop.f32.mrf.mxu0
        %v1532 = vpop.f32.mrf.mxu0
        %1533 = vdwg.mxu0
        %v1534 = vmul.f32 %v1477, 0.35355338
        %v1535 = vmul.f32 %v1529, 0.35355338
        %v1536 = vsel %vm1308, %v1534, -1e+09
        %v1537 = vsel %vm1309, %v1535, -1e+09
        %v1538 = vsel %vm1203, %v1536, -inf
        %1539 = vmax.xlane.f32.xlu0 %v1538
        %v1540 = vpop.xlane.xlu0 %1539
        %v1541 = vsel %vm1203, %v1537, -inf
        %1542 = vmax.xlane.f32.xlu0 %v1541
        %v1543 = vpop.xlane.xlu0 %1542
        %v1544 = vsub.f32 %v1536, %v1540
        %v1545 = vsub.f32 %v1537, %v1543
        %v1546 = vmul.f32 %v1544, 1.442695
        %v1547 = vpow.pop %v1546
        %v1548 = vmul.f32 %v1545, 1.442695
        %v1549 = vpow.pop %v1548
        %v1550 = vsel %vm1203, %v1547, 0.0
        %1551 = vadd.xlane.f32.xlu0 %v1550
        %v1552 = vpop.xlane.xlu0 %1551
        %v1553 = vsel %vm1203, %v1549, 0.0
        %1554 = vadd.xlane.f32.xlu0 %v1553
        %v1555 = vpop.xlane.xlu0 %1554
        %v1556 = vrcp.pop %v1552
        %v1557 = vrcp.pop %v1555
        %v1558 = vmul.f32 %v1547, %v1556
        %v1559 = vmul.f32 %v1549, %v1557
        %v1560 = vpack.c.bf16 %v1558, %v1558
        %v1561 = vpack.c.bf16 %v1559, %v1559
        %1563 = vrot.lane.b32.xlu0 %v1201, 120
        %v1564 = vpop.permute.xlu0 %1563
        %v1566 = vsel %vm1203, %v1560, 0
        %v1569 = vsel %vm1339, %v1564, 0
        %1571 = vmatprep.subr.bf16.mxu0 0
        %1572 = vmatpush1.bf16.msra.mxu0 0
        %1573 = vmatprep.subr.bf16.mxu0 0
        %1574 = vmatpush1.bf16.msra.mxu0 0
        %1575 = vmatprep.subr.bf16.mxu0 0
        %1576 = vmatpush1.bf16.msra.mxu0 0
        %1577 = vmatprep.subr.bf16.mxu0 0
        %1578 = vmatpush1.bf16.msra.mxu0 0
        %1579 = vmatprep.subr.bf16.mxu0 0
        %1580 = vmatpush1.bf16.msra.mxu0 0
        %1581 = vmatprep.subr.bf16.mxu0 0
        %1582 = vmatpush1.bf16.msra.mxu0 0
        %1583 = vmatprep.subr.bf16.mxu0 0
        %1584 = vmatpush1.bf16.msra.mxu0 0
        %1585 = vmatprep.subr.bf16.mxu0 0
        %1586 = vmatpush1.bf16.msra.mxu0 %v1569
        %1587 = vmatprep.subr.bf16.mxu0 0
        %1588 = vmatpush2.bf16.msra.mxu0 0
        %1589 = vmatprep.subr.bf16.mxu0 0
        %1590 = vmatpush2.bf16.msra.mxu0 0
        %1591 = vmatprep.subr.bf16.mxu0 0
        %1592 = vmatpush2.bf16.msra.mxu0 0
        %1593 = vmatprep.subr.bf16.mxu0 0
        %1594 = vmatpush2.bf16.msra.mxu0 0
        %1595 = vmatprep.subr.bf16.mxu0 0
        %1596 = vmatpush2.bf16.msra.mxu0 0
        %1597 = vmatprep.subr.bf16.mxu0 0
        %1598 = vmatpush2.bf16.msra.mxu0 0
        %1599 = vmatprep.subr.bf16.mxu0 0
        %1600 = vmatpush2.bf16.msra.mxu0 0
        %1601 = vmatprep.subr.bf16.mxu0 0
        %1602 = vmatpush2.bf16.msra.mxu0 0
        %1603 = vmatprep.mubr.bf16.mxu0 0
        %1604 = vmatmul.mubr.bf16.gmra.mxu0 %v1566
        %v1605 = vpop.f32.mrf.mxu0
        %v1606 = vadd.f32 0.0, %v1605
        %v1607 = vpop.f32.mrf.mxu0
        %v1608 = vpop.f32.mrf.mxu0
        %v1609 = vpop.f32.mrf.mxu0
        %1610 = vdwg.mxu0
        %1612 = vrot.lane.b32.xlu0 %v1202, 120
        %v1613 = vpop.permute.xlu0 %1612
        %v1615 = vsel %vm1203, %v1561, 0
        %v1618 = vsel %vm1339, %v1613, 0
        %1620 = vmatprep.subr.bf16.mxu0 0
        %1621 = vmatpush1.bf16.msra.mxu0 0
        %1622 = vmatprep.subr.bf16.mxu0 0
        %1623 = vmatpush1.bf16.msra.mxu0 0
        %1624 = vmatprep.subr.bf16.mxu0 0
        %1625 = vmatpush1.bf16.msra.mxu0 0
        %1626 = vmatprep.subr.bf16.mxu0 0
        %1627 = vmatpush1.bf16.msra.mxu0 0
        %1628 = vmatprep.subr.bf16.mxu0 0
        %1629 = vmatpush1.bf16.msra.mxu0 0
        %1630 = vmatprep.subr.bf16.mxu0 0
        %1631 = vmatpush1.bf16.msra.mxu0 0
        %1632 = vmatprep.subr.bf16.mxu0 0
        %1633 = vmatpush1.bf16.msra.mxu0 0
        %1634 = vmatprep.subr.bf16.mxu0 0
        %1635 = vmatpush1.bf16.msra.mxu0 %v1618
        %1636 = vmatprep.subr.bf16.mxu0 0
        %1637 = vmatpush2.bf16.msra.mxu0 0
        %1638 = vmatprep.subr.bf16.mxu0 0
        %1639 = vmatpush2.bf16.msra.mxu0 0
        %1640 = vmatprep.subr.bf16.mxu0 0
        %1641 = vmatpush2.bf16.msra.mxu0 0
        %1642 = vmatprep.subr.bf16.mxu0 0
        %1643 = vmatpush2.bf16.msra.mxu0 0
        %1644 = vmatprep.subr.bf16.mxu0 0
        %1645 = vmatpush2.bf16.msra.mxu0 0
        %1646 = vmatprep.subr.bf16.mxu0 0
        %1647 = vmatpush2.bf16.msra.mxu0 0
        %1648 = vmatprep.subr.bf16.mxu0 0
        %1649 = vmatpush2.bf16.msra.mxu0 0
        %1650 = vmatprep.subr.bf16.mxu0 0
        %1651 = vmatpush2.bf16.msra.mxu0 0
        %1652 = vmatprep.mubr.bf16.mxu0 0
        %1653 = vmatmul.mubr.bf16.gmra.mxu0 %v1615
        %v1654 = vpop.f32.mrf.mxu0
        %v1655 = vadd.f32 0.0, %v1654
        %v1656 = vpop.f32.mrf.mxu0
        %v1657 = vpop.f32.mrf.mxu0
        %v1658 = vpop.f32.mrf.mxu0
        %1659 = vdwg.mxu0
        %v1660 = vpack.c.bf16 %v1655, %v1606
        %v1662 = vsel %vm1203, %v1660, 0
        %v1665 = vsel %vm1339, %v1194, 0
        %1667 = vmatprep.subr.bf16.mxu0 0
        %1668 = vmatpush1.bf16.msra.mxu0 0
        %1669 = vmatprep.subr.bf16.mxu0 0
        %1670 = vmatpush1.bf16.msra.mxu0 0
        %1671 = vmatprep.subr.bf16.mxu0 0
        %1672 = vmatpush1.bf16.msra.mxu0 0
        %1673 = vmatprep.subr.bf16.mxu0 0
        %1674 = vmatpush1.bf16.msra.mxu0 0
        %1675 = vmatprep.subr.bf16.mxu0 0
        %1676 = vmatpush1.bf16.msra.mxu0 0
        %1677 = vmatprep.subr.bf16.mxu0 0
        %1678 = vmatpush1.bf16.msra.mxu0 0
        %1679 = vmatprep.subr.bf16.mxu0 0
        %1680 = vmatpush1.bf16.msra.mxu0 0
        %1681 = vmatprep.subr.bf16.mxu0 0
        %1682 = vmatpush1.bf16.msra.mxu0 %v1665
        %1683 = vmatprep.subr.bf16.mxu0 0
        %1684 = vmatpush2.bf16.msra.mxu0 0
        %1685 = vmatprep.subr.bf16.mxu0 0
        %1686 = vmatpush2.bf16.msra.mxu0 0
        %1687 = vmatprep.subr.bf16.mxu0 0
        %1688 = vmatpush2.bf16.msra.mxu0 0
        %1689 = vmatprep.subr.bf16.mxu0 0
        %1690 = vmatpush2.bf16.msra.mxu0 0
        %1691 = vmatprep.subr.bf16.mxu0 0
        %1692 = vmatpush2.bf16.msra.mxu0 0
        %1693 = vmatprep.subr.bf16.mxu0 0
        %1694 = vmatpush2.bf16.msra.mxu0 0
        %1695 = vmatprep.subr.bf16.mxu0 0
        %1696 = vmatpush2.bf16.msra.mxu0 0
        %1697 = vmatprep.subr.bf16.mxu0 0
        %1698 = vmatpush2.bf16.msra.mxu0 0
        %1699 = vmatprep.mubr.bf16.mxu0 0
        %1700 = vmatmul.mubr.bf16.gmra.mxu0 %v1662
        %v1701 = vpop.f32.mrf.mxu0
        %v1702 = vadd.f32 0.0, %v1701
        %v1703 = vpop.f32.mrf.mxu0
        %v1704 = vpop.f32.mrf.mxu0
        %v1705 = vadd.f32 0.0, %v1704
        %v1706 = vpop.f32.mrf.mxu0
        %1707 = vdwg.mxu0
        %v1709 = vsel %vm1203, %v1429, 0
        %v1712 = vsel %vm1339, %v1193, 0
        %1714 = vmatprep.subr.bf16.mxu0 0
        %1715 = vmatpush1.bf16.msra.mxu0 0
        %1716 = vmatprep.subr.bf16.mxu0 0
        %1717 = vmatpush1.bf16.msra.mxu0 0
        %1718 = vmatprep.subr.bf16.mxu0 0
        %1719 = vmatpush1.bf16.msra.mxu0 0
        %1720 = vmatprep.subr.bf16.mxu0 0
        %1721 = vmatpush1.bf16.msra.mxu0 0
        %1722 = vmatprep.subr.bf16.mxu0 0
        %1723 = vmatpush1.bf16.msra.mxu0 0
        %1724 = vmatprep.subr.bf16.mxu0 0
        %1725 = vmatpush1.bf16.msra.mxu0 0
        %1726 = vmatprep.subr.bf16.mxu0 0
        %1727 = vmatpush1.bf16.msra.mxu0 0
        %1728 = vmatprep.subr.bf16.mxu0 0
        %1729 = vmatpush1.bf16.msra.mxu0 %v1712
        %1730 = vmatprep.subr.bf16.mxu0 0
        %1731 = vmatpush2.bf16.msra.mxu0 0
        %1732 = vmatprep.subr.bf16.mxu0 0
        %1733 = vmatpush2.bf16.msra.mxu0 0
        %1734 = vmatprep.subr.bf16.mxu0 0
        %1735 = vmatpush2.bf16.msra.mxu0 0
        %1736 = vmatprep.subr.bf16.mxu0 0
        %1737 = vmatpush2.bf16.msra.mxu0 0
        %1738 = vmatprep.subr.bf16.mxu0 0
        %1739 = vmatpush2.bf16.msra.mxu0 0
        %1740 = vmatprep.subr.bf16.mxu0 0
        %1741 = vmatpush2.bf16.msra.mxu0 0
        %1742 = vmatprep.subr.bf16.mxu0 0
        %1743 = vmatpush2.bf16.msra.mxu0 0
        %1744 = vmatprep.subr.bf16.mxu0 0
        %1745 = vmatpush2.bf16.msra.mxu0 0
        %1746 = vmatprep.mubr.bf16.mxu0 0
        %1747 = vmatmul.mubr.bf16.gmra.mxu0 %v1709
        %v1748 = vpop.f32.mrf.mxu0
        %v1749 = vadd.f32 %v1702, %v1748
        %v1750 = vpop.f32.mrf.mxu0
        %v1751 = vpop.f32.mrf.mxu0
        %v1752 = vadd.f32 %v1705, %v1751
        %v1753 = vpop.f32.mrf.mxu0
        %1754 = vdwg.mxu0
        %1755 = vrot.lane.b32.xlu0 %v1197, 112
        %v1756 = vpop.permute.xlu0 %1755
        %1757 = vrot.lane.b32.xlu0 %v1199, 112
        %v1758 = vpop.permute.xlu0 %1757
        %v1760 = vsel %vm1203, %v1756, 0
        %v1763 = vsel %vm1203, %v1758, 0
        %1765 = vmatprep.subr.bf16.mxu0 0
        %1766 = vmatpush1.bf16.xpose.msra.mxu0 0
        %1767 = vmatprep.subr.bf16.mxu0 0
        %1768 = vmatpush1.bf16.xpose.msra.mxu0 0
        %1769 = vmatprep.subr.bf16.mxu0 0
        %1770 = vmatpush1.bf16.xpose.msra.mxu0 0
        %1771 = vmatprep.subr.bf16.mxu0 0
        %1772 = vmatpush1.bf16.xpose.msra.mxu0 0
        %1773 = vmatprep.subr.bf16.mxu0 0
        %1774 = vmatpush1.bf16.xpose.msra.mxu0 0
        %1775 = vmatprep.subr.bf16.mxu0 0
        %1776 = vmatpush1.bf16.xpose.msra.mxu0 0
        %1777 = vmatprep.subr.bf16.mxu0 0
        %1778 = vmatpush1.bf16.xpose.msra.mxu0 0
        %1779 = vmatprep.subr.bf16.mxu0 0
        %1780 = vmatpush1.bf16.xpose.msra.mxu0 %v1763
        %1781 = vmatprep.subr.bf16.mxu0 0
        %1782 = vmatpush2.bf16.xpose.msra.mxu0 0
        %1783 = vmatprep.subr.bf16.mxu0 0
        %1784 = vmatpush2.bf16.xpose.msra.mxu0 0
        %1785 = vmatprep.subr.bf16.mxu0 0
        %1786 = vmatpush2.bf16.xpose.msra.mxu0 0
        %1787 = vmatprep.subr.bf16.mxu0 0
        %1788 = vmatpush2.bf16.xpose.msra.mxu0 0
        %1789 = vmatprep.subr.bf16.mxu0 0
        %1790 = vmatpush2.bf16.xpose.msra.mxu0 0
        %1791 = vmatprep.subr.bf16.mxu0 0
        %1792 = vmatpush2.bf16.xpose.msra.mxu0 0
        %1793 = vmatprep.subr.bf16.mxu0 0
        %1794 = vmatpush2.bf16.xpose.msra.mxu0 0
        %1795 = vmatprep.subr.bf16.mxu0 0
        %1796 = vmatpush2.bf16.xpose.msra.mxu0 0
        %1797 = vmatprep.mubr.bf16.mxu0 0
        %1798 = vmatmul.mubr.bf16.gmra.mxu0 %v1760
        %v1799 = vpop.f32.mrf.mxu0
        %v1800 = vadd.f32 0.0, %v1799
        %v1801 = vpop.f32.mrf.mxu0
        %v1802 = vpop.f32.mrf.mxu0
        %v1803 = vpop.f32.mrf.mxu0
        %1804 = vdwg.mxu0
        %1805 = vrot.lane.b32.xlu0 %v1198, 112
        %v1806 = vpop.permute.xlu0 %1805
        %1807 = vrot.lane.b32.xlu0 %v1200, 112
        %v1808 = vpop.permute.xlu0 %1807
        %v1810 = vsel %vm1203, %v1806, 0
        %v1813 = vsel %vm1203, %v1808, 0
        %1815 = vmatprep.subr.bf16.mxu0 0
        %1816 = vmatpush1.bf16.xpose.msra.mxu0 0
        %1817 = vmatprep.subr.bf16.mxu0 0
        %1818 = vmatpush1.bf16.xpose.msra.mxu0 0
        %1819 = vmatprep.subr.bf16.mxu0 0
        %1820 = vmatpush1.bf16.xpose.msra.mxu0 0
        %1821 = vmatprep.subr.bf16.mxu0 0
        %1822 = vmatpush1.bf16.xpose.msra.mxu0 0
        %1823 = vmatprep.subr.bf16.mxu0 0
        %1824 = vmatpush1.bf16.xpose.msra.mxu0 0
        %1825 = vmatprep.subr.bf16.mxu0 0
        %1826 = vmatpush1.bf16.xpose.msra.mxu0 0
        %1827 = vmatprep.subr.bf16.mxu0 0
        %1828 = vmatpush1.bf16.xpose.msra.mxu0 0
        %1829 = vmatprep.subr.bf16.mxu0 0
        %1830 = vmatpush1.bf16.xpose.msra.mxu0 %v1813
        %1831 = vmatprep.subr.bf16.mxu0 0
        %1832 = vmatpush2.bf16.xpose.msra.mxu0 0
        %1833 = vmatprep.subr.bf16.mxu0 0
        %1834 = vmatpush2.bf16.xpose.msra.mxu0 0
        %1835 = vmatprep.subr.bf16.mxu0 0
        %1836 = vmatpush2.bf16.xpose.msra.mxu0 0
        %1837 = vmatprep.subr.bf16.mxu0 0
        %1838 = vmatpush2.bf16.xpose.msra.mxu0 0
        %1839 = vmatprep.subr.bf16.mxu0 0
        %1840 = vmatpush2.bf16.xpose.msra.mxu0 0
        %1841 = vmatprep.subr.bf16.mxu0 0
        %1842 = vmatpush2.bf16.xpose.msra.mxu0 0
        %1843 = vmatprep.subr.bf16.mxu0 0
        %1844 = vmatpush2.bf16.xpose.msra.mxu0 0
        %1845 = vmatprep.subr.bf16.mxu0 0
        %1846 = vmatpush2.bf16.xpose.msra.mxu0 0
        %1847 = vmatprep.mubr.bf16.mxu0 0
        %1848 = vmatmul.mubr.bf16.gmra.mxu0 %v1810
        %v1849 = vpop.f32.mrf.mxu0
        %v1850 = vadd.f32 0.0, %v1849
        %v1851 = vpop.f32.mrf.mxu0
        %v1852 = vpop.f32.mrf.mxu0
        %v1853 = vpop.f32.mrf.mxu0
        %1854 = vdwg.mxu0
        %v1855 = vmul.f32 %v1800, 0.35355338
        %v1856 = vmul.f32 %v1850, 0.35355338
        %v1857 = vsel %vm1308, %v1855, -1e+09
        %v1858 = vsel %vm1309, %v1856, -1e+09
        %v1859 = vsel %vm1203, %v1857, -inf
        %1860 = vmax.xlane.f32.xlu0 %v1859
        %v1861 = vpop.xlane.xlu0 %1860
        %v1862 = vsel %vm1203, %v1858, -inf
        %1863 = vmax.xlane.f32.xlu0 %v1862
        %v1864 = vpop.xlane.xlu0 %1863
        %v1865 = vsub.f32 %v1857, %v1861
        %v1866 = vsub.f32 %v1858, %v1864
        %v1867 = vmul.f32 %v1865, 1.442695
        %v1868 = vpow.pop %v1867
        %v1869 = vmul.f32 %v1866, 1.442695
        %v1870 = vpow.pop %v1869
        %v1871 = vsel %vm1203, %v1868, 0.0
        %1872 = vadd.xlane.f32.xlu0 %v1871
        %v1873 = vpop.xlane.xlu0 %1872
        %v1874 = vsel %vm1203, %v1870, 0.0
        %1875 = vadd.xlane.f32.xlu0 %v1874
        %v1876 = vpop.xlane.xlu0 %1875
        %v1877 = vrcp.pop %v1873
        %v1878 = vrcp.pop %v1876
        %v1879 = vmul.f32 %v1868, %v1877
        %v1880 = vmul.f32 %v1870, %v1878
        %v1881 = vpack.c.bf16 %v1879, %v1879
        %v1882 = vpack.c.bf16 %v1880, %v1880
        %1883 = vrot.lane.b32.xlu0 %v1201, 112
        %v1884 = vpop.permute.xlu0 %1883
        %v1886 = vsel %vm1203, %v1881, 0
        %v1889 = vsel %vm1339, %v1884, 0
        %1891 = vmatprep.subr.bf16.mxu0 0
        %1892 = vmatpush1.bf16.msra.mxu0 0
        %1893 = vmatprep.subr.bf16.mxu0 0
        %1894 = vmatpush1.bf16.msra.mxu0 0
        %1895 = vmatprep.subr.bf16.mxu0 0
        %1896 = vmatpush1.bf16.msra.mxu0 0
        %1897 = vmatprep.subr.bf16.mxu0 0
        %1898 = vmatpush1.bf16.msra.mxu0 0
        %1899 = vmatprep.subr.bf16.mxu0 0
        %1900 = vmatpush1.bf16.msra.mxu0 0
        %1901 = vmatprep.subr.bf16.mxu0 0
        %1902 = vmatpush1.bf16.msra.mxu0 0
        %1903 = vmatprep.subr.bf16.mxu0 0
        %1904 = vmatpush1.bf16.msra.mxu0 0
        %1905 = vmatprep.subr.bf16.mxu0 0
        %1906 = vmatpush1.bf16.msra.mxu0 %v1889
        %1907 = vmatprep.subr.bf16.mxu0 0
        %1908 = vmatpush2.bf16.msra.mxu0 0
        %1909 = vmatprep.subr.bf16.mxu0 0
        %1910 = vmatpush2.bf16.msra.mxu0 0
        %1911 = vmatprep.subr.bf16.mxu0 0
        %1912 = vmatpush2.bf16.msra.mxu0 0
        %1913 = vmatprep.subr.bf16.mxu0 0
        %1914 = vmatpush2.bf16.msra.mxu0 0
        %1915 = vmatprep.subr.bf16.mxu0 0
        %1916 = vmatpush2.bf16.msra.mxu0 0
        %1917 = vmatprep.subr.bf16.mxu0 0
        %1918 = vmatpush2.bf16.msra.mxu0 0
        %1919 = vmatprep.subr.bf16.mxu0 0
        %1920 = vmatpush2.bf16.msra.mxu0 0
        %1921 = vmatprep.subr.bf16.mxu0 0
        %1922 = vmatpush2.bf16.msra.mxu0 0
        %1923 = vmatprep.mubr.bf16.mxu0 0
        %1924 = vmatmul.mubr.bf16.gmra.mxu0 %v1886
        %v1925 = vpop.f32.mrf.mxu0
        %v1926 = vadd.f32 0.0, %v1925
        %v1927 = vpop.f32.mrf.mxu0
        %v1928 = vpop.f32.mrf.mxu0
        %v1929 = vpop.f32.mrf.mxu0
        %1930 = vdwg.mxu0
        %1931 = vrot.lane.b32.xlu0 %v1202, 112
        %v1932 = vpop.permute.xlu0 %1931
        %v1934 = vsel %vm1203, %v1882, 0
        %v1937 = vsel %vm1339, %v1932, 0
        %1939 = vmatprep.subr.bf16.mxu0 0
        %1940 = vmatpush1.bf16.msra.mxu0 0
        %1941 = vmatprep.subr.bf16.mxu0 0
        %1942 = vmatpush1.bf16.msra.mxu0 0
        %1943 = vmatprep.subr.bf16.mxu0 0
        %1944 = vmatpush1.bf16.msra.mxu0 0
        %1945 = vmatprep.subr.bf16.mxu0 0
        %1946 = vmatpush1.bf16.msra.mxu0 0
        %1947 = vmatprep.subr.bf16.mxu0 0
        %1948 = vmatpush1.bf16.msra.mxu0 0
        %1949 = vmatprep.subr.bf16.mxu0 0
        %1950 = vmatpush1.bf16.msra.mxu0 0
        %1951 = vmatprep.subr.bf16.mxu0 0
        %1952 = vmatpush1.bf16.msra.mxu0 0
        %1953 = vmatprep.subr.bf16.mxu0 0
        %1954 = vmatpush1.bf16.msra.mxu0 %v1937
        %1955 = vmatprep.subr.bf16.mxu0 0
        %1956 = vmatpush2.bf16.msra.mxu0 0
        %1957 = vmatprep.subr.bf16.mxu0 0
        %1958 = vmatpush2.bf16.msra.mxu0 0
        %1959 = vmatprep.subr.bf16.mxu0 0
        %1960 = vmatpush2.bf16.msra.mxu0 0
        %1961 = vmatprep.subr.bf16.mxu0 0
        %1962 = vmatpush2.bf16.msra.mxu0 0
        %1963 = vmatprep.subr.bf16.mxu0 0
        %1964 = vmatpush2.bf16.msra.mxu0 0
        %1965 = vmatprep.subr.bf16.mxu0 0
        %1966 = vmatpush2.bf16.msra.mxu0 0
        %1967 = vmatprep.subr.bf16.mxu0 0
        %1968 = vmatpush2.bf16.msra.mxu0 0
        %1969 = vmatprep.subr.bf16.mxu0 0
        %1970 = vmatpush2.bf16.msra.mxu0 0
        %1971 = vmatprep.mubr.bf16.mxu0 0
        %1972 = vmatmul.mubr.bf16.gmra.mxu0 %v1934
        %v1973 = vpop.f32.mrf.mxu0
        %v1974 = vadd.f32 0.0, %v1973
        %v1975 = vpop.f32.mrf.mxu0
        %v1976 = vpop.f32.mrf.mxu0
        %v1977 = vpop.f32.mrf.mxu0
        %1978 = vdwg.mxu0
        %v1979 = vpack.c.bf16 %v1974, %v1926
        %v1981 = vsel %vm1203, %v1979, 0
        %v1984 = vsel %vm1339, %v1195, 0
        %1986 = vmatprep.subr.bf16.mxu0 0
        %1987 = vmatpush1.bf16.msra.mxu0 0
        %1988 = vmatprep.subr.bf16.mxu0 0
        %1989 = vmatpush1.bf16.msra.mxu0 0
        %1990 = vmatprep.subr.bf16.mxu0 0
        %1991 = vmatpush1.bf16.msra.mxu0 0
        %1992 = vmatprep.subr.bf16.mxu0 0
        %1993 = vmatpush1.bf16.msra.mxu0 0
        %1994 = vmatprep.subr.bf16.mxu0 0
        %1995 = vmatpush1.bf16.msra.mxu0 0
        %1996 = vmatprep.subr.bf16.mxu0 0
        %1997 = vmatpush1.bf16.msra.mxu0 0
        %1998 = vmatprep.subr.bf16.mxu0 0
        %1999 = vmatpush1.bf16.msra.mxu0 0
        %2000 = vmatprep.subr.bf16.mxu0 0
        %2001 = vmatpush1.bf16.msra.mxu0 %v1984
        %2002 = vmatprep.subr.bf16.mxu0 0
        %2003 = vmatpush2.bf16.msra.mxu0 0
        %2004 = vmatprep.subr.bf16.mxu0 0
        %2005 = vmatpush2.bf16.msra.mxu0 0
        %2006 = vmatprep.subr.bf16.mxu0 0
        %2007 = vmatpush2.bf16.msra.mxu0 0
        %2008 = vmatprep.subr.bf16.mxu0 0
        %2009 = vmatpush2.bf16.msra.mxu0 0
        %2010 = vmatprep.subr.bf16.mxu0 0
        %2011 = vmatpush2.bf16.msra.mxu0 0
        %2012 = vmatprep.subr.bf16.mxu0 0
        %2013 = vmatpush2.bf16.msra.mxu0 0
        %2014 = vmatprep.subr.bf16.mxu0 0
        %2015 = vmatpush2.bf16.msra.mxu0 0
        %2016 = vmatprep.subr.bf16.mxu0 0
        %2017 = vmatpush2.bf16.msra.mxu0 0
        %2018 = vmatprep.mubr.bf16.mxu0 0
        %2019 = vmatmul.mubr.bf16.gmra.mxu0 %v1981
        %v2020 = vpop.f32.mrf.mxu0
        %v2021 = vadd.f32 0.0, %v2020
        %v2022 = vpop.f32.mrf.mxu0
        %v2023 = vpop.f32.mrf.mxu0
        %v2024 = vadd.f32 0.0, %v2023
        %v2025 = vpop.f32.mrf.mxu0
        %2026 = vdwg.mxu0
        %v2027 = vadd.f32 %v1749, %v2021
        %v2028 = vadd.f32 %v1752, %v2024
        %2029 = vrot.lane.b32.xlu0 %v1197, 104
        %v2030 = vpop.permute.xlu0 %2029
        %2031 = vrot.lane.b32.xlu0 %v1199, 104
        %v2032 = vpop.permute.xlu0 %2031
        %v2034 = vsel %vm1203, %v2030, 0
        %v2037 = vsel %vm1203, %v2032, 0
        %2039 = vmatprep.subr.bf16.mxu0 0
        %2040 = vmatpush1.bf16.xpose.msra.mxu0 0
        %2041 = vmatprep.subr.bf16.mxu0 0
        %2042 = vmatpush1.bf16.xpose.msra.mxu0 0
        %2043 = vmatprep.subr.bf16.mxu0 0
        %2044 = vmatpush1.bf16.xpose.msra.mxu0 0
        %2045 = vmatprep.subr.bf16.mxu0 0
        %2046 = vmatpush1.bf16.xpose.msra.mxu0 0
        %2047 = vmatprep.subr.bf16.mxu0 0
        %2048 = vmatpush1.bf16.xpose.msra.mxu0 0
        %2049 = vmatprep.subr.bf16.mxu0 0
        %2050 = vmatpush1.bf16.xpose.msra.mxu0 0
        %2051 = vmatprep.subr.bf16.mxu0 0
        %2052 = vmatpush1.bf16.xpose.msra.mxu0 0
        %2053 = vmatprep.subr.bf16.mxu0 0
        %2054 = vmatpush1.bf16.xpose.msra.mxu0 %v2037
        %2055 = vmatprep.subr.bf16.mxu0 0
        %2056 = vmatpush2.bf16.xpose.msra.mxu0 0
        %2057 = vmatprep.subr.bf16.mxu0 0
        %2058 = vmatpush2.bf16.xpose.msra.mxu0 0
        %2059 = vmatprep.subr.bf16.mxu0 0
        %2060 = vmatpush2.bf16.xpose.msra.mxu0 0
        %2061 = vmatprep.subr.bf16.mxu0 0
        %2062 = vmatpush2.bf16.xpose.msra.mxu0 0
        %2063 = vmatprep.subr.bf16.mxu0 0
        %2064 = vmatpush2.bf16.xpose.msra.mxu0 0
        %2065 = vmatprep.subr.bf16.mxu0 0
        %2066 = vmatpush2.bf16.xpose.msra.mxu0 0
        %2067 = vmatprep.subr.bf16.mxu0 0
        %2068 = vmatpush2.bf16.xpose.msra.mxu0 0
        %2069 = vmatprep.subr.bf16.mxu0 0
        %2070 = vmatpush2.bf16.xpose.msra.mxu0 0
        %2071 = vmatprep.mubr.bf16.mxu0 0
        %2072 = vmatmul.mubr.bf16.gmra.mxu0 %v2034
        %v2073 = vpop.f32.mrf.mxu0
        %v2074 = vadd.f32 0.0, %v2073
        %v2075 = vpop.f32.mrf.mxu0
        %v2076 = vpop.f32.mrf.mxu0
        %v2077 = vpop.f32.mrf.mxu0
        %2078 = vdwg.mxu0
        %2079 = vrot.lane.b32.xlu0 %v1198, 104
        %v2080 = vpop.permute.xlu0 %2079
        %2081 = vrot.lane.b32.xlu0 %v1200, 104
        %v2082 = vpop.permute.xlu0 %2081
        %v2084 = vsel %vm1203, %v2080, 0
        %v2087 = vsel %vm1203, %v2082, 0
        %2089 = vmatprep.subr.bf16.mxu0 0
        %2090 = vmatpush1.bf16.xpose.msra.mxu0 0
        %2091 = vmatprep.subr.bf16.mxu0 0
        %2092 = vmatpush1.bf16.xpose.msra.mxu0 0
        %2093 = vmatprep.subr.bf16.mxu0 0
        %2094 = vmatpush1.bf16.xpose.msra.mxu0 0
        %2095 = vmatprep.subr.bf16.mxu0 0
        %2096 = vmatpush1.bf16.xpose.msra.mxu0 0
        %2097 = vmatprep.subr.bf16.mxu0 0
        %2098 = vmatpush1.bf16.xpose.msra.mxu0 0
        %2099 = vmatprep.subr.bf16.mxu0 0
        %2100 = vmatpush1.bf16.xpose.msra.mxu0 0
        %2101 = vmatprep.subr.bf16.mxu0 0
        %2102 = vmatpush1.bf16.xpose.msra.mxu0 0
        %2103 = vmatprep.subr.bf16.mxu0 0
        %2104 = vmatpush1.bf16.xpose.msra.mxu0 %v2087
        %2105 = vmatprep.subr.bf16.mxu0 0
        %2106 = vmatpush2.bf16.xpose.msra.mxu0 0
        %2107 = vmatprep.subr.bf16.mxu0 0
        %2108 = vmatpush2.bf16.xpose.msra.mxu0 0
        %2109 = vmatprep.subr.bf16.mxu0 0
        %2110 = vmatpush2.bf16.xpose.msra.mxu0 0
        %2111 = vmatprep.subr.bf16.mxu0 0
        %2112 = vmatpush2.bf16.xpose.msra.mxu0 0
        %2113 = vmatprep.subr.bf16.mxu0 0
        %2114 = vmatpush2.bf16.xpose.msra.mxu0 0
        %2115 = vmatprep.subr.bf16.mxu0 0
        %2116 = vmatpush2.bf16.xpose.msra.mxu0 0
        %2117 = vmatprep.subr.bf16.mxu0 0
        %2118 = vmatpush2.bf16.xpose.msra.mxu0 0
        %2119 = vmatprep.subr.bf16.mxu0 0
        %2120 = vmatpush2.bf16.xpose.msra.mxu0 0
        %2121 = vmatprep.mubr.bf16.mxu0 0
        %2122 = vmatmul.mubr.bf16.gmra.mxu0 %v2084
        %v2123 = vpop.f32.mrf.mxu0
        %v2124 = vadd.f32 0.0, %v2123
        %v2125 = vpop.f32.mrf.mxu0
        %v2126 = vpop.f32.mrf.mxu0
        %v2127 = vpop.f32.mrf.mxu0
        %2128 = vdwg.mxu0
        %v2129 = vmul.f32 %v2074, 0.35355338
        %v2130 = vmul.f32 %v2124, 0.35355338
        %v2131 = vsel %vm1308, %v2129, -1e+09
        %v2132 = vsel %vm1309, %v2130, -1e+09
        %v2133 = vsel %vm1203, %v2131, -inf
        %2134 = vmax.xlane.f32.xlu0 %v2133
        %v2135 = vpop.xlane.xlu0 %2134
        %v2136 = vsel %vm1203, %v2132, -inf
        %2137 = vmax.xlane.f32.xlu0 %v2136
        %v2138 = vpop.xlane.xlu0 %2137
        %v2139 = vsub.f32 %v2131, %v2135
        %v2140 = vsub.f32 %v2132, %v2138
        %v2141 = vmul.f32 %v2139, 1.442695
        %v2142 = vpow.pop %v2141
        %v2143 = vmul.f32 %v2140, 1.442695
        %v2144 = vpow.pop %v2143
        %v2145 = vsel %vm1203, %v2142, 0.0
        %2146 = vadd.xlane.f32.xlu0 %v2145
        %v2147 = vpop.xlane.xlu0 %2146
        %v2148 = vsel %vm1203, %v2144, 0.0
        %2149 = vadd.xlane.f32.xlu0 %v2148
        %v2150 = vpop.xlane.xlu0 %2149
        %v2151 = vrcp.pop %v2147
        %v2152 = vrcp.pop %v2150
        %v2153 = vmul.f32 %v2142, %v2151
        %v2154 = vmul.f32 %v2144, %v2152
        %v2155 = vpack.c.bf16 %v2153, %v2153
        %v2156 = vpack.c.bf16 %v2154, %v2154
        %2157 = vrot.lane.b32.xlu0 %v1201, 104
        %v2158 = vpop.permute.xlu0 %2157
        %v2160 = vsel %vm1203, %v2155, 0
        %v2163 = vsel %vm1339, %v2158, 0
        %2165 = vmatprep.subr.bf16.mxu0 0
        %2166 = vmatpush1.bf16.msra.mxu0 0
        %2167 = vmatprep.subr.bf16.mxu0 0
        %2168 = vmatpush1.bf16.msra.mxu0 0
        %2169 = vmatprep.subr.bf16.mxu0 0
        %2170 = vmatpush1.bf16.msra.mxu0 0
        %2171 = vmatprep.subr.bf16.mxu0 0
        %2172 = vmatpush1.bf16.msra.mxu0 0
        %2173 = vmatprep.subr.bf16.mxu0 0
        %2174 = vmatpush1.bf16.msra.mxu0 0
        %2175 = vmatprep.subr.bf16.mxu0 0
        %2176 = vmatpush1.bf16.msra.mxu0 0
        %2177 = vmatprep.subr.bf16.mxu0 0
        %2178 = vmatpush1.bf16.msra.mxu0 0
        %2179 = vmatprep.subr.bf16.mxu0 0
        %2180 = vmatpush1.bf16.msra.mxu0 %v2163
        %2181 = vmatprep.subr.bf16.mxu0 0
        %2182 = vmatpush2.bf16.msra.mxu0 0
        %2183 = vmatprep.subr.bf16.mxu0 0
        %2184 = vmatpush2.bf16.msra.mxu0 0
        %2185 = vmatprep.subr.bf16.mxu0 0
        %2186 = vmatpush2.bf16.msra.mxu0 0
        %2187 = vmatprep.subr.bf16.mxu0 0
        %2188 = vmatpush2.bf16.msra.mxu0 0
        %2189 = vmatprep.subr.bf16.mxu0 0
        %2190 = vmatpush2.bf16.msra.mxu0 0
        %2191 = vmatprep.subr.bf16.mxu0 0
        %2192 = vmatpush2.bf16.msra.mxu0 0
        %2193 = vmatprep.subr.bf16.mxu0 0
        %2194 = vmatpush2.bf16.msra.mxu0 0
        %2195 = vmatprep.subr.bf16.mxu0 0
        %2196 = vmatpush2.bf16.msra.mxu0 0
        %2197 = vmatprep.mubr.bf16.mxu0 0
        %2198 = vmatmul.mubr.bf16.gmra.mxu0 %v2160
        %v2199 = vpop.f32.mrf.mxu0
        %v2200 = vadd.f32 0.0, %v2199
        %v2201 = vpop.f32.mrf.mxu0
        %v2202 = vpop.f32.mrf.mxu0
        %v2203 = vpop.f32.mrf.mxu0
        %2204 = vdwg.mxu0
        %2205 = vrot.lane.b32.xlu0 %v1202, 104
        %v2206 = vpop.permute.xlu0 %2205
        %v2208 = vsel %vm1203, %v2156, 0
        %v2211 = vsel %vm1339, %v2206, 0
        %2213 = vmatprep.subr.bf16.mxu0 0
        %2214 = vmatpush1.bf16.msra.mxu0 0
        %2215 = vmatprep.subr.bf16.mxu0 0
        %2216 = vmatpush1.bf16.msra.mxu0 0
        %2217 = vmatprep.subr.bf16.mxu0 0
        %2218 = vmatpush1.bf16.msra.mxu0 0
        %2219 = vmatprep.subr.bf16.mxu0 0
        %2220 = vmatpush1.bf16.msra.mxu0 0
        %2221 = vmatprep.subr.bf16.mxu0 0
        %2222 = vmatpush1.bf16.msra.mxu0 0
        %2223 = vmatprep.subr.bf16.mxu0 0
        %2224 = vmatpush1.bf16.msra.mxu0 0
        %2225 = vmatprep.subr.bf16.mxu0 0
        %2226 = vmatpush1.bf16.msra.mxu0 0
        %2227 = vmatprep.subr.bf16.mxu0 0
        %2228 = vmatpush1.bf16.msra.mxu0 %v2211
        %2229 = vmatprep.subr.bf16.mxu0 0
        %2230 = vmatpush2.bf16.msra.mxu0 0
        %2231 = vmatprep.subr.bf16.mxu0 0
        %2232 = vmatpush2.bf16.msra.mxu0 0
        %2233 = vmatprep.subr.bf16.mxu0 0
        %2234 = vmatpush2.bf16.msra.mxu0 0
        %2235 = vmatprep.subr.bf16.mxu0 0
        %2236 = vmatpush2.bf16.msra.mxu0 0
        %2237 = vmatprep.subr.bf16.mxu0 0
        %2238 = vmatpush2.bf16.msra.mxu0 0
        %2239 = vmatprep.subr.bf16.mxu0 0
        %2240 = vmatpush2.bf16.msra.mxu0 0
        %2241 = vmatprep.subr.bf16.mxu0 0
        %2242 = vmatpush2.bf16.msra.mxu0 0
        %2243 = vmatprep.subr.bf16.mxu0 0
        %2244 = vmatpush2.bf16.msra.mxu0 0
        %2245 = vmatprep.mubr.bf16.mxu0 0
        %2246 = vmatmul.mubr.bf16.gmra.mxu0 %v2208
        %v2247 = vpop.f32.mrf.mxu0
        %v2248 = vadd.f32 0.0, %v2247
        %v2249 = vpop.f32.mrf.mxu0
        %v2250 = vpop.f32.mrf.mxu0
        %v2251 = vpop.f32.mrf.mxu0
        %2252 = vdwg.mxu0
        %v2253 = vpack.c.bf16 %v2248, %v2200
        %v2255 = vsel %vm1203, %v2253, 0
        %v2258 = vsel %vm1339, %v1196, 0
        %2260 = vmatprep.subr.bf16.mxu0 0
        %2261 = vmatpush1.bf16.msra.mxu0 0
        %2262 = vmatprep.subr.bf16.mxu0 0
        %2263 = vmatpush1.bf16.msra.mxu0 0
        %2264 = vmatprep.subr.bf16.mxu0 0
        %2265 = vmatpush1.bf16.msra.mxu0 0
        %2266 = vmatprep.subr.bf16.mxu0 0
        %2267 = vmatpush1.bf16.msra.mxu0 0
        %2268 = vmatprep.subr.bf16.mxu0 0
        %2269 = vmatpush1.bf16.msra.mxu0 0
        %2270 = vmatprep.subr.bf16.mxu0 0
        %2271 = vmatpush1.bf16.msra.mxu0 0
        %2272 = vmatprep.subr.bf16.mxu0 0
        %2273 = vmatpush1.bf16.msra.mxu0 0
        %2274 = vmatprep.subr.bf16.mxu0 0
        %2275 = vmatpush1.bf16.msra.mxu0 %v2258
        %2276 = vmatprep.subr.bf16.mxu0 0
        %2277 = vmatpush2.bf16.msra.mxu0 0
        %2278 = vmatprep.subr.bf16.mxu0 0
        %2279 = vmatpush2.bf16.msra.mxu0 0
        %2280 = vmatprep.subr.bf16.mxu0 0
        %2281 = vmatpush2.bf16.msra.mxu0 0
        %2282 = vmatprep.subr.bf16.mxu0 0
        %2283 = vmatpush2.bf16.msra.mxu0 0
        %2284 = vmatprep.subr.bf16.mxu0 0
        %2285 = vmatpush2.bf16.msra.mxu0 0
        %2286 = vmatprep.subr.bf16.mxu0 0
        %2287 = vmatpush2.bf16.msra.mxu0 0
        %2288 = vmatprep.subr.bf16.mxu0 0
        %2289 = vmatpush2.bf16.msra.mxu0 0
        %2290 = vmatprep.subr.bf16.mxu0 0
        %2291 = vmatpush2.bf16.msra.mxu0 0
        %2292 = vmatprep.mubr.bf16.mxu0 0
        %2293 = vmatmul.mubr.bf16.gmra.mxu0 %v2255
        %v2294 = vpop.f32.mrf.mxu0
        %v2295 = vadd.f32 0.0, %v2294
        %v2296 = vpop.f32.mrf.mxu0
        %v2297 = vpop.f32.mrf.mxu0
        %v2298 = vadd.f32 0.0, %v2297
        %v2299 = vpop.f32.mrf.mxu0
        %2300 = vdwg.mxu0
        %v2301 = vadd.f32 %v2027, %v2295
        %v2302 = vadd.f32 %v2028, %v2298
        %v2303 = vld [vmem:[%s896] sm:$0x1]
        %v2305 = vlaneseq
        %v2306 = vshrl.u32 %v2305, 7
        %v2307 = vsub.s32 0, %v2306
        %v2308 = vrot.slane %v2303, %v2307
        %v2310 = vadd.f32 %v2301, %v2308
        %v2311 = vadd.f32 %v2302, %v2308
        %v2312 = vadd.f32 %v930, %v2310
        %v2313 = vadd.f32 %v931, %v2311
        %v2314 = vld [vmem:[%s916] sm:$0x1]
        %v2315 = vld [vmem:[%s919] sm:$0x1]
        %v2316 = vsel %vm938, %v2312, 0.0
        %2317 = vadd.xlane.f32.xlu0 %v2316
        %v2318 = vpop.xlane.xlu0 %2317
        %v2319 = vsel %vm938, %v2313, 0.0
        %2320 = vadd.xlane.f32.xlu0 %v2319
        %v2321 = vpop.xlane.xlu0 %2320
        %v2322 = vmul.f32 %v2318, %v945
        %v2323 = vmul.f32 %v2321, %v945
        %v2324 = vsub.f32 %v2312, %v2322
        %v2325 = vsub.f32 %v2313, %v2323
        %v2326 = vmul.f32 %v2324, %v2324
        %v2327 = vmul.f32 %v2325, %v2325
        %v2328 = vsel %vm938, %v2326, 0.0
        %2329 = vadd.xlane.f32.xlu0 %v2328
        %v2330 = vpop.xlane.xlu0 %2329
        %v2331 = vsel %vm938, %v2327, 0.0
        %2332 = vadd.xlane.f32.xlu0 %v2331
        %v2333 = vpop.xlane.xlu0 %2332
        %v2334 = vmul.f32 %v2330, %v958
        %v2335 = vmul.f32 %v2333, %v958
        %v2336 = vrsqrt.pop %v2334
        %v2337 = vmul.f32 %v2334, %v2336
        %vm2338 = vcmp.eq.f32.partialorder %v2334, inf
        %v2339 = vsel %vm2338, %v2334, %v2337
        %vm2340 = vcmp.eq.f32.partialorder %v2334, 0.0
        %v2341 = vand.u32 %v2334, 2147483648
        %v2342 = vsel %vm2340, %v2341, %v2339
        %v2343 = vrsqrt.pop %v2335
        %v2344 = vmul.f32 %v2335, %v2343
        %vm2345 = vcmp.eq.f32.partialorder %v2335, inf
        %v2346 = vsel %vm2345, %v2335, %v2344
        %vm2347 = vcmp.eq.f32.partialorder %v2335, 0.0
        %v2348 = vand.u32 %v2335, 2147483648
        %v2349 = vsel %vm2347, %v2348, %v2346
        %v2351 = vlaneseq
        %v2352 = vshrl.u32 %v2351, 7
        %v2353 = vsub.s32 0, %v2352
        %v2354 = vrot.slane %v2314, %v2353
        %v2356 = vmul.f32 %v2354, %v2324
        %v2357 = vmul.f32 %v2354, %v2325
        %v2358 = vadd.f32 %v2342, 1e-06
        %v2359 = vadd.f32 %v2349, 1e-06
        %v2360 = vrcp.pop %v2358
        %v2361 = vmul.f32 %v2356, %v2360
        %v2362 = vrcp.pop %v2359
        %v2363 = vmul.f32 %v2357, %v2362
        %v2365 = vlaneseq
        %v2366 = vshrl.u32 %v2365, 7
        %v2367 = vsub.s32 0, %v2366
        %v2368 = vrot.slane %v2315, %v2367
        %v2370 = vadd.f32 %v2361, %v2368
        %v2371 = vadd.f32 %v2363, %v2368
        %v2372 = vpack.c.bf16 %v2371, %v2370
        %v2373 = vld [vmem:[%s763] sm:$0xf]
        %v2374 = vld [vmem:[%s763 + $0x4] sm:$0xf]
        %v2375 = vld [vmem:[%s763 + $0x8] sm:$0xf]
        %v2376 = vld [vmem:[%s763 + $0xc] sm:$0xf]
        %v2377 = vld [vmem:[%s899] sm:$0x1]
        %v2379 = vlaneseq
        %v2380 = vshrl.u32 %v2379, 7
        %v2381 = vsub.s32 0, %v2380
        %v2382 = vrot.slane %v2377, %v2381
        %v2388 = vunpack.c.l.b16 %v2373
        %v2389 = vunpack.c.l.b16 %v2374
        %v2390 = vunpack.c.l.b16 %v2375
        %v2391 = vunpack.c.l.b16 %v2376
        %v2392 = vpack.c.b16 %v2389, %v2388
        %v2393 = vpack.c.b16 %v2391, %v2390
        %v2397 = vsel %vm938, %v2372, 0
        %2399 = vmatprep.subr.bf16.mxu0 0
        %2400 = vmatpush1.bf16.msra.mxu0 0
        %2401 = vmatprep.subr.bf16.mxu0 0
        %2402 = vmatpush1.bf16.msra.mxu0 0
        %2403 = vmatprep.subr.bf16.mxu0 0
        %2404 = vmatpush1.bf16.msra.mxu0 0
        %2405 = vmatprep.subr.bf16.mxu0 0
        %2406 = vmatpush1.bf16.msra.mxu0 0
        %2407 = vmatprep.subr.bf16.mxu0 0
        %2408 = vmatpush1.bf16.msra.mxu0 0
        %2409 = vmatprep.subr.bf16.mxu0 0
        %2410 = vmatpush1.bf16.msra.mxu0 0
        %2411 = vmatprep.subr.bf16.mxu0 0
        %2412 = vmatpush1.bf16.msra.mxu0 %v2393
        %2413 = vmatprep.subr.bf16.mxu0 0
        %2414 = vmatpush1.bf16.msra.mxu0 %v2392
        %2415 = vmatprep.subr.bf16.mxu0 0
        %2416 = vmatpush2.bf16.msra.mxu0 0
        %2417 = vmatprep.subr.bf16.mxu0 0
        %2418 = vmatpush2.bf16.msra.mxu0 0
        %2419 = vmatprep.subr.bf16.mxu0 0
        %2420 = vmatpush2.bf16.msra.mxu0 0
        %2421 = vmatprep.subr.bf16.mxu0 0
        %2422 = vmatpush2.bf16.msra.mxu0 0
        %2423 = vmatprep.subr.bf16.mxu0 0
        %2424 = vmatpush2.bf16.msra.mxu0 0
        %2425 = vmatprep.subr.bf16.mxu0 0
        %2426 = vmatpush2.bf16.msra.mxu0 0
        %2427 = vmatprep.subr.bf16.mxu0 0
        %2428 = vmatpush2.bf16.msra.mxu0 0
        %2429 = vmatprep.subr.bf16.mxu0 0
        %2430 = vmatpush2.bf16.msra.mxu0 0
        %2431 = vmatprep.mubr.bf16.mxu0 0
        %2432 = vmatmul.mubr.bf16.gmra.mxu0 %v2397
        %v2433 = vpop.f32.mrf.mxu0
        %v2434 = vadd.f32 %v2382, %v2433
        %v2435 = vpop.f32.mrf.mxu0
        %v2436 = vpop.f32.mrf.mxu0
        %v2437 = vadd.f32 %v2382, %v2436
        %v2438 = vpop.f32.mrf.mxu0
        %2439 = vdwg.mxu0
        %v2440 = vmax.f32 %v2434, 0.0
        %v2441 = vmax.f32 %v2437, 0.0
        %v2442 = vpack.c.bf16 %v2441, %v2440
        %v2443 = vld [vmem:[%s904] sm:$0xf]
        %v2444 = vld [vmem:[%s904 + $0x4] sm:$0xf]
        %v2445 = vld [vmem:[%s904 + $0x8] sm:$0xf]
        %v2446 = vld [vmem:[%s904 + $0xc] sm:$0xf]
        %v2447 = vld [vmem:[%s904 + $0x10] sm:$0xf]
        %v2448 = vld [vmem:[%s904 + $0x14] sm:$0xf]
        %v2449 = vld [vmem:[%s904 + $0x18] sm:$0xf]
        %v2450 = vld [vmem:[%s904 + $0x1c] sm:$0xf]
        %v2451 = vld [vmem:[%s907] sm:$0x1]
        %v2453 = vlaneseq
        %v2454 = vshrl.u32 %v2453, 7
        %v2455 = vsub.s32 0, %v2454
        %v2456 = vrot.slane %v2451, %v2455
        %v2466 = vunpack.c.l.b16 %v2443
        %v2467 = vunpack.c.l.b16 %v2444
        %v2468 = vunpack.c.l.b16 %v2445
        %v2469 = vunpack.c.l.b16 %v2446
        %v2470 = vunpack.c.l.b16 %v2447
        %v2471 = vunpack.c.l.b16 %v2448
        %v2472 = vunpack.c.l.b16 %v2449
        %v2473 = vunpack.c.l.b16 %v2450
        %v2474 = vpack.c.b16 %v2467, %v2466
        %v2475 = vpack.c.b16 %v2469, %v2468
        %v2476 = vpack.c.b16 %v2471, %v2470
        %v2477 = vpack.c.b16 %v2473, %v2472
        %vm2482 = vcmask 523264
        %v2484 = vsel %vm2482, %v2442, 0
        %2486 = vmatprep.subr.bf16.mxu0 0
        %2487 = vmatpush1.bf16.msra.mxu0 0
        %2488 = vmatprep.subr.bf16.mxu0 0
        %2489 = vmatpush1.bf16.msra.mxu0 0
        %2490 = vmatprep.subr.bf16.mxu0 0
        %2491 = vmatpush1.bf16.msra.mxu0 0
        %2492 = vmatprep.subr.bf16.mxu0 0
        %2493 = vmatpush1.bf16.msra.mxu0 0
        %2494 = vmatprep.subr.bf16.mxu0 0
        %2495 = vmatpush1.bf16.msra.mxu0 %v2477
        %2496 = vmatprep.subr.bf16.mxu0 0
        %2497 = vmatpush1.bf16.msra.mxu0 %v2476
        %2498 = vmatprep.subr.bf16.mxu0 0
        %2499 = vmatpush1.bf16.msra.mxu0 %v2475
        %2500 = vmatprep.subr.bf16.mxu0 0
        %2501 = vmatpush1.bf16.msra.mxu0 %v2474
        %2502 = vmatprep.subr.bf16.mxu0 0
        %2503 = vmatpush2.bf16.msra.mxu0 0
        %2504 = vmatprep.subr.bf16.mxu0 0
        %2505 = vmatpush2.bf16.msra.mxu0 0
        %2506 = vmatprep.subr.bf16.mxu0 0
        %2507 = vmatpush2.bf16.msra.mxu0 0
        %2508 = vmatprep.subr.bf16.mxu0 0
        %2509 = vmatpush2.bf16.msra.mxu0 0
        %2510 = vmatprep.subr.bf16.mxu0 0
        %2511 = vmatpush2.bf16.msra.mxu0 0
        %2512 = vmatprep.subr.bf16.mxu0 0
        %2513 = vmatpush2.bf16.msra.mxu0 0
        %2514 = vmatprep.subr.bf16.mxu0 0
        %2515 = vmatpush2.bf16.msra.mxu0 0
        %2516 = vmatprep.subr.bf16.mxu0 0
        %2517 = vmatpush2.bf16.msra.mxu0 0
        %2518 = vmatprep.mubr.bf16.mxu0 0
        %2519 = vmatmul.mubr.bf16.gmra.mxu0 %v2484
        %v2520 = vpop.f32.mrf.mxu0
        %v2521 = vadd.f32 %v2456, %v2520
        %v2522 = vpop.f32.mrf.mxu0
        %v2523 = vpop.f32.mrf.mxu0
        %v2524 = vadd.f32 %v2456, %v2523
        %v2525 = vpop.f32.mrf.mxu0
        %2526 = vdwg.mxu0
        %v2527 = vadd.f32 %v2312, %v2521
        %v2528 = vadd.f32 %v2313, %v2524
        %p2529 = scmp.lt.s32.totalorder %s34, 1
        // Predicated region
        $region121: #{tpu_custom_call.1} parent=99 // pred_check
          %p2530 = pneg %p2529
        $region122: #{tpu_custom_call.1} parent=99 // pred_check_branch
          %2532 = sbr.rel (%p2530) target = $region124
        $region123: #{tpu_custom_call.1} parent=99 // pred_region
          %2533 = vst.msk [vmem:[#allocation9] sm:$0xff] %vm938, %v2527
          %2534 = vst.msk [vmem:[#allocation9 + $0x8] sm:$0xff] %vm938, %v2528
        $region124: #{tpu_custom_call.1} parent=99 // pred_fallthru
          _
        %p2535 = scmp.eq.s32.totalorder %s34, 1
        // Predicated region
        $region125: #{tpu_custom_call.1} parent=99 // pred_check
          %p2536 = pneg %p2535
        $region126: #{tpu_custom_call.1} parent=99 // pred_check_branch
          %2538 = sbr.rel (%p2536) target = $region128
        $region127: #{tpu_custom_call.1} parent=99 // pred_region
          %v2539 = vld [vmem:[%s18] sm:$0x1]
          %v2540 = vld [vmem:[%s19] sm:$0x1]
          %v2541 = vsel %vm938, %v2527, 0.0
          %2542 = vadd.xlane.f32.xlu0 %v2541
          %v2543 = vpop.xlane.xlu0 %2542
          %v2544 = vsel %vm938, %v2528, 0.0
          %2545 = vadd.xlane.f32.xlu0 %v2544
          %v2546 = vpop.xlane.xlu0 %2545
          %v2547 = vmul.f32 %v2543, %v945
          %v2548 = vmul.f32 %v2546, %v945
          %v2549 = vsub.f32 %v2527, %v2547
          %v2550 = vsub.f32 %v2528, %v2548
          %v2551 = vmul.f32 %v2549, %v2549
          %v2552 = vmul.f32 %v2550, %v2550
          %v2553 = vsel %vm938, %v2551, 0.0
          %2554 = vadd.xlane.f32.xlu0 %v2553
          %v2555 = vpop.xlane.xlu0 %2554
          %v2556 = vsel %vm938, %v2552, 0.0
          %2557 = vadd.xlane.f32.xlu0 %v2556
          %v2558 = vpop.xlane.xlu0 %2557
          %v2559 = vmul.f32 %v2555, %v958
          %v2560 = vmul.f32 %v2558, %v958
          %v2561 = vrsqrt.pop %v2559
          %v2562 = vmul.f32 %v2559, %v2561
          %vm2563 = vcmp.eq.f32.partialorder %v2559, inf
          %v2564 = vsel %vm2563, %v2559, %v2562
          %vm2565 = vcmp.eq.f32.partialorder %v2559, 0.0
          %v2566 = vand.u32 %v2559, 2147483648
          %v2567 = vsel %vm2565, %v2566, %v2564
          %v2568 = vrsqrt.pop %v2560
          %v2569 = vmul.f32 %v2560, %v2568
          %vm2570 = vcmp.eq.f32.partialorder %v2560, inf
          %v2571 = vsel %vm2570, %v2560, %v2569
          %vm2572 = vcmp.eq.f32.partialorder %v2560, 0.0
          %v2573 = vand.u32 %v2560, 2147483648
          %v2574 = vsel %vm2572, %v2573, %v2571
          %v2576 = vlaneseq
          %v2577 = vshrl.u32 %v2576, 7
          %v2578 = vsub.s32 0, %v2577
          %v2579 = vrot.slane %v2539, %v2578
          %v2581 = vmul.f32 %v2579, %v2549
          %v2582 = vmul.f32 %v2579, %v2550
          %v2583 = vadd.f32 %v2567, 1e-06
          %v2584 = vadd.f32 %v2574, 1e-06
          %v2585 = vrcp.pop %v2583
          %v2586 = vmul.f32 %v2581, %v2585
          %v2587 = vrcp.pop %v2584
          %v2588 = vmul.f32 %v2582, %v2587
          %v2590 = vlaneseq
          %v2591 = vshrl.u32 %v2590, 7
          %v2592 = vsub.s32 0, %v2591
          %v2593 = vrot.slane %v2540, %v2592
          %v2595 = vadd.f32 %v2586, %v2593
          %v2596 = vadd.f32 %v2588, %v2593
          %2597 = vst.msk [vmem:[#allocation9] sm:$0xff] %vm938, %v2595
          %2598 = vst.msk [vmem:[#allocation9 + $0x8] sm:$0xff] %vm938, %v2596
        $region128: #{tpu_custom_call.1} parent=99 // pred_fallthru
          _
        // Predicated region
        $region129: #{tpu_custom_call.1} parent=99 // pred_check
          %p2599 = pneg %p547
        $region130: #{tpu_custom_call.1} parent=99 // pred_check_branch
          %2601 = sbr.rel (%p2599) target = $region132
        $region131: #{tpu_custom_call.1} parent=99 // pred_region
          %s2603 = ssub.s32 256, 256
          %2604 = vsyncadd [#allocation4], %s2603
          %s2605 = sshll.u32 [#allocation9], 4
          %s2606 = int_to_ptr.vmem [resolvable:$true] %s2605
          %2611 = dma.vmem_to_hbm [thread:$0]  %s2606, 256, %s20, [#allocation4], 128, 128, 8
        $region132: #{tpu_custom_call.1} parent=99 // pred_fallthru
          _
        // Predicated region
        $region133: #{tpu_custom_call.1} parent=99 // pred_check
          %p2612 = pneg %p547
        $region134: #{tpu_custom_call.1} parent=99 // pred_check_branch
          %2614 = sbr.rel (%p2612) target = $region136
        $region135: #{tpu_custom_call.1} parent=99 // pred_region
          %2615 = dma.done [#allocation4], 256
        $region136: #{tpu_custom_call.1} parent=99 // pred_fallthru
          _
      $region100: #{tpu_custom_call.1} parent=5 // pred_fallthru
        _
      %p2616 = scmp.le.s32.totalorder 2, %s29
      // Predicated region
      $region137: #{tpu_custom_call.1} parent=5 // pred_check
        %p2617 = pneg %p2616
      $region138: #{tpu_custom_call.1} parent=5 // pred_check_branch
        %2619 = sbr.rel (%p2617) target = $region140
      $region139: #{tpu_custom_call.1} parent=5 // pred_region
        %s2620 = ssub.s32 %s29, 2
      $region140: #{tpu_custom_call.1} parent=5 // pred_fallthru
        _
    $region6: #{tpu_custom_call.1} parent=1 // loop_footer
      %s33 = sadd.s32 1, %s29
    $region7: #{tpu_custom_call.1} parent=1 // loop_footer_branch
      %28 = sbr.rel target = $region3
    $region8: #{tpu_custom_call.1} parent=1 // loop_exit
      _
    %2621 = vsyncpa [#allocation3], 1
    %s2622 = scalar_lea.sflag [#allocation3], 1
    %2623 = vsyncpa %s2622, 1
    %2624 = vsyncpa [#allocation6], 1
    %2625 = vsyncpa [#allocation4], 1
    %s2626 = scalar_lea.sflag [#allocation4], 1
    %2627 = vsyncpa %s2626, 1

</llo_original>
